<compile_context>
chip_gen: v7x
topology: tpu7x:2x2x1
jax: 0.10.0
libtpu: 0.0.40
codegen_flags: <defaults>
</compile_context>

<pallas_src>
import functools

import jax
import jax.numpy as jnp
from jax.experimental import pallas as pl
from jax.experimental.pallas import tpu as pltpu


def _round_up(a, m):
    return (a + m - 1) // m * m


def _morph_kernel(x_ref, wdT_ref, weT_ref, dil0_ref, ero0_ref, wld_ref, wle_ref,
                  out_ref, dil_acc, ero_acc):
    # x_ref:   (TB, TK)      input tile (unpadded features of this chunk)
    # wdT_ref: (TK, D_pad)   dilation weights, transposed (units on lanes)
    # weT_ref: (TK, E_pad)   erosion weights, transposed
    # dil0/ero0: (1, D_pad)/(1, E_pad)  accumulator init rows (X_bar zero column)
    # wld/wle: (D_pad, L_pad)/(E_pad, L_pad)  linear weight halves, transposed
    # out_ref: (TB, L_pad)
    k = pl.program_id(1)

    @pl.when(k == 0)
    def _init():
        # X_bar's zero column folded into the init: dil starts at Wd[:, -1],
        # ero starts at -We[:, -1] (pre-negated in the wrapper).
        dil_acc[...] = jnp.broadcast_to(dil0_ref[...], dil_acc.shape)
        ero_acc[...] = jnp.broadcast_to(ero0_ref[...], ero_acc.shape)

    d_acc = dil_acc[...]
    e_acc = ero_acc[...]

    # Running max/min over this chunk of input features.  The loop is statically
    # unrolled so every (TB, 1) column slice has a constant lane offset; each
    # iteration is a lane-dense (TB, D_pad)/(TB, E_pad) VPU max/min -- no 3-D
    # intermediates, no cross-lane (XLU) reductions.
    for j in range(x_ref.shape[1]):
        xcol = x_ref[:, j:j + 1]                                   # (TB, 1)
        d_acc = jnp.maximum(d_acc, xcol + wdT_ref[j:j + 1, :])     # (TB, D_pad)
        e_acc = jnp.minimum(e_acc, xcol - weT_ref[j:j + 1, :])     # (TB, E_pad)

    dil_acc[...] = d_acc
    ero_acc[...] = e_acc

    @pl.when(k == pl.num_programs(1) - 1)
    def _finalize():
        # Split matmul straight out of the accumulators (no concat / re-layout).
        out_ref[...] = (
            jnp.dot(d_acc, wld_ref[...], preferred_element_type=jnp.float32)
            + jnp.dot(e_acc, wle_ref[...], preferred_element_type=jnp.float32)
        ).astype(out_ref.dtype)


@functools.partial(jax.jit, static_argnames=("batch_tile", "feat_tile"))
def morphological_max(x, dilation_weights, erosion_weights, linear_weights,
                      *, batch_tile=256, feat_tile=128):
    """x: (B, N) f32; Wd: (D, N+1); We: (E, N+1); Wl: (L, D+E) -> (B, L) f32."""
    x = x.astype(jnp.float32)
    dilation_weights = dilation_weights.astype(jnp.float32)
    erosion_weights = erosion_weights.astype(jnp.float32)
    linear_weights = linear_weights.astype(jnp.float32)

    B, N = x.shape
    D = dilation_weights.shape[0]
    E = erosion_weights.shape[0]
    L = linear_weights.shape[0]

    LANE, SUB = 128, 8
    D_pad = _round_up(D, LANE)
    E_pad = _round_up(E, LANE)
    L_pad = _round_up(L, LANE)

    TB = min(batch_tile, _round_up(B, SUB))   # batch tile, multiple of 8
    B_pad = _round_up(B, TB)
    TK = feat_tile                            # feature (reduction) chunk
    N_pad = _round_up(N, TK)

    NEG = jnp.float32(-1e30)  # padded features/units never win the max/min

    # Input: zero-pad batch and feature dims (padded features pair with -1e30
    # weights below, so they are inert; padded batch rows are sliced off).
    x_p = jnp.zeros((B_pad, N_pad), jnp.float32).at[:B, :N].set(x)

    # Morphological weights, transposed to (features, units): units on lanes.
    wdT = jnp.full((N_pad, D_pad), NEG, jnp.float32).at[:N, :D].set(
        dilation_weights[:, :N].T)
    weT = jnp.full((N_pad, E_pad), NEG, jnp.float32).at[:N, :E].set(
        erosion_weights[:, :N].T)

    # X_bar zero column -> accumulator init rows.
    dil0 = jnp.zeros((1, D_pad), jnp.float32).at[0, :D].set(dilation_weights[:, N])
    ero0 = jnp.zeros((1, E_pad), jnp.float32).at[0, :E].set(-erosion_weights[:, N])

    # Linear weights split into the dilation / erosion halves, transposed and
    # zero-padded (padded units contribute 0; padded output cols sliced off).
    wld = jnp.zeros((D_pad, L_pad), jnp.float32).at[:D, :L].set(
        linear_weights[:, :D].T)
    wle = jnp.zeros((E_pad, L_pad), jnp.float32).at[:E, :L].set(
        linear_weights[:, D:].T)

    grid = (B_pad // TB, N_pad // TK)

    out = pl.pallas_call(
        _morph_kernel,
        out_shape=jax.ShapeDtypeStruct((B_pad, L_pad), jnp.float32),
        grid_spec=pltpu.PrefetchScalarGridSpec(
            num_scalar_prefetch=0,
            grid=grid,
            in_specs=[
                pl.BlockSpec((TB, TK), lambda i, k: (i, k)),         # x tile
                pl.BlockSpec((TK, D_pad), lambda i, k: (k, 0)),      # Wd^T tile
                pl.BlockSpec((TK, E_pad), lambda i, k: (k, 0)),      # We^T tile
                pl.BlockSpec((1, D_pad), lambda i, k: (0, 0)),       # dil init
                pl.BlockSpec((1, E_pad), lambda i, k: (0, 0)),       # ero init
                pl.BlockSpec((D_pad, L_pad), lambda i, k: (0, 0)),   # Wl_d^T
                pl.BlockSpec((E_pad, L_pad), lambda i, k: (0, 0)),   # Wl_e^T
            ],
            out_specs=pl.BlockSpec((TB, L_pad), lambda i, k: (i, 0)),
            scratch_shapes=[
                pltpu.VMEM((TB, D_pad), jnp.float32),   # dilation accumulator
                pltpu.VMEM((TB, E_pad), jnp.float32),   # erosion accumulator
            ],
        ),
        compiler_params=pltpu.CompilerParams(
            # batch axis parallel (v7x megacore, no-op on v5e/v6e),
            # feature-reduction axis last / arbitrary.
            dimension_semantics=("parallel", "arbitrary")),
    )(x_p, wdT, weT, dil0, ero0, wld, wle)

    return out[:B, :L]


def reference(x, dilw, erow, linw):
    xbar = jnp.concatenate([x, jnp.zeros((x.shape[0], 1), x.dtype)], axis=-1)
    dil = jnp.max(xbar[:, None, :] + dilw[None, :, :], axis=-1)
    ero = jnp.min(xbar[:, None, :] - erow[None, :, :], axis=-1)
    feats = jnp.concatenate([dil, ero], axis=1)
    return feats @ linw.T


if __name__ == "__main__":
    # Small, deterministic shapes.
    B, in_units, dil_units, ero_units, lin_units = 8, 16, 8, 8, 8

    key = jax.random.PRNGKey(0)
    k_x, k_d, k_e, k_l = jax.random.split(key, 4)

    x = jax.random.normal(k_x, (B, in_units), dtype=jnp.float32)
    dilation_weights = jax.random.normal(k_d, (dil_units, in_units + 1), dtype=jnp.float32)
    erosion_weights = jax.random.normal(k_e, (ero_units, in_units + 1), dtype=jnp.float32)
    linear_weights = jax.random.normal(k_l, (lin_units, dil_units + ero_units), dtype=jnp.float32)

    out = morphological_max(x, dilation_weights, erosion_weights, linear_weights)
    out = jax.block_until_ready(out)

    ref = reference(x, dilation_weights, erosion_weights, linear_weights)
    assert out.shape == (B, lin_units)
    assert jnp.allclose(out, ref, atol=1e-4, rtol=1e-4), "mismatch vs reference"

    print("KERNEL_OK")
</pallas_src>

<mosaic_0001>
module attributes {stable_mosaic.version = 11 : i64} {
  func.func @_morph_kernel(%arg0: i32, %arg1: i32, %arg2: memref<8x128xf32, #tpu.memory_space<vmem>>, %arg3: memref<128x128xf32, #tpu.memory_space<vmem>>, %arg4: memref<128x128xf32, #tpu.memory_space<vmem>>, %arg5: memref<1x128xf32, #tpu.memory_space<vmem>>, %arg6: memref<1x128xf32, #tpu.memory_space<vmem>>, %arg7: memref<128x128xf32, #tpu.memory_space<vmem>>, %arg8: memref<128x128xf32, #tpu.memory_space<vmem>>, %arg9: memref<8x128xf32, #tpu.memory_space<vmem>>, %arg10: memref<8x128xf32, #tpu.memory_space<vmem>>, %arg11: memref<8x128xf32, #tpu.memory_space<vmem>>) attributes {dimension_semantics = [#tpu.dimension_semantics<parallel>, #tpu.dimension_semantics<arbitrary>], iteration_bounds = array<i64: 1, 1>, scalar_prefetch = 0 : i64, scratch_operands = 2 : i64, tpu.core_type = #tpu.core_type<tc>, window_params = [{transform_indices = @transform_0, window_bounds = array<i64: 8, 128>}, {transform_indices = @transform_1, window_bounds = array<i64: 128, 128>}, {transform_indices = @transform_2, window_bounds = array<i64: 128, 128>}, {pipeline_mode = #tpu.pipeline_mode<synchronous>, transform_indices = @transform_3, window_bounds = array<i64: 1, 128>}, {pipeline_mode = #tpu.pipeline_mode<synchronous>, transform_indices = @transform_4, window_bounds = array<i64: 1, 128>}, {pipeline_mode = #tpu.pipeline_mode<synchronous>, transform_indices = @transform_5, window_bounds = array<i64: 128, 128>}, {pipeline_mode = #tpu.pipeline_mode<synchronous>, transform_indices = @transform_6, window_bounds = array<i64: 128, 128>}, {transform_indices = @transform_7, window_bounds = array<i64: 8, 128>}]} {
    %c0_i32 = arith.constant 0 : i32
    %0 = arith.cmpi eq, %arg1, %c0_i32 : i32
    %1 = arith.extui %0 : i1 to i32
    %c0_i32_0 = arith.constant 0 : i32
    %2 = arith.cmpi ne, %1, %c0_i32_0 : i32
    scf.if %2 {
      %c0_651 = arith.constant 0 : index
      %c0_652 = arith.constant 0 : index
      %1418 = vector.load %arg5[%c0_651, %c0_652] : memref<1x128xf32, #tpu.memory_space<vmem>>, vector<1x128xf32>
      %1419 = vector.shape_cast %1418 : vector<1x128xf32> to vector<1x128xf32>
      %1420 = vector.broadcast %1419 : vector<1x128xf32> to vector<8x128xf32>
      %c0_653 = arith.constant 0 : index
      %c0_654 = arith.constant 0 : index
      %1421 = vector.load %arg10[%c0_653, %c0_654] : memref<8x128xf32, #tpu.memory_space<vmem>>, vector<8x128xf32>
      tpu.vector_store %arg10[%c0_653, %c0_654], %1420 {strides = array<i32>} : memref<8x128xf32, #tpu.memory_space<vmem>>, vector<8x128xf32>,
      %c0_655 = arith.constant 0 : index
      %c0_656 = arith.constant 0 : index
      %1422 = vector.load %arg6[%c0_655, %c0_656] : memref<1x128xf32, #tpu.memory_space<vmem>>, vector<1x128xf32>
      %1423 = vector.shape_cast %1422 : vector<1x128xf32> to vector<1x128xf32>
      %1424 = vector.broadcast %1423 : vector<1x128xf32> to vector<8x128xf32>
      %c0_657 = arith.constant 0 : index
      %c0_658 = arith.constant 0 : index
      %1425 = vector.load %arg11[%c0_657, %c0_658] : memref<8x128xf32, #tpu.memory_space<vmem>>, vector<8x128xf32>
      tpu.vector_store %arg11[%c0_657, %c0_658], %1424 {strides = array<i32>} : memref<8x128xf32, #tpu.memory_space<vmem>>, vector<8x128xf32>,
    } else {
    }
    %c0 = arith.constant 0 : index
    %c0_1 = arith.constant 0 : index
    %3 = vector.load %arg10[%c0, %c0_1] : memref<8x128xf32, #tpu.memory_space<vmem>>, vector<8x128xf32>
    %c0_2 = arith.constant 0 : index
    %c0_3 = arith.constant 0 : index
    %4 = vector.load %arg11[%c0_2, %c0_3] : memref<8x128xf32, #tpu.memory_space<vmem>>, vector<8x128xf32>
    %c0_4 = arith.constant 0 : index
    %c0_5 = arith.constant 0 : index
    %5 = vector.load %arg2[%c0_4, %c0_5] : memref<8x128xf32, #tpu.memory_space<vmem>>, vector<8x1xf32>
    %c0_6 = arith.constant 0 : index
    %c0_7 = arith.constant 0 : index
    %6 = vector.load %arg3[%c0_6, %c0_7] : memref<128x128xf32, #tpu.memory_space<vmem>>, vector<1x128xf32>
    %7 = vector.broadcast %5 : vector<8x1xf32> to vector<8x128xf32>
    %8 = vector.broadcast %6 : vector<1x128xf32> to vector<8x128xf32>
    %9 = arith.addf %7, %8 : vector<8x128xf32>
    %10 = arith.maximumf %3, %9 : vector<8x128xf32>
    %c0_8 = arith.constant 0 : index
    %c0_9 = arith.constant 0 : index
    %11 = vector.load %arg4[%c0_8, %c0_9] : memref<128x128xf32, #tpu.memory_space<vmem>>, vector<1x128xf32>
    %12 = vector.broadcast %5 : vector<8x1xf32> to vector<8x128xf32>
    %13 = vector.broadcast %11 : vector<1x128xf32> to vector<8x128xf32>
    %14 = arith.subf %12, %13 : vector<8x128xf32>
    %15 = arith.minimumf %4, %14 : vector<8x128xf32>
    %c0_10 = arith.constant 0 : index
    %c1 = arith.constant 1 : index
    %16 = vector.load %arg2[%c0_10, %c1] : memref<8x128xf32, #tpu.memory_space<vmem>>, vector<8x1xf32>
    %c1_11 = arith.constant 1 : index
    %c0_12 = arith.constant 0 : index
    %17 = vector.load %arg3[%c1_11, %c0_12] : memref<128x128xf32, #tpu.memory_space<vmem>>, vector<1x128xf32>
    %18 = vector.broadcast %16 : vector<8x1xf32> to vector<8x128xf32>
    %19 = vector.broadcast %17 : vector<1x128xf32> to vector<8x128xf32>
    %20 = arith.addf %18, %19 : vector<8x128xf32>
    %21 = arith.maximumf %10, %20 : vector<8x128xf32>
    %c1_13 = arith.constant 1 : index
    %c0_14 = arith.constant 0 : index
    %22 = vector.load %arg4[%c1_13, %c0_14] : memref<128x128xf32, #tpu.memory_space<vmem>>, vector<1x128xf32>
    %23 = vector.broadcast %16 : vector<8x1xf32> to vector<8x128xf32>
    %24 = vector.broadcast %22 : vector<1x128xf32> to vector<8x128xf32>
    %25 = arith.subf %23, %24 : vector<8x128xf32>
    %26 = arith.minimumf %15, %25 : vector<8x128xf32>
    %c0_15 = arith.constant 0 : index
    %c2 = arith.constant 2 : index
    %27 = vector.load %arg2[%c0_15, %c2] : memref<8x128xf32, #tpu.memory_space<vmem>>, vector<8x1xf32>
    %c2_16 = arith.constant 2 : index
    %c0_17 = arith.constant 0 : index
    %28 = vector.load %arg3[%c2_16, %c0_17] : memref<128x128xf32, #tpu.memory_space<vmem>>, vector<1x128xf32>
    %29 = vector.broadcast %27 : vector<8x1xf32> to vector<8x128xf32>
    %30 = vector.broadcast %28 : vector<1x128xf32> to vector<8x128xf32>
    %31 = arith.addf %29, %30 : vector<8x128xf32>
    %32 = arith.maximumf %21, %31 : vector<8x128xf32>
    %c2_18 = arith.constant 2 : index
    %c0_19 = arith.constant 0 : index
    %33 = vector.load %arg4[%c2_18, %c0_19] : memref<128x128xf32, #tpu.memory_space<vmem>>, vector<1x128xf32>
    %34 = vector.broadcast %27 : vector<8x1xf32> to vector<8x128xf32>
    %35 = vector.broadcast %33 : vector<1x128xf32> to vector<8x128xf32>
    %36 = arith.subf %34, %35 : vector<8x128xf32>
    %37 = arith.minimumf %26, %36 : vector<8x128xf32>
    %c0_20 = arith.constant 0 : index
    %c3 = arith.constant 3 : index
    %38 = vector.load %arg2[%c0_20, %c3] : memref<8x128xf32, #tpu.memory_space<vmem>>, vector<8x1xf32>
    %c3_21 = arith.constant 3 : index
    %c0_22 = arith.constant 0 : index
    %39 = vector.load %arg3[%c3_21, %c0_22] : memref<128x128xf32, #tpu.memory_space<vmem>>, vector<1x128xf32>
    %40 = vector.broadcast %38 : vector<8x1xf32> to vector<8x128xf32>
    %41 = vector.broadcast %39 : vector<1x128xf32> to vector<8x128xf32>
    %42 = arith.addf %40, %41 : vector<8x128xf32>
    %43 = arith.maximumf %32, %42 : vector<8x128xf32>
    %c3_23 = arith.constant 3 : index
    %c0_24 = arith.constant 0 : index
    %44 = vector.load %arg4[%c3_23, %c0_24] : memref<128x128xf32, #tpu.memory_space<vmem>>, vector<1x128xf32>
    %45 = vector.broadcast %38 : vector<8x1xf32> to vector<8x128xf32>
    %46 = vector.broadcast %44 : vector<1x128xf32> to vector<8x128xf32>
    %47 = arith.subf %45, %46 : vector<8x128xf32>
    %48 = arith.minimumf %37, %47 : vector<8x128xf32>
    %c0_25 = arith.constant 0 : index
    %c4 = arith.constant 4 : index
    %49 = vector.load %arg2[%c0_25, %c4] : memref<8x128xf32, #tpu.memory_space<vmem>>, vector<8x1xf32>
    %c4_26 = arith.constant 4 : index
    %c0_27 = arith.constant 0 : index
    %50 = vector.load %arg3[%c4_26, %c0_27] : memref<128x128xf32, #tpu.memory_space<vmem>>, vector<1x128xf32>
    %51 = vector.broadcast %49 : vector<8x1xf32> to vector<8x128xf32>
    %52 = vector.broadcast %50 : vector<1x128xf32> to vector<8x128xf32>
    %53 = arith.addf %51, %52 : vector<8x128xf32>
    %54 = arith.maximumf %43, %53 : vector<8x128xf32>
    %c4_28 = arith.constant 4 : index
    %c0_29 = arith.constant 0 : index
    %55 = vector.load %arg4[%c4_28, %c0_29] : memref<128x128xf32, #tpu.memory_space<vmem>>, vector<1x128xf32>
    %56 = vector.broadcast %49 : vector<8x1xf32> to vector<8x128xf32>
    %57 = vector.broadcast %55 : vector<1x128xf32> to vector<8x128xf32>
    %58 = arith.subf %56, %57 : vector<8x128xf32>
    %59 = arith.minimumf %48, %58 : vector<8x128xf32>
    %c0_30 = arith.constant 0 : index
    %c5 = arith.constant 5 : index
    %60 = vector.load %arg2[%c0_30, %c5] : memref<8x128xf32, #tpu.memory_space<vmem>>, vector<8x1xf32>
    %c5_31 = arith.constant 5 : index
    %c0_32 = arith.constant 0 : index
    %61 = vector.load %arg3[%c5_31, %c0_32] : memref<128x128xf32, #tpu.memory_space<vmem>>, vector<1x128xf32>
    %62 = vector.broadcast %60 : vector<8x1xf32> to vector<8x128xf32>
    %63 = vector.broadcast %61 : vector<1x128xf32> to vector<8x128xf32>
    %64 = arith.addf %62, %63 : vector<8x128xf32>
    %65 = arith.maximumf %54, %64 : vector<8x128xf32>
    %c5_33 = arith.constant 5 : index
    %c0_34 = arith.constant 0 : index
    %66 = vector.load %arg4[%c5_33, %c0_34] : memref<128x128xf32, #tpu.memory_space<vmem>>, vector<1x128xf32>
    %67 = vector.broadcast %60 : vector<8x1xf32> to vector<8x128xf32>
    %68 = vector.broadcast %66 : vector<1x128xf32> to vector<8x128xf32>
    %69 = arith.subf %67, %68 : vector<8x128xf32>
    %70 = arith.minimumf %59, %69 : vector<8x128xf32>
    %c0_35 = arith.constant 0 : index
    %c6 = arith.constant 6 : index
    %71 = vector.load %arg2[%c0_35, %c6] : memref<8x128xf32, #tpu.memory_space<vmem>>, vector<8x1xf32>
    %c6_36 = arith.constant 6 : index
    %c0_37 = arith.constant 0 : index
    %72 = vector.load %arg3[%c6_36, %c0_37] : memref<128x128xf32, #tpu.memory_space<vmem>>, vector<1x128xf32>
    %73 = vector.broadcast %71 : vector<8x1xf32> to vector<8x128xf32>
    %74 = vector.broadcast %72 : vector<1x128xf32> to vector<8x128xf32>
    %75 = arith.addf %73, %74 : vector<8x128xf32>
    %76 = arith.maximumf %65, %75 : vector<8x128xf32>
    %c6_38 = arith.constant 6 : index
    %c0_39 = arith.constant 0 : index
    %77 = vector.load %arg4[%c6_38, %c0_39] : memref<128x128xf32, #tpu.memory_space<vmem>>, vector<1x128xf32>
    %78 = vector.broadcast %71 : vector<8x1xf32> to vector<8x128xf32>
    %79 = vector.broadcast %77 : vector<1x128xf32> to vector<8x128xf32>
    %80 = arith.subf %78, %79 : vector<8x128xf32>
    %81 = arith.minimumf %70, %80 : vector<8x128xf32>
    %c0_40 = arith.constant 0 : index
    %c7 = arith.constant 7 : index
    %82 = vector.load %arg2[%c0_40, %c7] : memref<8x128xf32, #tpu.memory_space<vmem>>, vector<8x1xf32>
    %c7_41 = arith.constant 7 : index
    %c0_42 = arith.constant 0 : index
    %83 = vector.load %arg3[%c7_41, %c0_42] : memref<128x128xf32, #tpu.memory_space<vmem>>, vector<1x128xf32>
    %84 = vector.broadcast %82 : vector<8x1xf32> to vector<8x128xf32>
    %85 = vector.broadcast %83 : vector<1x128xf32> to vector<8x128xf32>
    %86 = arith.addf %84, %85 : vector<8x128xf32>
    %87 = arith.maximumf %76, %86 : vector<8x128xf32>
    %c7_43 = arith.constant 7 : index
    %c0_44 = arith.constant 0 : index
    %88 = vector.load %arg4[%c7_43, %c0_44] : memref<128x128xf32, #tpu.memory_space<vmem>>, vector<1x128xf32>
    %89 = vector.broadcast %82 : vector<8x1xf32> to vector<8x128xf32>
    %90 = vector.broadcast %88 : vector<1x128xf32> to vector<8x128xf32>
    %91 = arith.subf %89, %90 : vector<8x128xf32>
    %92 = arith.minimumf %81, %91 : vector<8x128xf32>
    %c0_45 = arith.constant 0 : index
    %c8 = arith.constant 8 : index
    %93 = vector.load %arg2[%c0_45, %c8] : memref<8x128xf32, #tpu.memory_space<vmem>>, vector<8x1xf32>
    %c8_46 = arith.constant 8 : index
    %c0_47 = arith.constant 0 : index
    %94 = vector.load %arg3[%c8_46, %c0_47] : memref<128x128xf32, #tpu.memory_space<vmem>>, vector<1x128xf32>
    %95 = vector.broadcast %93 : vector<8x1xf32> to vector<8x128xf32>
    %96 = vector.broadcast %94 : vector<1x128xf32> to vector<8x128xf32>
    %97 = arith.addf %95, %96 : vector<8x128xf32>
    %98 = arith.maximumf %87, %97 : vector<8x128xf32>
    %c8_48 = arith.constant 8 : index
    %c0_49 = arith.constant 0 : index
    %99 = vector.load %arg4[%c8_48, %c0_49] : memref<128x128xf32, #tpu.memory_space<vmem>>, vector<1x128xf32>
    %100 = vector.broadcast %93 : vector<8x1xf32> to vector<8x128xf32>
    %101 = vector.broadcast %99 : vector<1x128xf32> to vector<8x128xf32>
    %102 = arith.subf %100, %101 : vector<8x128xf32>
    %103 = arith.minimumf %92, %102 : vector<8x128xf32>
    %c0_50 = arith.constant 0 : index
    %c9 = arith.constant 9 : index
    %104 = vector.load %arg2[%c0_50, %c9] : memref<8x128xf32, #tpu.memory_space<vmem>>, vector<8x1xf32>
    %c9_51 = arith.constant 9 : index
    %c0_52 = arith.constant 0 : index
    %105 = vector.load %arg3[%c9_51, %c0_52] : memref<128x128xf32, #tpu.memory_space<vmem>>, vector<1x128xf32>
    %106 = vector.broadcast %104 : vector<8x1xf32> to vector<8x128xf32>
    %107 = vector.broadcast %105 : vector<1x128xf32> to vector<8x128xf32>
    %108 = arith.addf %106, %107 : vector<8x128xf32>
    %109 = arith.maximumf %98, %108 : vector<8x128xf32>
    %c9_53 = arith.constant 9 : index
    %c0_54 = arith.constant 0 : index
    %110 = vector.load %arg4[%c9_53, %c0_54] : memref<128x128xf32, #tpu.memory_space<vmem>>, vector<1x128xf32>
    %111 = vector.broadcast %104 : vector<8x1xf32> to vector<8x128xf32>
    %112 = vector.broadcast %110 : vector<1x128xf32> to vector<8x128xf32>
    %113 = arith.subf %111, %112 : vector<8x128xf32>
    %114 = arith.minimumf %103, %113 : vector<8x128xf32>
    %c0_55 = arith.constant 0 : index
    %c10 = arith.constant 10 : index
    %115 = vector.load %arg2[%c0_55, %c10] : memref<8x128xf32, #tpu.memory_space<vmem>>, vector<8x1xf32>
    %c10_56 = arith.constant 10 : index
    %c0_57 = arith.constant 0 : index
    %116 = vector.load %arg3[%c10_56, %c0_57] : memref<128x128xf32, #tpu.memory_space<vmem>>, vector<1x128xf32>
    %117 = vector.broadcast %115 : vector<8x1xf32> to vector<8x128xf32>
    %118 = vector.broadcast %116 : vector<1x128xf32> to vector<8x128xf32>
    %119 = arith.addf %117, %118 : vector<8x128xf32>
    %120 = arith.maximumf %109, %119 : vector<8x128xf32>
    %c10_58 = arith.constant 10 : index
    %c0_59 = arith.constant 0 : index
    %121 = vector.load %arg4[%c10_58, %c0_59] : memref<128x128xf32, #tpu.memory_space<vmem>>, vector<1x128xf32>
    %122 = vector.broadcast %115 : vector<8x1xf32> to vector<8x128xf32>
    %123 = vector.broadcast %121 : vector<1x128xf32> to vector<8x128xf32>
    %124 = arith.subf %122, %123 : vector<8x128xf32>
    %125 = arith.minimumf %114, %124 : vector<8x128xf32>
    %c0_60 = arith.constant 0 : index
    %c11 = arith.constant 11 : index
    %126 = vector.load %arg2[%c0_60, %c11] : memref<8x128xf32, #tpu.memory_space<vmem>>, vector<8x1xf32>
    %c11_61 = arith.constant 11 : index
    %c0_62 = arith.constant 0 : index
    %127 = vector.load %arg3[%c11_61, %c0_62] : memref<128x128xf32, #tpu.memory_space<vmem>>, vector<1x128xf32>
    %128 = vector.broadcast %126 : vector<8x1xf32> to vector<8x128xf32>
    %129 = vector.broadcast %127 : vector<1x128xf32> to vector<8x128xf32>
    %130 = arith.addf %128, %129 : vector<8x128xf32>
    %131 = arith.maximumf %120, %130 : vector<8x128xf32>
    %c11_63 = arith.constant 11 : index
    %c0_64 = arith.constant 0 : index
    %132 = vector.load %arg4[%c11_63, %c0_64] : memref<128x128xf32, #tpu.memory_space<vmem>>, vector<1x128xf32>
    %133 = vector.broadcast %126 : vector<8x1xf32> to vector<8x128xf32>
    %134 = vector.broadcast %132 : vector<1x128xf32> to vector<8x128xf32>
    %135 = arith.subf %133, %134 : vector<8x128xf32>
    %136 = arith.minimumf %125, %135 : vector<8x128xf32>
    %c0_65 = arith.constant 0 : index
    %c12 = arith.constant 12 : index
    %137 = vector.load %arg2[%c0_65, %c12] : memref<8x128xf32, #tpu.memory_space<vmem>>, vector<8x1xf32>
    %c12_66 = arith.constant 12 : index
    %c0_67 = arith.constant 0 : index
    %138 = vector.load %arg3[%c12_66, %c0_67] : memref<128x128xf32, #tpu.memory_space<vmem>>, vector<1x128xf32>
    %139 = vector.broadcast %137 : vector<8x1xf32> to vector<8x128xf32>
    %140 = vector.broadcast %138 : vector<1x128xf32> to vector<8x128xf32>
    %141 = arith.addf %139, %140 : vector<8x128xf32>
    %142 = arith.maximumf %131, %141 : vector<8x128xf32>
    %c12_68 = arith.constant 12 : index
    %c0_69 = arith.constant 0 : index
    %143 = vector.load %arg4[%c12_68, %c0_69] : memref<128x128xf32, #tpu.memory_space<vmem>>, vector<1x128xf32>
    %144 = vector.broadcast %137 : vector<8x1xf32> to vector<8x128xf32>
    %145 = vector.broadcast %143 : vector<1x128xf32> to vector<8x128xf32>
    %146 = arith.subf %144, %145 : vector<8x128xf32>
    %147 = arith.minimumf %136, %146 : vector<8x128xf32>
    %c0_70 = arith.constant 0 : index
    %c13 = arith.constant 13 : index
    %148 = vector.load %arg2[%c0_70, %c13] : memref<8x128xf32, #tpu.memory_space<vmem>>, vector<8x1xf32>
    %c13_71 = arith.constant 13 : index
    %c0_72 = arith.constant 0 : index
    %149 = vector.load %arg3[%c13_71, %c0_72] : memref<128x128xf32, #tpu.memory_space<vmem>>, vector<1x128xf32>
    %150 = vector.broadcast %148 : vector<8x1xf32> to vector<8x128xf32>
    %151 = vector.broadcast %149 : vector<1x128xf32> to vector<8x128xf32>
    %152 = arith.addf %150, %151 : vector<8x128xf32>
    %153 = arith.maximumf %142, %152 : vector<8x128xf32>
    %c13_73 = arith.constant 13 : index
    %c0_74 = arith.constant 0 : index
    %154 = vector.load %arg4[%c13_73, %c0_74] : memref<128x128xf32, #tpu.memory_space<vmem>>, vector<1x128xf32>
    %155 = vector.broadcast %148 : vector<8x1xf32> to vector<8x128xf32>
    %156 = vector.broadcast %154 : vector<1x128xf32> to vector<8x128xf32>
    %157 = arith.subf %155, %156 : vector<8x128xf32>
    %158 = arith.minimumf %147, %157 : vector<8x128xf32>
    %c0_75 = arith.constant 0 : index
    %c14 = arith.constant 14 : index
    %159 = vector.load %arg2[%c0_75, %c14] : memref<8x128xf32, #tpu.memory_space<vmem>>, vector<8x1xf32>
    %c14_76 = arith.constant 14 : index
    %c0_77 = arith.constant 0 : index
    %160 = vector.load %arg3[%c14_76, %c0_77] : memref<128x128xf32, #tpu.memory_space<vmem>>, vector<1x128xf32>
    %161 = vector.broadcast %159 : vector<8x1xf32> to vector<8x128xf32>
    %162 = vector.broadcast %160 : vector<1x128xf32> to vector<8x128xf32>
    %163 = arith.addf %161, %162 : vector<8x128xf32>
    %164 = arith.maximumf %153, %163 : vector<8x128xf32>
    %c14_78 = arith.constant 14 : index
    %c0_79 = arith.constant 0 : index
    %165 = vector.load %arg4[%c14_78, %c0_79] : memref<128x128xf32, #tpu.memory_space<vmem>>, vector<1x128xf32>
    %166 = vector.broadcast %159 : vector<8x1xf32> to vector<8x128xf32>
    %167 = vector.broadcast %165 : vector<1x128xf32> to vector<8x128xf32>
    %168 = arith.subf %166, %167 : vector<8x128xf32>
    %169 = arith.minimumf %158, %168 : vector<8x128xf32>
    %c0_80 = arith.constant 0 : index
    %c15 = arith.constant 15 : index
    %170 = vector.load %arg2[%c0_80, %c15] : memref<8x128xf32, #tpu.memory_space<vmem>>, vector<8x1xf32>
    %c15_81 = arith.constant 15 : index
    %c0_82 = arith.constant 0 : index
    %171 = vector.load %arg3[%c15_81, %c0_82] : memref<128x128xf32, #tpu.memory_space<vmem>>, vector<1x128xf32>
    %172 = vector.broadcast %170 : vector<8x1xf32> to vector<8x128xf32>
    %173 = vector.broadcast %171 : vector<1x128xf32> to vector<8x128xf32>
    %174 = arith.addf %172, %173 : vector<8x128xf32>
    %175 = arith.maximumf %164, %174 : vector<8x128xf32>
    %c15_83 = arith.constant 15 : index
    %c0_84 = arith.constant 0 : index
    %176 = vector.load %arg4[%c15_83, %c0_84] : memref<128x128xf32, #tpu.memory_space<vmem>>, vector<1x128xf32>
    %177 = vector.broadcast %170 : vector<8x1xf32> to vector<8x128xf32>
    %178 = vector.broadcast %176 : vector<1x128xf32> to vector<8x128xf32>
    %179 = arith.subf %177, %178 : vector<8x128xf32>
    %180 = arith.minimumf %169, %179 : vector<8x128xf32>
    %c0_85 = arith.constant 0 : index
    %c16 = arith.constant 16 : index
    %181 = vector.load %arg2[%c0_85, %c16] : memref<8x128xf32, #tpu.memory_space<vmem>>, vector<8x1xf32>
    %c16_86 = arith.constant 16 : index
    %c0_87 = arith.constant 0 : index
    %182 = vector.load %arg3[%c16_86, %c0_87] : memref<128x128xf32, #tpu.memory_space<vmem>>, vector<1x128xf32>
    %183 = vector.broadcast %181 : vector<8x1xf32> to vector<8x128xf32>
    %184 = vector.broadcast %182 : vector<1x128xf32> to vector<8x128xf32>
    %185 = arith.addf %183, %184 : vector<8x128xf32>
    %186 = arith.maximumf %175, %185 : vector<8x128xf32>
    %c16_88 = arith.constant 16 : index
    %c0_89 = arith.constant 0 : index
    %187 = vector.load %arg4[%c16_88, %c0_89] : memref<128x128xf32, #tpu.memory_space<vmem>>, vector<1x128xf32>
    %188 = vector.broadcast %181 : vector<8x1xf32> to vector<8x128xf32>
    %189 = vector.broadcast %187 : vector<1x128xf32> to vector<8x128xf32>
    %190 = arith.subf %188, %189 : vector<8x128xf32>
    %191 = arith.minimumf %180, %190 : vector<8x128xf32>
    %c0_90 = arith.constant 0 : index
    %c17 = arith.constant 17 : index
    %192 = vector.load %arg2[%c0_90, %c17] : memref<8x128xf32, #tpu.memory_space<vmem>>, vector<8x1xf32>
    %c17_91 = arith.constant 17 : index
    %c0_92 = arith.constant 0 : index
    %193 = vector.load %arg3[%c17_91, %c0_92] : memref<128x128xf32, #tpu.memory_space<vmem>>, vector<1x128xf32>
    %194 = vector.broadcast %192 : vector<8x1xf32> to vector<8x128xf32>
    %195 = vector.broadcast %193 : vector<1x128xf32> to vector<8x128xf32>
    %196 = arith.addf %194, %195 : vector<8x128xf32>
    %197 = arith.maximumf %186, %196 : vector<8x128xf32>
    %c17_93 = arith.constant 17 : index
    %c0_94 = arith.constant 0 : index
    %198 = vector.load %arg4[%c17_93, %c0_94] : memref<128x128xf32, #tpu.memory_space<vmem>>, vector<1x128xf32>
    %199 = vector.broadcast %192 : vector<8x1xf32> to vector<8x128xf32>
    %200 = vector.broadcast %198 : vector<1x128xf32> to vector<8x128xf32>
    %201 = arith.subf %199, %200 : vector<8x128xf32>
    %202 = arith.minimumf %191, %201 : vector<8x128xf32>
    %c0_95 = arith.constant 0 : index
    %c18 = arith.constant 18 : index
    %203 = vector.load %arg2[%c0_95, %c18] : memref<8x128xf32, #tpu.memory_space<vmem>>, vector<8x1xf32>
    %c18_96 = arith.constant 18 : index
    %c0_97 = arith.constant 0 : index
    %204 = vector.load %arg3[%c18_96, %c0_97] : memref<128x128xf32, #tpu.memory_space<vmem>>, vector<1x128xf32>
    %205 = vector.broadcast %203 : vector<8x1xf32> to vector<8x128xf32>
    %206 = vector.broadcast %204 : vector<1x128xf32> to vector<8x128xf32>
    %207 = arith.addf %205, %206 : vector<8x128xf32>
    %208 = arith.maximumf %197, %207 : vector<8x128xf32>
    %c18_98 = arith.constant 18 : index
    %c0_99 = arith.constant 0 : index
    %209 = vector.load %arg4[%c18_98, %c0_99] : memref<128x128xf32, #tpu.memory_space<vmem>>, vector<1x128xf32>
    %210 = vector.broadcast %203 : vector<8x1xf32> to vector<8x128xf32>
    %211 = vector.broadcast %209 : vector<1x128xf32> to vector<8x128xf32>
    %212 = arith.subf %210, %211 : vector<8x128xf32>
    %213 = arith.minimumf %202, %212 : vector<8x128xf32>
    %c0_100 = arith.constant 0 : index
    %c19 = arith.constant 19 : index
    %214 = vector.load %arg2[%c0_100, %c19] : memref<8x128xf32, #tpu.memory_space<vmem>>, vector<8x1xf32>
    %c19_101 = arith.constant 19 : index
    %c0_102 = arith.constant 0 : index
    %215 = vector.load %arg3[%c19_101, %c0_102] : memref<128x128xf32, #tpu.memory_space<vmem>>, vector<1x128xf32>
    %216 = vector.broadcast %214 : vector<8x1xf32> to vector<8x128xf32>
    %217 = vector.broadcast %215 : vector<1x128xf32> to vector<8x128xf32>
    %218 = arith.addf %216, %217 : vector<8x128xf32>
    %219 = arith.maximumf %208, %218 : vector<8x128xf32>
    %c19_103 = arith.constant 19 : index
    %c0_104 = arith.constant 0 : index
    %220 = vector.load %arg4[%c19_103, %c0_104] : memref<128x128xf32, #tpu.memory_space<vmem>>, vector<1x128xf32>
    %221 = vector.broadcast %214 : vector<8x1xf32> to vector<8x128xf32>
    %222 = vector.broadcast %220 : vector<1x128xf32> to vector<8x128xf32>
    %223 = arith.subf %221, %222 : vector<8x128xf32>
    %224 = arith.minimumf %213, %223 : vector<8x128xf32>
    %c0_105 = arith.constant 0 : index
    %c20 = arith.constant 20 : index
    %225 = vector.load %arg2[%c0_105, %c20] : memref<8x128xf32, #tpu.memory_space<vmem>>, vector<8x1xf32>
    %c20_106 = arith.constant 20 : index
    %c0_107 = arith.constant 0 : index
    %226 = vector.load %arg3[%c20_106, %c0_107] : memref<128x128xf32, #tpu.memory_space<vmem>>, vector<1x128xf32>
    %227 = vector.broadcast %225 : vector<8x1xf32> to vector<8x128xf32>
    %228 = vector.broadcast %226 : vector<1x128xf32> to vector<8x128xf32>
    %229 = arith.addf %227, %228 : vector<8x128xf32>
    %230 = arith.maximumf %219, %229 : vector<8x128xf32>
    %c20_108 = arith.constant 20 : index
    %c0_109 = arith.constant 0 : index
    %231 = vector.load %arg4[%c20_108, %c0_109] : memref<128x128xf32, #tpu.memory_space<vmem>>, vector<1x128xf32>
    %232 = vector.broadcast %225 : vector<8x1xf32> to vector<8x128xf32>
    %233 = vector.broadcast %231 : vector<1x128xf32> to vector<8x128xf32>
    %234 = arith.subf %232, %233 : vector<8x128xf32>
    %235 = arith.minimumf %224, %234 : vector<8x128xf32>
    %c0_110 = arith.constant 0 : index
    %c21 = arith.constant 21 : index
    %236 = vector.load %arg2[%c0_110, %c21] : memref<8x128xf32, #tpu.memory_space<vmem>>, vector<8x1xf32>
    %c21_111 = arith.constant 21 : index
    %c0_112 = arith.constant 0 : index
    %237 = vector.load %arg3[%c21_111, %c0_112] : memref<128x128xf32, #tpu.memory_space<vmem>>, vector<1x128xf32>
    %238 = vector.broadcast %236 : vector<8x1xf32> to vector<8x128xf32>
    %239 = vector.broadcast %237 : vector<1x128xf32> to vector<8x128xf32>
    %240 = arith.addf %238, %239 : vector<8x128xf32>
    %241 = arith.maximumf %230, %240 : vector<8x128xf32>
    %c21_113 = arith.constant 21 : index
    %c0_114 = arith.constant 0 : index
    %242 = vector.load %arg4[%c21_113, %c0_114] : memref<128x128xf32, #tpu.memory_space<vmem>>, vector<1x128xf32>
    %243 = vector.broadcast %236 : vector<8x1xf32> to vector<8x128xf32>
    %244 = vector.broadcast %242 : vector<1x128xf32> to vector<8x128xf32>
    %245 = arith.subf %243, %244 : vector<8x128xf32>
    %246 = arith.minimumf %235, %245 : vector<8x128xf32>
    %c0_115 = arith.constant 0 : index
    %c22 = arith.constant 22 : index
    %247 = vector.load %arg2[%c0_115, %c22] : memref<8x128xf32, #tpu.memory_space<vmem>>, vector<8x1xf32>
    %c22_116 = arith.constant 22 : index
    %c0_117 = arith.constant 0 : index
    %248 = vector.load %arg3[%c22_116, %c0_117] : memref<128x128xf32, #tpu.memory_space<vmem>>, vector<1x128xf32>
    %249 = vector.broadcast %247 : vector<8x1xf32> to vector<8x128xf32>
    %250 = vector.broadcast %248 : vector<1x128xf32> to vector<8x128xf32>
    %251 = arith.addf %249, %250 : vector<8x128xf32>
    %252 = arith.maximumf %241, %251 : vector<8x128xf32>
    %c22_118 = arith.constant 22 : index
    %c0_119 = arith.constant 0 : index
    %253 = vector.load %arg4[%c22_118, %c0_119] : memref<128x128xf32, #tpu.memory_space<vmem>>, vector<1x128xf32>
    %254 = vector.broadcast %247 : vector<8x1xf32> to vector<8x128xf32>
    %255 = vector.broadcast %253 : vector<1x128xf32> to vector<8x128xf32>
    %256 = arith.subf %254, %255 : vector<8x128xf32>
    %257 = arith.minimumf %246, %256 : vector<8x128xf32>
    %c0_120 = arith.constant 0 : index
    %c23 = arith.constant 23 : index
    %258 = vector.load %arg2[%c0_120, %c23] : memref<8x128xf32, #tpu.memory_space<vmem>>, vector<8x1xf32>
    %c23_121 = arith.constant 23 : index
    %c0_122 = arith.constant 0 : index
    %259 = vector.load %arg3[%c23_121, %c0_122] : memref<128x128xf32, #tpu.memory_space<vmem>>, vector<1x128xf32>
    %260 = vector.broadcast %258 : vector<8x1xf32> to vector<8x128xf32>
    %261 = vector.broadcast %259 : vector<1x128xf32> to vector<8x128xf32>
    %262 = arith.addf %260, %261 : vector<8x128xf32>
    %263 = arith.maximumf %252, %262 : vector<8x128xf32>
    %c23_123 = arith.constant 23 : index
    %c0_124 = arith.constant 0 : index
    %264 = vector.load %arg4[%c23_123, %c0_124] : memref<128x128xf32, #tpu.memory_space<vmem>>, vector<1x128xf32>
    %265 = vector.broadcast %258 : vector<8x1xf32> to vector<8x128xf32>
    %266 = vector.broadcast %264 : vector<1x128xf32> to vector<8x128xf32>
    %267 = arith.subf %265, %266 : vector<8x128xf32>
    %268 = arith.minimumf %257, %267 : vector<8x128xf32>
    %c0_125 = arith.constant 0 : index
    %c24 = arith.constant 24 : index
    %269 = vector.load %arg2[%c0_125, %c24] : memref<8x128xf32, #tpu.memory_space<vmem>>, vector<8x1xf32>
    %c24_126 = arith.constant 24 : index
    %c0_127 = arith.constant 0 : index
    %270 = vector.load %arg3[%c24_126, %c0_127] : memref<128x128xf32, #tpu.memory_space<vmem>>, vector<1x128xf32>
    %271 = vector.broadcast %269 : vector<8x1xf32> to vector<8x128xf32>
    %272 = vector.broadcast %270 : vector<1x128xf32> to vector<8x128xf32>
    %273 = arith.addf %271, %272 : vector<8x128xf32>
    %274 = arith.maximumf %263, %273 : vector<8x128xf32>
    %c24_128 = arith.constant 24 : index
    %c0_129 = arith.constant 0 : index
    %275 = vector.load %arg4[%c24_128, %c0_129] : memref<128x128xf32, #tpu.memory_space<vmem>>, vector<1x128xf32>
    %276 = vector.broadcast %269 : vector<8x1xf32> to vector<8x128xf32>
    %277 = vector.broadcast %275 : vector<1x128xf32> to vector<8x128xf32>
    %278 = arith.subf %276, %277 : vector<8x128xf32>
    %279 = arith.minimumf %268, %278 : vector<8x128xf32>
    %c0_130 = arith.constant 0 : index
    %c25 = arith.constant 25 : index
    %280 = vector.load %arg2[%c0_130, %c25] : memref<8x128xf32, #tpu.memory_space<vmem>>, vector<8x1xf32>
    %c25_131 = arith.constant 25 : index
    %c0_132 = arith.constant 0 : index
    %281 = vector.load %arg3[%c25_131, %c0_132] : memref<128x128xf32, #tpu.memory_space<vmem>>, vector<1x128xf32>
    %282 = vector.broadcast %280 : vector<8x1xf32> to vector<8x128xf32>
    %283 = vector.broadcast %281 : vector<1x128xf32> to vector<8x128xf32>
    %284 = arith.addf %282, %283 : vector<8x128xf32>
    %285 = arith.maximumf %274, %284 : vector<8x128xf32>
    %c25_133 = arith.constant 25 : index
    %c0_134 = arith.constant 0 : index
    %286 = vector.load %arg4[%c25_133, %c0_134] : memref<128x128xf32, #tpu.memory_space<vmem>>, vector<1x128xf32>
    %287 = vector.broadcast %280 : vector<8x1xf32> to vector<8x128xf32>
    %288 = vector.broadcast %286 : vector<1x128xf32> to vector<8x128xf32>
    %289 = arith.subf %287, %288 : vector<8x128xf32>
    %290 = arith.minimumf %279, %289 : vector<8x128xf32>
    %c0_135 = arith.constant 0 : index
    %c26 = arith.constant 26 : index
    %291 = vector.load %arg2[%c0_135, %c26] : memref<8x128xf32, #tpu.memory_space<vmem>>, vector<8x1xf32>
    %c26_136 = arith.constant 26 : index
    %c0_137 = arith.constant 0 : index
    %292 = vector.load %arg3[%c26_136, %c0_137] : memref<128x128xf32, #tpu.memory_space<vmem>>, vector<1x128xf32>
    %293 = vector.broadcast %291 : vector<8x1xf32> to vector<8x128xf32>
    %294 = vector.broadcast %292 : vector<1x128xf32> to vector<8x128xf32>
    %295 = arith.addf %293, %294 : vector<8x128xf32>
    %296 = arith.maximumf %285, %295 : vector<8x128xf32>
    %c26_138 = arith.constant 26 : index
    %c0_139 = arith.constant 0 : index
    %297 = vector.load %arg4[%c26_138, %c0_139] : memref<128x128xf32, #tpu.memory_space<vmem>>, vector<1x128xf32>
    %298 = vector.broadcast %291 : vector<8x1xf32> to vector<8x128xf32>
    %299 = vector.broadcast %297 : vector<1x128xf32> to vector<8x128xf32>
    %300 = arith.subf %298, %299 : vector<8x128xf32>
    %301 = arith.minimumf %290, %300 : vector<8x128xf32>
    %c0_140 = arith.constant 0 : index
    %c27 = arith.constant 27 : index
    %302 = vector.load %arg2[%c0_140, %c27] : memref<8x128xf32, #tpu.memory_space<vmem>>, vector<8x1xf32>
    %c27_141 = arith.constant 27 : index
    %c0_142 = arith.constant 0 : index
    %303 = vector.load %arg3[%c27_141, %c0_142] : memref<128x128xf32, #tpu.memory_space<vmem>>, vector<1x128xf32>
    %304 = vector.broadcast %302 : vector<8x1xf32> to vector<8x128xf32>
    %305 = vector.broadcast %303 : vector<1x128xf32> to vector<8x128xf32>
    %306 = arith.addf %304, %305 : vector<8x128xf32>
    %307 = arith.maximumf %296, %306 : vector<8x128xf32>
    %c27_143 = arith.constant 27 : index
    %c0_144 = arith.constant 0 : index
    %308 = vector.load %arg4[%c27_143, %c0_144] : memref<128x128xf32, #tpu.memory_space<vmem>>, vector<1x128xf32>
    %309 = vector.broadcast %302 : vector<8x1xf32> to vector<8x128xf32>
    %310 = vector.broadcast %308 : vector<1x128xf32> to vector<8x128xf32>
    %311 = arith.subf %309, %310 : vector<8x128xf32>
    %312 = arith.minimumf %301, %311 : vector<8x128xf32>
    %c0_145 = arith.constant 0 : index
    %c28 = arith.constant 28 : index
    %313 = vector.load %arg2[%c0_145, %c28] : memref<8x128xf32, #tpu.memory_space<vmem>>, vector<8x1xf32>
    %c28_146 = arith.constant 28 : index
    %c0_147 = arith.constant 0 : index
    %314 = vector.load %arg3[%c28_146, %c0_147] : memref<128x128xf32, #tpu.memory_space<vmem>>, vector<1x128xf32>
    %315 = vector.broadcast %313 : vector<8x1xf32> to vector<8x128xf32>
    %316 = vector.broadcast %314 : vector<1x128xf32> to vector<8x128xf32>
    %317 = arith.addf %315, %316 : vector<8x128xf32>
    %318 = arith.maximumf %307, %317 : vector<8x128xf32>
    %c28_148 = arith.constant 28 : index
    %c0_149 = arith.constant 0 : index
    %319 = vector.load %arg4[%c28_148, %c0_149] : memref<128x128xf32, #tpu.memory_space<vmem>>, vector<1x128xf32>
    %320 = vector.broadcast %313 : vector<8x1xf32> to vector<8x128xf32>
    %321 = vector.broadcast %319 : vector<1x128xf32> to vector<8x128xf32>
    %322 = arith.subf %320, %321 : vector<8x128xf32>
    %323 = arith.minimumf %312, %322 : vector<8x128xf32>
    %c0_150 = arith.constant 0 : index
    %c29 = arith.constant 29 : index
    %324 = vector.load %arg2[%c0_150, %c29] : memref<8x128xf32, #tpu.memory_space<vmem>>, vector<8x1xf32>
    %c29_151 = arith.constant 29 : index
    %c0_152 = arith.constant 0 : index
    %325 = vector.load %arg3[%c29_151, %c0_152] : memref<128x128xf32, #tpu.memory_space<vmem>>, vector<1x128xf32>
    %326 = vector.broadcast %324 : vector<8x1xf32> to vector<8x128xf32>
    %327 = vector.broadcast %325 : vector<1x128xf32> to vector<8x128xf32>
    %328 = arith.addf %326, %327 : vector<8x128xf32>
    %329 = arith.maximumf %318, %328 : vector<8x128xf32>
    %c29_153 = arith.constant 29 : index
    %c0_154 = arith.constant 0 : index
    %330 = vector.load %arg4[%c29_153, %c0_154] : memref<128x128xf32, #tpu.memory_space<vmem>>, vector<1x128xf32>
    %331 = vector.broadcast %324 : vector<8x1xf32> to vector<8x128xf32>
    %332 = vector.broadcast %330 : vector<1x128xf32> to vector<8x128xf32>
    %333 = arith.subf %331, %332 : vector<8x128xf32>
    %334 = arith.minimumf %323, %333 : vector<8x128xf32>
    %c0_155 = arith.constant 0 : index
    %c30 = arith.constant 30 : index
    %335 = vector.load %arg2[%c0_155, %c30] : memref<8x128xf32, #tpu.memory_space<vmem>>, vector<8x1xf32>
    %c30_156 = arith.constant 30 : index
    %c0_157 = arith.constant 0 : index
    %336 = vector.load %arg3[%c30_156, %c0_157] : memref<128x128xf32, #tpu.memory_space<vmem>>, vector<1x128xf32>
    %337 = vector.broadcast %335 : vector<8x1xf32> to vector<8x128xf32>
    %338 = vector.broadcast %336 : vector<1x128xf32> to vector<8x128xf32>
    %339 = arith.addf %337, %338 : vector<8x128xf32>
    %340 = arith.maximumf %329, %339 : vector<8x128xf32>
    %c30_158 = arith.constant 30 : index
    %c0_159 = arith.constant 0 : index
    %341 = vector.load %arg4[%c30_158, %c0_159] : memref<128x128xf32, #tpu.memory_space<vmem>>, vector<1x128xf32>
    %342 = vector.broadcast %335 : vector<8x1xf32> to vector<8x128xf32>
    %343 = vector.broadcast %341 : vector<1x128xf32> to vector<8x128xf32>
    %344 = arith.subf %342, %343 : vector<8x128xf32>
    %345 = arith.minimumf %334, %344 : vector<8x128xf32>
    %c0_160 = arith.constant 0 : index
    %c31 = arith.constant 31 : index
    %346 = vector.load %arg2[%c0_160, %c31] : memref<8x128xf32, #tpu.memory_space<vmem>>, vector<8x1xf32>
    %c31_161 = arith.constant 31 : index
    %c0_162 = arith.constant 0 : index
    %347 = vector.load %arg3[%c31_161, %c0_162] : memref<128x128xf32, #tpu.memory_space<vmem>>, vector<1x128xf32>
    %348 = vector.broadcast %346 : vector<8x1xf32> to vector<8x128xf32>
    %349 = vector.broadcast %347 : vector<1x128xf32> to vector<8x128xf32>
    %350 = arith.addf %348, %349 : vector<8x128xf32>
    %351 = arith.maximumf %340, %350 : vector<8x128xf32>
    %c31_163 = arith.constant 31 : index
    %c0_164 = arith.constant 0 : index
    %352 = vector.load %arg4[%c31_163, %c0_164] : memref<128x128xf32, #tpu.memory_space<vmem>>, vector<1x128xf32>
    %353 = vector.broadcast %346 : vector<8x1xf32> to vector<8x128xf32>
    %354 = vector.broadcast %352 : vector<1x128xf32> to vector<8x128xf32>
    %355 = arith.subf %353, %354 : vector<8x128xf32>
    %356 = arith.minimumf %345, %355 : vector<8x128xf32>
    %c0_165 = arith.constant 0 : index
    %c32 = arith.constant 32 : index
    %357 = vector.load %arg2[%c0_165, %c32] : memref<8x128xf32, #tpu.memory_space<vmem>>, vector<8x1xf32>
    %c32_166 = arith.constant 32 : index
    %c0_167 = arith.constant 0 : index
    %358 = vector.load %arg3[%c32_166, %c0_167] : memref<128x128xf32, #tpu.memory_space<vmem>>, vector<1x128xf32>
    %359 = vector.broadcast %357 : vector<8x1xf32> to vector<8x128xf32>
    %360 = vector.broadcast %358 : vector<1x128xf32> to vector<8x128xf32>
    %361 = arith.addf %359, %360 : vector<8x128xf32>
    %362 = arith.maximumf %351, %361 : vector<8x128xf32>
    %c32_168 = arith.constant 32 : index
    %c0_169 = arith.constant 0 : index
    %363 = vector.load %arg4[%c32_168, %c0_169] : memref<128x128xf32, #tpu.memory_space<vmem>>, vector<1x128xf32>
    %364 = vector.broadcast %357 : vector<8x1xf32> to vector<8x128xf32>
    %365 = vector.broadcast %363 : vector<1x128xf32> to vector<8x128xf32>
    %366 = arith.subf %364, %365 : vector<8x128xf32>
    %367 = arith.minimumf %356, %366 : vector<8x128xf32>
    %c0_170 = arith.constant 0 : index
    %c33 = arith.constant 33 : index
    %368 = vector.load %arg2[%c0_170, %c33] : memref<8x128xf32, #tpu.memory_space<vmem>>, vector<8x1xf32>
    %c33_171 = arith.constant 33 : index
    %c0_172 = arith.constant 0 : index
    %369 = vector.load %arg3[%c33_171, %c0_172] : memref<128x128xf32, #tpu.memory_space<vmem>>, vector<1x128xf32>
    %370 = vector.broadcast %368 : vector<8x1xf32> to vector<8x128xf32>
    %371 = vector.broadcast %369 : vector<1x128xf32> to vector<8x128xf32>
    %372 = arith.addf %370, %371 : vector<8x128xf32>
    %373 = arith.maximumf %362, %372 : vector<8x128xf32>
    %c33_173 = arith.constant 33 : index
    %c0_174 = arith.constant 0 : index
    %374 = vector.load %arg4[%c33_173, %c0_174] : memref<128x128xf32, #tpu.memory_space<vmem>>, vector<1x128xf32>
    %375 = vector.broadcast %368 : vector<8x1xf32> to vector<8x128xf32>
    %376 = vector.broadcast %374 : vector<1x128xf32> to vector<8x128xf32>
    %377 = arith.subf %375, %376 : vector<8x128xf32>
    %378 = arith.minimumf %367, %377 : vector<8x128xf32>
    %c0_175 = arith.constant 0 : index
    %c34 = arith.constant 34 : index
    %379 = vector.load %arg2[%c0_175, %c34] : memref<8x128xf32, #tpu.memory_space<vmem>>, vector<8x1xf32>
    %c34_176 = arith.constant 34 : index
    %c0_177 = arith.constant 0 : index
    %380 = vector.load %arg3[%c34_176, %c0_177] : memref<128x128xf32, #tpu.memory_space<vmem>>, vector<1x128xf32>
    %381 = vector.broadcast %379 : vector<8x1xf32> to vector<8x128xf32>
    %382 = vector.broadcast %380 : vector<1x128xf32> to vector<8x128xf32>
    %383 = arith.addf %381, %382 : vector<8x128xf32>
    %384 = arith.maximumf %373, %383 : vector<8x128xf32>
    %c34_178 = arith.constant 34 : index
    %c0_179 = arith.constant 0 : index
    %385 = vector.load %arg4[%c34_178, %c0_179] : memref<128x128xf32, #tpu.memory_space<vmem>>, vector<1x128xf32>
    %386 = vector.broadcast %379 : vector<8x1xf32> to vector<8x128xf32>
    %387 = vector.broadcast %385 : vector<1x128xf32> to vector<8x128xf32>
    %388 = arith.subf %386, %387 : vector<8x128xf32>
    %389 = arith.minimumf %378, %388 : vector<8x128xf32>
    %c0_180 = arith.constant 0 : index
    %c35 = arith.constant 35 : index
    %390 = vector.load %arg2[%c0_180, %c35] : memref<8x128xf32, #tpu.memory_space<vmem>>, vector<8x1xf32>
    %c35_181 = arith.constant 35 : index
    %c0_182 = arith.constant 0 : index
    %391 = vector.load %arg3[%c35_181, %c0_182] : memref<128x128xf32, #tpu.memory_space<vmem>>, vector<1x128xf32>
    %392 = vector.broadcast %390 : vector<8x1xf32> to vector<8x128xf32>
    %393 = vector.broadcast %391 : vector<1x128xf32> to vector<8x128xf32>
    %394 = arith.addf %392, %393 : vector<8x128xf32>
    %395 = arith.maximumf %384, %394 : vector<8x128xf32>
    %c35_183 = arith.constant 35 : index
    %c0_184 = arith.constant 0 : index
    %396 = vector.load %arg4[%c35_183, %c0_184] : memref<128x128xf32, #tpu.memory_space<vmem>>, vector<1x128xf32>
    %397 = vector.broadcast %390 : vector<8x1xf32> to vector<8x128xf32>
    %398 = vector.broadcast %396 : vector<1x128xf32> to vector<8x128xf32>
    %399 = arith.subf %397, %398 : vector<8x128xf32>
    %400 = arith.minimumf %389, %399 : vector<8x128xf32>
    %c0_185 = arith.constant 0 : index
    %c36 = arith.constant 36 : index
    %401 = vector.load %arg2[%c0_185, %c36] : memref<8x128xf32, #tpu.memory_space<vmem>>, vector<8x1xf32>
    %c36_186 = arith.constant 36 : index
    %c0_187 = arith.constant 0 : index
    %402 = vector.load %arg3[%c36_186, %c0_187] : memref<128x128xf32, #tpu.memory_space<vmem>>, vector<1x128xf32>
    %403 = vector.broadcast %401 : vector<8x1xf32> to vector<8x128xf32>
    %404 = vector.broadcast %402 : vector<1x128xf32> to vector<8x128xf32>
    %405 = arith.addf %403, %404 : vector<8x128xf32>
    %406 = arith.maximumf %395, %405 : vector<8x128xf32>
    %c36_188 = arith.constant 36 : index
    %c0_189 = arith.constant 0 : index
    %407 = vector.load %arg4[%c36_188, %c0_189] : memref<128x128xf32, #tpu.memory_space<vmem>>, vector<1x128xf32>
    %408 = vector.broadcast %401 : vector<8x1xf32> to vector<8x128xf32>
    %409 = vector.broadcast %407 : vector<1x128xf32> to vector<8x128xf32>
    %410 = arith.subf %408, %409 : vector<8x128xf32>
    %411 = arith.minimumf %400, %410 : vector<8x128xf32>
    %c0_190 = arith.constant 0 : index
    %c37 = arith.constant 37 : index
    %412 = vector.load %arg2[%c0_190, %c37] : memref<8x128xf32, #tpu.memory_space<vmem>>, vector<8x1xf32>
    %c37_191 = arith.constant 37 : index
    %c0_192 = arith.constant 0 : index
    %413 = vector.load %arg3[%c37_191, %c0_192] : memref<128x128xf32, #tpu.memory_space<vmem>>, vector<1x128xf32>
    %414 = vector.broadcast %412 : vector<8x1xf32> to vector<8x128xf32>
    %415 = vector.broadcast %413 : vector<1x128xf32> to vector<8x128xf32>
    %416 = arith.addf %414, %415 : vector<8x128xf32>
    %417 = arith.maximumf %406, %416 : vector<8x128xf32>
    %c37_193 = arith.constant 37 : index
    %c0_194 = arith.constant 0 : index
    %418 = vector.load %arg4[%c37_193, %c0_194] : memref<128x128xf32, #tpu.memory_space<vmem>>, vector<1x128xf32>
    %419 = vector.broadcast %412 : vector<8x1xf32> to vector<8x128xf32>
    %420 = vector.broadcast %418 : vector<1x128xf32> to vector<8x128xf32>
    %421 = arith.subf %419, %420 : vector<8x128xf32>
    %422 = arith.minimumf %411, %421 : vector<8x128xf32>
    %c0_195 = arith.constant 0 : index
    %c38 = arith.constant 38 : index
    %423 = vector.load %arg2[%c0_195, %c38] : memref<8x128xf32, #tpu.memory_space<vmem>>, vector<8x1xf32>
    %c38_196 = arith.constant 38 : index
    %c0_197 = arith.constant 0 : index
    %424 = vector.load %arg3[%c38_196, %c0_197] : memref<128x128xf32, #tpu.memory_space<vmem>>, vector<1x128xf32>
    %425 = vector.broadcast %423 : vector<8x1xf32> to vector<8x128xf32>
    %426 = vector.broadcast %424 : vector<1x128xf32> to vector<8x128xf32>
    %427 = arith.addf %425, %426 : vector<8x128xf32>
    %428 = arith.maximumf %417, %427 : vector<8x128xf32>
    %c38_198 = arith.constant 38 : index
    %c0_199 = arith.constant 0 : index
    %429 = vector.load %arg4[%c38_198, %c0_199] : memref<128x128xf32, #tpu.memory_space<vmem>>, vector<1x128xf32>
    %430 = vector.broadcast %423 : vector<8x1xf32> to vector<8x128xf32>
    %431 = vector.broadcast %429 : vector<1x128xf32> to vector<8x128xf32>
    %432 = arith.subf %430, %431 : vector<8x128xf32>
    %433 = arith.minimumf %422, %432 : vector<8x128xf32>
    %c0_200 = arith.constant 0 : index
    %c39 = arith.constant 39 : index
    %434 = vector.load %arg2[%c0_200, %c39] : memref<8x128xf32, #tpu.memory_space<vmem>>, vector<8x1xf32>
    %c39_201 = arith.constant 39 : index
    %c0_202 = arith.constant 0 : index
    %435 = vector.load %arg3[%c39_201, %c0_202] : memref<128x128xf32, #tpu.memory_space<vmem>>, vector<1x128xf32>
    %436 = vector.broadcast %434 : vector<8x1xf32> to vector<8x128xf32>
    %437 = vector.broadcast %435 : vector<1x128xf32> to vector<8x128xf32>
    %438 = arith.addf %436, %437 : vector<8x128xf32>
    %439 = arith.maximumf %428, %438 : vector<8x128xf32>
    %c39_203 = arith.constant 39 : index
    %c0_204 = arith.constant 0 : index
    %440 = vector.load %arg4[%c39_203, %c0_204] : memref<128x128xf32, #tpu.memory_space<vmem>>, vector<1x128xf32>
    %441 = vector.broadcast %434 : vector<8x1xf32> to vector<8x128xf32>
    %442 = vector.broadcast %440 : vector<1x128xf32> to vector<8x128xf32>
    %443 = arith.subf %441, %442 : vector<8x128xf32>
    %444 = arith.minimumf %433, %443 : vector<8x128xf32>
    %c0_205 = arith.constant 0 : index
    %c40 = arith.constant 40 : index
    %445 = vector.load %arg2[%c0_205, %c40] : memref<8x128xf32, #tpu.memory_space<vmem>>, vector<8x1xf32>
    %c40_206 = arith.constant 40 : index
    %c0_207 = arith.constant 0 : index
    %446 = vector.load %arg3[%c40_206, %c0_207] : memref<128x128xf32, #tpu.memory_space<vmem>>, vector<1x128xf32>
    %447 = vector.broadcast %445 : vector<8x1xf32> to vector<8x128xf32>
    %448 = vector.broadcast %446 : vector<1x128xf32> to vector<8x128xf32>
    %449 = arith.addf %447, %448 : vector<8x128xf32>
    %450 = arith.maximumf %439, %449 : vector<8x128xf32>
    %c40_208 = arith.constant 40 : index
    %c0_209 = arith.constant 0 : index
    %451 = vector.load %arg4[%c40_208, %c0_209] : memref<128x128xf32, #tpu.memory_space<vmem>>, vector<1x128xf32>
    %452 = vector.broadcast %445 : vector<8x1xf32> to vector<8x128xf32>
    %453 = vector.broadcast %451 : vector<1x128xf32> to vector<8x128xf32>
    %454 = arith.subf %452, %453 : vector<8x128xf32>
    %455 = arith.minimumf %444, %454 : vector<8x128xf32>
    %c0_210 = arith.constant 0 : index
    %c41 = arith.constant 41 : index
    %456 = vector.load %arg2[%c0_210, %c41] : memref<8x128xf32, #tpu.memory_space<vmem>>, vector<8x1xf32>
    %c41_211 = arith.constant 41 : index
    %c0_212 = arith.constant 0 : index
    %457 = vector.load %arg3[%c41_211, %c0_212] : memref<128x128xf32, #tpu.memory_space<vmem>>, vector<1x128xf32>
    %458 = vector.broadcast %456 : vector<8x1xf32> to vector<8x128xf32>
    %459 = vector.broadcast %457 : vector<1x128xf32> to vector<8x128xf32>
    %460 = arith.addf %458, %459 : vector<8x128xf32>
    %461 = arith.maximumf %450, %460 : vector<8x128xf32>
    %c41_213 = arith.constant 41 : index
    %c0_214 = arith.constant 0 : index
    %462 = vector.load %arg4[%c41_213, %c0_214] : memref<128x128xf32, #tpu.memory_space<vmem>>, vector<1x128xf32>
    %463 = vector.broadcast %456 : vector<8x1xf32> to vector<8x128xf32>
    %464 = vector.broadcast %462 : vector<1x128xf32> to vector<8x128xf32>
    %465 = arith.subf %463, %464 : vector<8x128xf32>
    %466 = arith.minimumf %455, %465 : vector<8x128xf32>
    %c0_215 = arith.constant 0 : index
    %c42 = arith.constant 42 : index
    %467 = vector.load %arg2[%c0_215, %c42] : memref<8x128xf32, #tpu.memory_space<vmem>>, vector<8x1xf32>
    %c42_216 = arith.constant 42 : index
    %c0_217 = arith.constant 0 : index
    %468 = vector.load %arg3[%c42_216, %c0_217] : memref<128x128xf32, #tpu.memory_space<vmem>>, vector<1x128xf32>
    %469 = vector.broadcast %467 : vector<8x1xf32> to vector<8x128xf32>
    %470 = vector.broadcast %468 : vector<1x128xf32> to vector<8x128xf32>
    %471 = arith.addf %469, %470 : vector<8x128xf32>
    %472 = arith.maximumf %461, %471 : vector<8x128xf32>
    %c42_218 = arith.constant 42 : index
    %c0_219 = arith.constant 0 : index
    %473 = vector.load %arg4[%c42_218, %c0_219] : memref<128x128xf32, #tpu.memory_space<vmem>>, vector<1x128xf32>
    %474 = vector.broadcast %467 : vector<8x1xf32> to vector<8x128xf32>
    %475 = vector.broadcast %473 : vector<1x128xf32> to vector<8x128xf32>
    %476 = arith.subf %474, %475 : vector<8x128xf32>
    %477 = arith.minimumf %466, %476 : vector<8x128xf32>
    %c0_220 = arith.constant 0 : index
    %c43 = arith.constant 43 : index
    %478 = vector.load %arg2[%c0_220, %c43] : memref<8x128xf32, #tpu.memory_space<vmem>>, vector<8x1xf32>
    %c43_221 = arith.constant 43 : index
    %c0_222 = arith.constant 0 : index
    %479 = vector.load %arg3[%c43_221, %c0_222] : memref<128x128xf32, #tpu.memory_space<vmem>>, vector<1x128xf32>
    %480 = vector.broadcast %478 : vector<8x1xf32> to vector<8x128xf32>
    %481 = vector.broadcast %479 : vector<1x128xf32> to vector<8x128xf32>
    %482 = arith.addf %480, %481 : vector<8x128xf32>
    %483 = arith.maximumf %472, %482 : vector<8x128xf32>
    %c43_223 = arith.constant 43 : index
    %c0_224 = arith.constant 0 : index
    %484 = vector.load %arg4[%c43_223, %c0_224] : memref<128x128xf32, #tpu.memory_space<vmem>>, vector<1x128xf32>
    %485 = vector.broadcast %478 : vector<8x1xf32> to vector<8x128xf32>
    %486 = vector.broadcast %484 : vector<1x128xf32> to vector<8x128xf32>
    %487 = arith.subf %485, %486 : vector<8x128xf32>
    %488 = arith.minimumf %477, %487 : vector<8x128xf32>
    %c0_225 = arith.constant 0 : index
    %c44 = arith.constant 44 : index
    %489 = vector.load %arg2[%c0_225, %c44] : memref<8x128xf32, #tpu.memory_space<vmem>>, vector<8x1xf32>
    %c44_226 = arith.constant 44 : index
    %c0_227 = arith.constant 0 : index
    %490 = vector.load %arg3[%c44_226, %c0_227] : memref<128x128xf32, #tpu.memory_space<vmem>>, vector<1x128xf32>
    %491 = vector.broadcast %489 : vector<8x1xf32> to vector<8x128xf32>
    %492 = vector.broadcast %490 : vector<1x128xf32> to vector<8x128xf32>
    %493 = arith.addf %491, %492 : vector<8x128xf32>
    %494 = arith.maximumf %483, %493 : vector<8x128xf32>
    %c44_228 = arith.constant 44 : index
    %c0_229 = arith.constant 0 : index
    %495 = vector.load %arg4[%c44_228, %c0_229] : memref<128x128xf32, #tpu.memory_space<vmem>>, vector<1x128xf32>
    %496 = vector.broadcast %489 : vector<8x1xf32> to vector<8x128xf32>
    %497 = vector.broadcast %495 : vector<1x128xf32> to vector<8x128xf32>
    %498 = arith.subf %496, %497 : vector<8x128xf32>
    %499 = arith.minimumf %488, %498 : vector<8x128xf32>
    %c0_230 = arith.constant 0 : index
    %c45 = arith.constant 45 : index
    %500 = vector.load %arg2[%c0_230, %c45] : memref<8x128xf32, #tpu.memory_space<vmem>>, vector<8x1xf32>
    %c45_231 = arith.constant 45 : index
    %c0_232 = arith.constant 0 : index
    %501 = vector.load %arg3[%c45_231, %c0_232] : memref<128x128xf32, #tpu.memory_space<vmem>>, vector<1x128xf32>
    %502 = vector.broadcast %500 : vector<8x1xf32> to vector<8x128xf32>
    %503 = vector.broadcast %501 : vector<1x128xf32> to vector<8x128xf32>
    %504 = arith.addf %502, %503 : vector<8x128xf32>
    %505 = arith.maximumf %494, %504 : vector<8x128xf32>
    %c45_233 = arith.constant 45 : index
    %c0_234 = arith.constant 0 : index
    %506 = vector.load %arg4[%c45_233, %c0_234] : memref<128x128xf32, #tpu.memory_space<vmem>>, vector<1x128xf32>
    %507 = vector.broadcast %500 : vector<8x1xf32> to vector<8x128xf32>
    %508 = vector.broadcast %506 : vector<1x128xf32> to vector<8x128xf32>
    %509 = arith.subf %507, %508 : vector<8x128xf32>
    %510 = arith.minimumf %499, %509 : vector<8x128xf32>
    %c0_235 = arith.constant 0 : index
    %c46 = arith.constant 46 : index
    %511 = vector.load %arg2[%c0_235, %c46] : memref<8x128xf32, #tpu.memory_space<vmem>>, vector<8x1xf32>
    %c46_236 = arith.constant 46 : index
    %c0_237 = arith.constant 0 : index
    %512 = vector.load %arg3[%c46_236, %c0_237] : memref<128x128xf32, #tpu.memory_space<vmem>>, vector<1x128xf32>
    %513 = vector.broadcast %511 : vector<8x1xf32> to vector<8x128xf32>
    %514 = vector.broadcast %512 : vector<1x128xf32> to vector<8x128xf32>
    %515 = arith.addf %513, %514 : vector<8x128xf32>
    %516 = arith.maximumf %505, %515 : vector<8x128xf32>
    %c46_238 = arith.constant 46 : index
    %c0_239 = arith.constant 0 : index
    %517 = vector.load %arg4[%c46_238, %c0_239] : memref<128x128xf32, #tpu.memory_space<vmem>>, vector<1x128xf32>
    %518 = vector.broadcast %511 : vector<8x1xf32> to vector<8x128xf32>
    %519 = vector.broadcast %517 : vector<1x128xf32> to vector<8x128xf32>
    %520 = arith.subf %518, %519 : vector<8x128xf32>
    %521 = arith.minimumf %510, %520 : vector<8x128xf32>
    %c0_240 = arith.constant 0 : index
    %c47 = arith.constant 47 : index
    %522 = vector.load %arg2[%c0_240, %c47] : memref<8x128xf32, #tpu.memory_space<vmem>>, vector<8x1xf32>
    %c47_241 = arith.constant 47 : index
    %c0_242 = arith.constant 0 : index
    %523 = vector.load %arg3[%c47_241, %c0_242] : memref<128x128xf32, #tpu.memory_space<vmem>>, vector<1x128xf32>
    %524 = vector.broadcast %522 : vector<8x1xf32> to vector<8x128xf32>
    %525 = vector.broadcast %523 : vector<1x128xf32> to vector<8x128xf32>
    %526 = arith.addf %524, %525 : vector<8x128xf32>
    %527 = arith.maximumf %516, %526 : vector<8x128xf32>
    %c47_243 = arith.constant 47 : index
    %c0_244 = arith.constant 0 : index
    %528 = vector.load %arg4[%c47_243, %c0_244] : memref<128x128xf32, #tpu.memory_space<vmem>>, vector<1x128xf32>
    %529 = vector.broadcast %522 : vector<8x1xf32> to vector<8x128xf32>
    %530 = vector.broadcast %528 : vector<1x128xf32> to vector<8x128xf32>
    %531 = arith.subf %529, %530 : vector<8x128xf32>
    %532 = arith.minimumf %521, %531 : vector<8x128xf32>
    %c0_245 = arith.constant 0 : index
    %c48 = arith.constant 48 : index
    %533 = vector.load %arg2[%c0_245, %c48] : memref<8x128xf32, #tpu.memory_space<vmem>>, vector<8x1xf32>
    %c48_246 = arith.constant 48 : index
    %c0_247 = arith.constant 0 : index
    %534 = vector.load %arg3[%c48_246, %c0_247] : memref<128x128xf32, #tpu.memory_space<vmem>>, vector<1x128xf32>
    %535 = vector.broadcast %533 : vector<8x1xf32> to vector<8x128xf32>
    %536 = vector.broadcast %534 : vector<1x128xf32> to vector<8x128xf32>
    %537 = arith.addf %535, %536 : vector<8x128xf32>
    %538 = arith.maximumf %527, %537 : vector<8x128xf32>
    %c48_248 = arith.constant 48 : index
    %c0_249 = arith.constant 0 : index
    %539 = vector.load %arg4[%c48_248, %c0_249] : memref<128x128xf32, #tpu.memory_space<vmem>>, vector<1x128xf32>
    %540 = vector.broadcast %533 : vector<8x1xf32> to vector<8x128xf32>
    %541 = vector.broadcast %539 : vector<1x128xf32> to vector<8x128xf32>
    %542 = arith.subf %540, %541 : vector<8x128xf32>
    %543 = arith.minimumf %532, %542 : vector<8x128xf32>
    %c0_250 = arith.constant 0 : index
    %c49 = arith.constant 49 : index
    %544 = vector.load %arg2[%c0_250, %c49] : memref<8x128xf32, #tpu.memory_space<vmem>>, vector<8x1xf32>
    %c49_251 = arith.constant 49 : index
    %c0_252 = arith.constant 0 : index
    %545 = vector.load %arg3[%c49_251, %c0_252] : memref<128x128xf32, #tpu.memory_space<vmem>>, vector<1x128xf32>
    %546 = vector.broadcast %544 : vector<8x1xf32> to vector<8x128xf32>
    %547 = vector.broadcast %545 : vector<1x128xf32> to vector<8x128xf32>
    %548 = arith.addf %546, %547 : vector<8x128xf32>
    %549 = arith.maximumf %538, %548 : vector<8x128xf32>
    %c49_253 = arith.constant 49 : index
    %c0_254 = arith.constant 0 : index
    %550 = vector.load %arg4[%c49_253, %c0_254] : memref<128x128xf32, #tpu.memory_space<vmem>>, vector<1x128xf32>
    %551 = vector.broadcast %544 : vector<8x1xf32> to vector<8x128xf32>
    %552 = vector.broadcast %550 : vector<1x128xf32> to vector<8x128xf32>
    %553 = arith.subf %551, %552 : vector<8x128xf32>
    %554 = arith.minimumf %543, %553 : vector<8x128xf32>
    %c0_255 = arith.constant 0 : index
    %c50 = arith.constant 50 : index
    %555 = vector.load %arg2[%c0_255, %c50] : memref<8x128xf32, #tpu.memory_space<vmem>>, vector<8x1xf32>
    %c50_256 = arith.constant 50 : index
    %c0_257 = arith.constant 0 : index
    %556 = vector.load %arg3[%c50_256, %c0_257] : memref<128x128xf32, #tpu.memory_space<vmem>>, vector<1x128xf32>
    %557 = vector.broadcast %555 : vector<8x1xf32> to vector<8x128xf32>
    %558 = vector.broadcast %556 : vector<1x128xf32> to vector<8x128xf32>
    %559 = arith.addf %557, %558 : vector<8x128xf32>
    %560 = arith.maximumf %549, %559 : vector<8x128xf32>
    %c50_258 = arith.constant 50 : index
    %c0_259 = arith.constant 0 : index
    %561 = vector.load %arg4[%c50_258, %c0_259] : memref<128x128xf32, #tpu.memory_space<vmem>>, vector<1x128xf32>
    %562 = vector.broadcast %555 : vector<8x1xf32> to vector<8x128xf32>
    %563 = vector.broadcast %561 : vector<1x128xf32> to vector<8x128xf32>
    %564 = arith.subf %562, %563 : vector<8x128xf32>
    %565 = arith.minimumf %554, %564 : vector<8x128xf32>
    %c0_260 = arith.constant 0 : index
    %c51 = arith.constant 51 : index
    %566 = vector.load %arg2[%c0_260, %c51] : memref<8x128xf32, #tpu.memory_space<vmem>>, vector<8x1xf32>
    %c51_261 = arith.constant 51 : index
    %c0_262 = arith.constant 0 : index
    %567 = vector.load %arg3[%c51_261, %c0_262] : memref<128x128xf32, #tpu.memory_space<vmem>>, vector<1x128xf32>
    %568 = vector.broadcast %566 : vector<8x1xf32> to vector<8x128xf32>
    %569 = vector.broadcast %567 : vector<1x128xf32> to vector<8x128xf32>
    %570 = arith.addf %568, %569 : vector<8x128xf32>
    %571 = arith.maximumf %560, %570 : vector<8x128xf32>
    %c51_263 = arith.constant 51 : index
    %c0_264 = arith.constant 0 : index
    %572 = vector.load %arg4[%c51_263, %c0_264] : memref<128x128xf32, #tpu.memory_space<vmem>>, vector<1x128xf32>
    %573 = vector.broadcast %566 : vector<8x1xf32> to vector<8x128xf32>
    %574 = vector.broadcast %572 : vector<1x128xf32> to vector<8x128xf32>
    %575 = arith.subf %573, %574 : vector<8x128xf32>
    %576 = arith.minimumf %565, %575 : vector<8x128xf32>
    %c0_265 = arith.constant 0 : index
    %c52 = arith.constant 52 : index
    %577 = vector.load %arg2[%c0_265, %c52] : memref<8x128xf32, #tpu.memory_space<vmem>>, vector<8x1xf32>
    %c52_266 = arith.constant 52 : index
    %c0_267 = arith.constant 0 : index
    %578 = vector.load %arg3[%c52_266, %c0_267] : memref<128x128xf32, #tpu.memory_space<vmem>>, vector<1x128xf32>
    %579 = vector.broadcast %577 : vector<8x1xf32> to vector<8x128xf32>
    %580 = vector.broadcast %578 : vector<1x128xf32> to vector<8x128xf32>
    %581 = arith.addf %579, %580 : vector<8x128xf32>
    %582 = arith.maximumf %571, %581 : vector<8x128xf32>
    %c52_268 = arith.constant 52 : index
    %c0_269 = arith.constant 0 : index
    %583 = vector.load %arg4[%c52_268, %c0_269] : memref<128x128xf32, #tpu.memory_space<vmem>>, vector<1x128xf32>
    %584 = vector.broadcast %577 : vector<8x1xf32> to vector<8x128xf32>
    %585 = vector.broadcast %583 : vector<1x128xf32> to vector<8x128xf32>
    %586 = arith.subf %584, %585 : vector<8x128xf32>
    %587 = arith.minimumf %576, %586 : vector<8x128xf32>
    %c0_270 = arith.constant 0 : index
    %c53 = arith.constant 53 : index
    %588 = vector.load %arg2[%c0_270, %c53] : memref<8x128xf32, #tpu.memory_space<vmem>>, vector<8x1xf32>
    %c53_271 = arith.constant 53 : index
    %c0_272 = arith.constant 0 : index
    %589 = vector.load %arg3[%c53_271, %c0_272] : memref<128x128xf32, #tpu.memory_space<vmem>>, vector<1x128xf32>
    %590 = vector.broadcast %588 : vector<8x1xf32> to vector<8x128xf32>
    %591 = vector.broadcast %589 : vector<1x128xf32> to vector<8x128xf32>
    %592 = arith.addf %590, %591 : vector<8x128xf32>
    %593 = arith.maximumf %582, %592 : vector<8x128xf32>
    %c53_273 = arith.constant 53 : index
    %c0_274 = arith.constant 0 : index
    %594 = vector.load %arg4[%c53_273, %c0_274] : memref<128x128xf32, #tpu.memory_space<vmem>>, vector<1x128xf32>
    %595 = vector.broadcast %588 : vector<8x1xf32> to vector<8x128xf32>
    %596 = vector.broadcast %594 : vector<1x128xf32> to vector<8x128xf32>
    %597 = arith.subf %595, %596 : vector<8x128xf32>
    %598 = arith.minimumf %587, %597 : vector<8x128xf32>
    %c0_275 = arith.constant 0 : index
    %c54 = arith.constant 54 : index
    %599 = vector.load %arg2[%c0_275, %c54] : memref<8x128xf32, #tpu.memory_space<vmem>>, vector<8x1xf32>
    %c54_276 = arith.constant 54 : index
    %c0_277 = arith.constant 0 : index
    %600 = vector.load %arg3[%c54_276, %c0_277] : memref<128x128xf32, #tpu.memory_space<vmem>>, vector<1x128xf32>
    %601 = vector.broadcast %599 : vector<8x1xf32> to vector<8x128xf32>
    %602 = vector.broadcast %600 : vector<1x128xf32> to vector<8x128xf32>
    %603 = arith.addf %601, %602 : vector<8x128xf32>
    %604 = arith.maximumf %593, %603 : vector<8x128xf32>
    %c54_278 = arith.constant 54 : index
    %c0_279 = arith.constant 0 : index
    %605 = vector.load %arg4[%c54_278, %c0_279] : memref<128x128xf32, #tpu.memory_space<vmem>>, vector<1x128xf32>
    %606 = vector.broadcast %599 : vector<8x1xf32> to vector<8x128xf32>
    %607 = vector.broadcast %605 : vector<1x128xf32> to vector<8x128xf32>
    %608 = arith.subf %606, %607 : vector<8x128xf32>
    %609 = arith.minimumf %598, %608 : vector<8x128xf32>
    %c0_280 = arith.constant 0 : index
    %c55 = arith.constant 55 : index
    %610 = vector.load %arg2[%c0_280, %c55] : memref<8x128xf32, #tpu.memory_space<vmem>>, vector<8x1xf32>
    %c55_281 = arith.constant 55 : index
    %c0_282 = arith.constant 0 : index
    %611 = vector.load %arg3[%c55_281, %c0_282] : memref<128x128xf32, #tpu.memory_space<vmem>>, vector<1x128xf32>
    %612 = vector.broadcast %610 : vector<8x1xf32> to vector<8x128xf32>
    %613 = vector.broadcast %611 : vector<1x128xf32> to vector<8x128xf32>
    %614 = arith.addf %612, %613 : vector<8x128xf32>
    %615 = arith.maximumf %604, %614 : vector<8x128xf32>
    %c55_283 = arith.constant 55 : index
    %c0_284 = arith.constant 0 : index
    %616 = vector.load %arg4[%c55_283, %c0_284] : memref<128x128xf32, #tpu.memory_space<vmem>>, vector<1x128xf32>
    %617 = vector.broadcast %610 : vector<8x1xf32> to vector<8x128xf32>
    %618 = vector.broadcast %616 : vector<1x128xf32> to vector<8x128xf32>
    %619 = arith.subf %617, %618 : vector<8x128xf32>
    %620 = arith.minimumf %609, %619 : vector<8x128xf32>
    %c0_285 = arith.constant 0 : index
    %c56 = arith.constant 56 : index
    %621 = vector.load %arg2[%c0_285, %c56] : memref<8x128xf32, #tpu.memory_space<vmem>>, vector<8x1xf32>
    %c56_286 = arith.constant 56 : index
    %c0_287 = arith.constant 0 : index
    %622 = vector.load %arg3[%c56_286, %c0_287] : memref<128x128xf32, #tpu.memory_space<vmem>>, vector<1x128xf32>
    %623 = vector.broadcast %621 : vector<8x1xf32> to vector<8x128xf32>
    %624 = vector.broadcast %622 : vector<1x128xf32> to vector<8x128xf32>
    %625 = arith.addf %623, %624 : vector<8x128xf32>
    %626 = arith.maximumf %615, %625 : vector<8x128xf32>
    %c56_288 = arith.constant 56 : index
    %c0_289 = arith.constant 0 : index
    %627 = vector.load %arg4[%c56_288, %c0_289] : memref<128x128xf32, #tpu.memory_space<vmem>>, vector<1x128xf32>
    %628 = vector.broadcast %621 : vector<8x1xf32> to vector<8x128xf32>
    %629 = vector.broadcast %627 : vector<1x128xf32> to vector<8x128xf32>
    %630 = arith.subf %628, %629 : vector<8x128xf32>
    %631 = arith.minimumf %620, %630 : vector<8x128xf32>
    %c0_290 = arith.constant 0 : index
    %c57 = arith.constant 57 : index
    %632 = vector.load %arg2[%c0_290, %c57] : memref<8x128xf32, #tpu.memory_space<vmem>>, vector<8x1xf32>
    %c57_291 = arith.constant 57 : index
    %c0_292 = arith.constant 0 : index
    %633 = vector.load %arg3[%c57_291, %c0_292] : memref<128x128xf32, #tpu.memory_space<vmem>>, vector<1x128xf32>
    %634 = vector.broadcast %632 : vector<8x1xf32> to vector<8x128xf32>
    %635 = vector.broadcast %633 : vector<1x128xf32> to vector<8x128xf32>
    %636 = arith.addf %634, %635 : vector<8x128xf32>
    %637 = arith.maximumf %626, %636 : vector<8x128xf32>
    %c57_293 = arith.constant 57 : index
    %c0_294 = arith.constant 0 : index
    %638 = vector.load %arg4[%c57_293, %c0_294] : memref<128x128xf32, #tpu.memory_space<vmem>>, vector<1x128xf32>
    %639 = vector.broadcast %632 : vector<8x1xf32> to vector<8x128xf32>
    %640 = vector.broadcast %638 : vector<1x128xf32> to vector<8x128xf32>
    %641 = arith.subf %639, %640 : vector<8x128xf32>
    %642 = arith.minimumf %631, %641 : vector<8x128xf32>
    %c0_295 = arith.constant 0 : index
    %c58 = arith.constant 58 : index
    %643 = vector.load %arg2[%c0_295, %c58] : memref<8x128xf32, #tpu.memory_space<vmem>>, vector<8x1xf32>
    %c58_296 = arith.constant 58 : index
    %c0_297 = arith.constant 0 : index
    %644 = vector.load %arg3[%c58_296, %c0_297] : memref<128x128xf32, #tpu.memory_space<vmem>>, vector<1x128xf32>
    %645 = vector.broadcast %643 : vector<8x1xf32> to vector<8x128xf32>
    %646 = vector.broadcast %644 : vector<1x128xf32> to vector<8x128xf32>
    %647 = arith.addf %645, %646 : vector<8x128xf32>
    %648 = arith.maximumf %637, %647 : vector<8x128xf32>
    %c58_298 = arith.constant 58 : index
    %c0_299 = arith.constant 0 : index
    %649 = vector.load %arg4[%c58_298, %c0_299] : memref<128x128xf32, #tpu.memory_space<vmem>>, vector<1x128xf32>
    %650 = vector.broadcast %643 : vector<8x1xf32> to vector<8x128xf32>
    %651 = vector.broadcast %649 : vector<1x128xf32> to vector<8x128xf32>
    %652 = arith.subf %650, %651 : vector<8x128xf32>
    %653 = arith.minimumf %642, %652 : vector<8x128xf32>
    %c0_300 = arith.constant 0 : index
    %c59 = arith.constant 59 : index
    %654 = vector.load %arg2[%c0_300, %c59] : memref<8x128xf32, #tpu.memory_space<vmem>>, vector<8x1xf32>
    %c59_301 = arith.constant 59 : index
    %c0_302 = arith.constant 0 : index
    %655 = vector.load %arg3[%c59_301, %c0_302] : memref<128x128xf32, #tpu.memory_space<vmem>>, vector<1x128xf32>
    %656 = vector.broadcast %654 : vector<8x1xf32> to vector<8x128xf32>
    %657 = vector.broadcast %655 : vector<1x128xf32> to vector<8x128xf32>
    %658 = arith.addf %656, %657 : vector<8x128xf32>
    %659 = arith.maximumf %648, %658 : vector<8x128xf32>
    %c59_303 = arith.constant 59 : index
    %c0_304 = arith.constant 0 : index
    %660 = vector.load %arg4[%c59_303, %c0_304] : memref<128x128xf32, #tpu.memory_space<vmem>>, vector<1x128xf32>
    %661 = vector.broadcast %654 : vector<8x1xf32> to vector<8x128xf32>
    %662 = vector.broadcast %660 : vector<1x128xf32> to vector<8x128xf32>
    %663 = arith.subf %661, %662 : vector<8x128xf32>
    %664 = arith.minimumf %653, %663 : vector<8x128xf32>
    %c0_305 = arith.constant 0 : index
    %c60 = arith.constant 60 : index
    %665 = vector.load %arg2[%c0_305, %c60] : memref<8x128xf32, #tpu.memory_space<vmem>>, vector<8x1xf32>
    %c60_306 = arith.constant 60 : index
    %c0_307 = arith.constant 0 : index
    %666 = vector.load %arg3[%c60_306, %c0_307] : memref<128x128xf32, #tpu.memory_space<vmem>>, vector<1x128xf32>
    %667 = vector.broadcast %665 : vector<8x1xf32> to vector<8x128xf32>
    %668 = vector.broadcast %666 : vector<1x128xf32> to vector<8x128xf32>
    %669 = arith.addf %667, %668 : vector<8x128xf32>
    %670 = arith.maximumf %659, %669 : vector<8x128xf32>
    %c60_308 = arith.constant 60 : index
    %c0_309 = arith.constant 0 : index
    %671 = vector.load %arg4[%c60_308, %c0_309] : memref<128x128xf32, #tpu.memory_space<vmem>>, vector<1x128xf32>
    %672 = vector.broadcast %665 : vector<8x1xf32> to vector<8x128xf32>
    %673 = vector.broadcast %671 : vector<1x128xf32> to vector<8x128xf32>
    %674 = arith.subf %672, %673 : vector<8x128xf32>
    %675 = arith.minimumf %664, %674 : vector<8x128xf32>
    %c0_310 = arith.constant 0 : index
    %c61 = arith.constant 61 : index
    %676 = vector.load %arg2[%c0_310, %c61] : memref<8x128xf32, #tpu.memory_space<vmem>>, vector<8x1xf32>
    %c61_311 = arith.constant 61 : index
    %c0_312 = arith.constant 0 : index
    %677 = vector.load %arg3[%c61_311, %c0_312] : memref<128x128xf32, #tpu.memory_space<vmem>>, vector<1x128xf32>
    %678 = vector.broadcast %676 : vector<8x1xf32> to vector<8x128xf32>
    %679 = vector.broadcast %677 : vector<1x128xf32> to vector<8x128xf32>
    %680 = arith.addf %678, %679 : vector<8x128xf32>
    %681 = arith.maximumf %670, %680 : vector<8x128xf32>
    %c61_313 = arith.constant 61 : index
    %c0_314 = arith.constant 0 : index
    %682 = vector.load %arg4[%c61_313, %c0_314] : memref<128x128xf32, #tpu.memory_space<vmem>>, vector<1x128xf32>
    %683 = vector.broadcast %676 : vector<8x1xf32> to vector<8x128xf32>
    %684 = vector.broadcast %682 : vector<1x128xf32> to vector<8x128xf32>
    %685 = arith.subf %683, %684 : vector<8x128xf32>
    %686 = arith.minimumf %675, %685 : vector<8x128xf32>
    %c0_315 = arith.constant 0 : index
    %c62 = arith.constant 62 : index
    %687 = vector.load %arg2[%c0_315, %c62] : memref<8x128xf32, #tpu.memory_space<vmem>>, vector<8x1xf32>
    %c62_316 = arith.constant 62 : index
    %c0_317 = arith.constant 0 : index
    %688 = vector.load %arg3[%c62_316, %c0_317] : memref<128x128xf32, #tpu.memory_space<vmem>>, vector<1x128xf32>
    %689 = vector.broadcast %687 : vector<8x1xf32> to vector<8x128xf32>
    %690 = vector.broadcast %688 : vector<1x128xf32> to vector<8x128xf32>
    %691 = arith.addf %689, %690 : vector<8x128xf32>
    %692 = arith.maximumf %681, %691 : vector<8x128xf32>
    %c62_318 = arith.constant 62 : index
    %c0_319 = arith.constant 0 : index
    %693 = vector.load %arg4[%c62_318, %c0_319] : memref<128x128xf32, #tpu.memory_space<vmem>>, vector<1x128xf32>
    %694 = vector.broadcast %687 : vector<8x1xf32> to vector<8x128xf32>
    %695 = vector.broadcast %693 : vector<1x128xf32> to vector<8x128xf32>
    %696 = arith.subf %694, %695 : vector<8x128xf32>
    %697 = arith.minimumf %686, %696 : vector<8x128xf32>
    %c0_320 = arith.constant 0 : index
    %c63 = arith.constant 63 : index
    %698 = vector.load %arg2[%c0_320, %c63] : memref<8x128xf32, #tpu.memory_space<vmem>>, vector<8x1xf32>
    %c63_321 = arith.constant 63 : index
    %c0_322 = arith.constant 0 : index
    %699 = vector.load %arg3[%c63_321, %c0_322] : memref<128x128xf32, #tpu.memory_space<vmem>>, vector<1x128xf32>
    %700 = vector.broadcast %698 : vector<8x1xf32> to vector<8x128xf32>
    %701 = vector.broadcast %699 : vector<1x128xf32> to vector<8x128xf32>
    %702 = arith.addf %700, %701 : vector<8x128xf32>
    %703 = arith.maximumf %692, %702 : vector<8x128xf32>
    %c63_323 = arith.constant 63 : index
    %c0_324 = arith.constant 0 : index
    %704 = vector.load %arg4[%c63_323, %c0_324] : memref<128x128xf32, #tpu.memory_space<vmem>>, vector<1x128xf32>
    %705 = vector.broadcast %698 : vector<8x1xf32> to vector<8x128xf32>
    %706 = vector.broadcast %704 : vector<1x128xf32> to vector<8x128xf32>
    %707 = arith.subf %705, %706 : vector<8x128xf32>
    %708 = arith.minimumf %697, %707 : vector<8x128xf32>
    %c0_325 = arith.constant 0 : index
    %c64 = arith.constant 64 : index
    %709 = vector.load %arg2[%c0_325, %c64] : memref<8x128xf32, #tpu.memory_space<vmem>>, vector<8x1xf32>
    %c64_326 = arith.constant 64 : index
    %c0_327 = arith.constant 0 : index
    %710 = vector.load %arg3[%c64_326, %c0_327] : memref<128x128xf32, #tpu.memory_space<vmem>>, vector<1x128xf32>
    %711 = vector.broadcast %709 : vector<8x1xf32> to vector<8x128xf32>
    %712 = vector.broadcast %710 : vector<1x128xf32> to vector<8x128xf32>
    %713 = arith.addf %711, %712 : vector<8x128xf32>
    %714 = arith.maximumf %703, %713 : vector<8x128xf32>
    %c64_328 = arith.constant 64 : index
    %c0_329 = arith.constant 0 : index
    %715 = vector.load %arg4[%c64_328, %c0_329] : memref<128x128xf32, #tpu.memory_space<vmem>>, vector<1x128xf32>
    %716 = vector.broadcast %709 : vector<8x1xf32> to vector<8x128xf32>
    %717 = vector.broadcast %715 : vector<1x128xf32> to vector<8x128xf32>
    %718 = arith.subf %716, %717 : vector<8x128xf32>
    %719 = arith.minimumf %708, %718 : vector<8x128xf32>
    %c0_330 = arith.constant 0 : index
    %c65 = arith.constant 65 : index
    %720 = vector.load %arg2[%c0_330, %c65] : memref<8x128xf32, #tpu.memory_space<vmem>>, vector<8x1xf32>
    %c65_331 = arith.constant 65 : index
    %c0_332 = arith.constant 0 : index
    %721 = vector.load %arg3[%c65_331, %c0_332] : memref<128x128xf32, #tpu.memory_space<vmem>>, vector<1x128xf32>
    %722 = vector.broadcast %720 : vector<8x1xf32> to vector<8x128xf32>
    %723 = vector.broadcast %721 : vector<1x128xf32> to vector<8x128xf32>
    %724 = arith.addf %722, %723 : vector<8x128xf32>
    %725 = arith.maximumf %714, %724 : vector<8x128xf32>
    %c65_333 = arith.constant 65 : index
    %c0_334 = arith.constant 0 : index
    %726 = vector.load %arg4[%c65_333, %c0_334] : memref<128x128xf32, #tpu.memory_space<vmem>>, vector<1x128xf32>
    %727 = vector.broadcast %720 : vector<8x1xf32> to vector<8x128xf32>
    %728 = vector.broadcast %726 : vector<1x128xf32> to vector<8x128xf32>
    %729 = arith.subf %727, %728 : vector<8x128xf32>
    %730 = arith.minimumf %719, %729 : vector<8x128xf32>
    %c0_335 = arith.constant 0 : index
    %c66 = arith.constant 66 : index
    %731 = vector.load %arg2[%c0_335, %c66] : memref<8x128xf32, #tpu.memory_space<vmem>>, vector<8x1xf32>
    %c66_336 = arith.constant 66 : index
    %c0_337 = arith.constant 0 : index
    %732 = vector.load %arg3[%c66_336, %c0_337] : memref<128x128xf32, #tpu.memory_space<vmem>>, vector<1x128xf32>
    %733 = vector.broadcast %731 : vector<8x1xf32> to vector<8x128xf32>
    %734 = vector.broadcast %732 : vector<1x128xf32> to vector<8x128xf32>
    %735 = arith.addf %733, %734 : vector<8x128xf32>
    %736 = arith.maximumf %725, %735 : vector<8x128xf32>
    %c66_338 = arith.constant 66 : index
    %c0_339 = arith.constant 0 : index
    %737 = vector.load %arg4[%c66_338, %c0_339] : memref<128x128xf32, #tpu.memory_space<vmem>>, vector<1x128xf32>
    %738 = vector.broadcast %731 : vector<8x1xf32> to vector<8x128xf32>
    %739 = vector.broadcast %737 : vector<1x128xf32> to vector<8x128xf32>
    %740 = arith.subf %738, %739 : vector<8x128xf32>
    %741 = arith.minimumf %730, %740 : vector<8x128xf32>
    %c0_340 = arith.constant 0 : index
    %c67 = arith.constant 67 : index
    %742 = vector.load %arg2[%c0_340, %c67] : memref<8x128xf32, #tpu.memory_space<vmem>>, vector<8x1xf32>
    %c67_341 = arith.constant 67 : index
    %c0_342 = arith.constant 0 : index
    %743 = vector.load %arg3[%c67_341, %c0_342] : memref<128x128xf32, #tpu.memory_space<vmem>>, vector<1x128xf32>
    %744 = vector.broadcast %742 : vector<8x1xf32> to vector<8x128xf32>
    %745 = vector.broadcast %743 : vector<1x128xf32> to vector<8x128xf32>
    %746 = arith.addf %744, %745 : vector<8x128xf32>
    %747 = arith.maximumf %736, %746 : vector<8x128xf32>
    %c67_343 = arith.constant 67 : index
    %c0_344 = arith.constant 0 : index
    %748 = vector.load %arg4[%c67_343, %c0_344] : memref<128x128xf32, #tpu.memory_space<vmem>>, vector<1x128xf32>
    %749 = vector.broadcast %742 : vector<8x1xf32> to vector<8x128xf32>
    %750 = vector.broadcast %748 : vector<1x128xf32> to vector<8x128xf32>
    %751 = arith.subf %749, %750 : vector<8x128xf32>
    %752 = arith.minimumf %741, %751 : vector<8x128xf32>
    %c0_345 = arith.constant 0 : index
    %c68 = arith.constant 68 : index
    %753 = vector.load %arg2[%c0_345, %c68] : memref<8x128xf32, #tpu.memory_space<vmem>>, vector<8x1xf32>
    %c68_346 = arith.constant 68 : index
    %c0_347 = arith.constant 0 : index
    %754 = vector.load %arg3[%c68_346, %c0_347] : memref<128x128xf32, #tpu.memory_space<vmem>>, vector<1x128xf32>
    %755 = vector.broadcast %753 : vector<8x1xf32> to vector<8x128xf32>
    %756 = vector.broadcast %754 : vector<1x128xf32> to vector<8x128xf32>
    %757 = arith.addf %755, %756 : vector<8x128xf32>
    %758 = arith.maximumf %747, %757 : vector<8x128xf32>
    %c68_348 = arith.constant 68 : index
    %c0_349 = arith.constant 0 : index
    %759 = vector.load %arg4[%c68_348, %c0_349] : memref<128x128xf32, #tpu.memory_space<vmem>>, vector<1x128xf32>
    %760 = vector.broadcast %753 : vector<8x1xf32> to vector<8x128xf32>
    %761 = vector.broadcast %759 : vector<1x128xf32> to vector<8x128xf32>
    %762 = arith.subf %760, %761 : vector<8x128xf32>
    %763 = arith.minimumf %752, %762 : vector<8x128xf32>
    %c0_350 = arith.constant 0 : index
    %c69 = arith.constant 69 : index
    %764 = vector.load %arg2[%c0_350, %c69] : memref<8x128xf32, #tpu.memory_space<vmem>>, vector<8x1xf32>
    %c69_351 = arith.constant 69 : index
    %c0_352 = arith.constant 0 : index
    %765 = vector.load %arg3[%c69_351, %c0_352] : memref<128x128xf32, #tpu.memory_space<vmem>>, vector<1x128xf32>
    %766 = vector.broadcast %764 : vector<8x1xf32> to vector<8x128xf32>
    %767 = vector.broadcast %765 : vector<1x128xf32> to vector<8x128xf32>
    %768 = arith.addf %766, %767 : vector<8x128xf32>
    %769 = arith.maximumf %758, %768 : vector<8x128xf32>
    %c69_353 = arith.constant 69 : index
    %c0_354 = arith.constant 0 : index
    %770 = vector.load %arg4[%c69_353, %c0_354] : memref<128x128xf32, #tpu.memory_space<vmem>>, vector<1x128xf32>
    %771 = vector.broadcast %764 : vector<8x1xf32> to vector<8x128xf32>
    %772 = vector.broadcast %770 : vector<1x128xf32> to vector<8x128xf32>
    %773 = arith.subf %771, %772 : vector<8x128xf32>
    %774 = arith.minimumf %763, %773 : vector<8x128xf32>
    %c0_355 = arith.constant 0 : index
    %c70 = arith.constant 70 : index
    %775 = vector.load %arg2[%c0_355, %c70] : memref<8x128xf32, #tpu.memory_space<vmem>>, vector<8x1xf32>
    %c70_356 = arith.constant 70 : index
    %c0_357 = arith.constant 0 : index
    %776 = vector.load %arg3[%c70_356, %c0_357] : memref<128x128xf32, #tpu.memory_space<vmem>>, vector<1x128xf32>
    %777 = vector.broadcast %775 : vector<8x1xf32> to vector<8x128xf32>
    %778 = vector.broadcast %776 : vector<1x128xf32> to vector<8x128xf32>
    %779 = arith.addf %777, %778 : vector<8x128xf32>
    %780 = arith.maximumf %769, %779 : vector<8x128xf32>
    %c70_358 = arith.constant 70 : index
    %c0_359 = arith.constant 0 : index
    %781 = vector.load %arg4[%c70_358, %c0_359] : memref<128x128xf32, #tpu.memory_space<vmem>>, vector<1x128xf32>
    %782 = vector.broadcast %775 : vector<8x1xf32> to vector<8x128xf32>
    %783 = vector.broadcast %781 : vector<1x128xf32> to vector<8x128xf32>
    %784 = arith.subf %782, %783 : vector<8x128xf32>
    %785 = arith.minimumf %774, %784 : vector<8x128xf32>
    %c0_360 = arith.constant 0 : index
    %c71 = arith.constant 71 : index
    %786 = vector.load %arg2[%c0_360, %c71] : memref<8x128xf32, #tpu.memory_space<vmem>>, vector<8x1xf32>
    %c71_361 = arith.constant 71 : index
    %c0_362 = arith.constant 0 : index
    %787 = vector.load %arg3[%c71_361, %c0_362] : memref<128x128xf32, #tpu.memory_space<vmem>>, vector<1x128xf32>
    %788 = vector.broadcast %786 : vector<8x1xf32> to vector<8x128xf32>
    %789 = vector.broadcast %787 : vector<1x128xf32> to vector<8x128xf32>
    %790 = arith.addf %788, %789 : vector<8x128xf32>
    %791 = arith.maximumf %780, %790 : vector<8x128xf32>
    %c71_363 = arith.constant 71 : index
    %c0_364 = arith.constant 0 : index
    %792 = vector.load %arg4[%c71_363, %c0_364] : memref<128x128xf32, #tpu.memory_space<vmem>>, vector<1x128xf32>
    %793 = vector.broadcast %786 : vector<8x1xf32> to vector<8x128xf32>
    %794 = vector.broadcast %792 : vector<1x128xf32> to vector<8x128xf32>
    %795 = arith.subf %793, %794 : vector<8x128xf32>
    %796 = arith.minimumf %785, %795 : vector<8x128xf32>
    %c0_365 = arith.constant 0 : index
    %c72 = arith.constant 72 : index
    %797 = vector.load %arg2[%c0_365, %c72] : memref<8x128xf32, #tpu.memory_space<vmem>>, vector<8x1xf32>
    %c72_366 = arith.constant 72 : index
    %c0_367 = arith.constant 0 : index
    %798 = vector.load %arg3[%c72_366, %c0_367] : memref<128x128xf32, #tpu.memory_space<vmem>>, vector<1x128xf32>
    %799 = vector.broadcast %797 : vector<8x1xf32> to vector<8x128xf32>
    %800 = vector.broadcast %798 : vector<1x128xf32> to vector<8x128xf32>
    %801 = arith.addf %799, %800 : vector<8x128xf32>
    %802 = arith.maximumf %791, %801 : vector<8x128xf32>
    %c72_368 = arith.constant 72 : index
    %c0_369 = arith.constant 0 : index
    %803 = vector.load %arg4[%c72_368, %c0_369] : memref<128x128xf32, #tpu.memory_space<vmem>>, vector<1x128xf32>
    %804 = vector.broadcast %797 : vector<8x1xf32> to vector<8x128xf32>
    %805 = vector.broadcast %803 : vector<1x128xf32> to vector<8x128xf32>
    %806 = arith.subf %804, %805 : vector<8x128xf32>
    %807 = arith.minimumf %796, %806 : vector<8x128xf32>
    %c0_370 = arith.constant 0 : index
    %c73 = arith.constant 73 : index
    %808 = vector.load %arg2[%c0_370, %c73] : memref<8x128xf32, #tpu.memory_space<vmem>>, vector<8x1xf32>
    %c73_371 = arith.constant 73 : index
    %c0_372 = arith.constant 0 : index
    %809 = vector.load %arg3[%c73_371, %c0_372] : memref<128x128xf32, #tpu.memory_space<vmem>>, vector<1x128xf32>
    %810 = vector.broadcast %808 : vector<8x1xf32> to vector<8x128xf32>
    %811 = vector.broadcast %809 : vector<1x128xf32> to vector<8x128xf32>
    %812 = arith.addf %810, %811 : vector<8x128xf32>
    %813 = arith.maximumf %802, %812 : vector<8x128xf32>
    %c73_373 = arith.constant 73 : index
    %c0_374 = arith.constant 0 : index
    %814 = vector.load %arg4[%c73_373, %c0_374] : memref<128x128xf32, #tpu.memory_space<vmem>>, vector<1x128xf32>
    %815 = vector.broadcast %808 : vector<8x1xf32> to vector<8x128xf32>
    %816 = vector.broadcast %814 : vector<1x128xf32> to vector<8x128xf32>
    %817 = arith.subf %815, %816 : vector<8x128xf32>
    %818 = arith.minimumf %807, %817 : vector<8x128xf32>
    %c0_375 = arith.constant 0 : index
    %c74 = arith.constant 74 : index
    %819 = vector.load %arg2[%c0_375, %c74] : memref<8x128xf32, #tpu.memory_space<vmem>>, vector<8x1xf32>
    %c74_376 = arith.constant 74 : index
    %c0_377 = arith.constant 0 : index
    %820 = vector.load %arg3[%c74_376, %c0_377] : memref<128x128xf32, #tpu.memory_space<vmem>>, vector<1x128xf32>
    %821 = vector.broadcast %819 : vector<8x1xf32> to vector<8x128xf32>
    %822 = vector.broadcast %820 : vector<1x128xf32> to vector<8x128xf32>
    %823 = arith.addf %821, %822 : vector<8x128xf32>
    %824 = arith.maximumf %813, %823 : vector<8x128xf32>
    %c74_378 = arith.constant 74 : index
    %c0_379 = arith.constant 0 : index
    %825 = vector.load %arg4[%c74_378, %c0_379] : memref<128x128xf32, #tpu.memory_space<vmem>>, vector<1x128xf32>
    %826 = vector.broadcast %819 : vector<8x1xf32> to vector<8x128xf32>
    %827 = vector.broadcast %825 : vector<1x128xf32> to vector<8x128xf32>
    %828 = arith.subf %826, %827 : vector<8x128xf32>
    %829 = arith.minimumf %818, %828 : vector<8x128xf32>
    %c0_380 = arith.constant 0 : index
    %c75 = arith.constant 75 : index
    %830 = vector.load %arg2[%c0_380, %c75] : memref<8x128xf32, #tpu.memory_space<vmem>>, vector<8x1xf32>
    %c75_381 = arith.constant 75 : index
    %c0_382 = arith.constant 0 : index
    %831 = vector.load %arg3[%c75_381, %c0_382] : memref<128x128xf32, #tpu.memory_space<vmem>>, vector<1x128xf32>
    %832 = vector.broadcast %830 : vector<8x1xf32> to vector<8x128xf32>
    %833 = vector.broadcast %831 : vector<1x128xf32> to vector<8x128xf32>
    %834 = arith.addf %832, %833 : vector<8x128xf32>
    %835 = arith.maximumf %824, %834 : vector<8x128xf32>
    %c75_383 = arith.constant 75 : index
    %c0_384 = arith.constant 0 : index
    %836 = vector.load %arg4[%c75_383, %c0_384] : memref<128x128xf32, #tpu.memory_space<vmem>>, vector<1x128xf32>
    %837 = vector.broadcast %830 : vector<8x1xf32> to vector<8x128xf32>
    %838 = vector.broadcast %836 : vector<1x128xf32> to vector<8x128xf32>
    %839 = arith.subf %837, %838 : vector<8x128xf32>
    %840 = arith.minimumf %829, %839 : vector<8x128xf32>
    %c0_385 = arith.constant 0 : index
    %c76 = arith.constant 76 : index
    %841 = vector.load %arg2[%c0_385, %c76] : memref<8x128xf32, #tpu.memory_space<vmem>>, vector<8x1xf32>
    %c76_386 = arith.constant 76 : index
    %c0_387 = arith.constant 0 : index
    %842 = vector.load %arg3[%c76_386, %c0_387] : memref<128x128xf32, #tpu.memory_space<vmem>>, vector<1x128xf32>
    %843 = vector.broadcast %841 : vector<8x1xf32> to vector<8x128xf32>
    %844 = vector.broadcast %842 : vector<1x128xf32> to vector<8x128xf32>
    %845 = arith.addf %843, %844 : vector<8x128xf32>
    %846 = arith.maximumf %835, %845 : vector<8x128xf32>
    %c76_388 = arith.constant 76 : index
    %c0_389 = arith.constant 0 : index
    %847 = vector.load %arg4[%c76_388, %c0_389] : memref<128x128xf32, #tpu.memory_space<vmem>>, vector<1x128xf32>
    %848 = vector.broadcast %841 : vector<8x1xf32> to vector<8x128xf32>
    %849 = vector.broadcast %847 : vector<1x128xf32> to vector<8x128xf32>
    %850 = arith.subf %848, %849 : vector<8x128xf32>
    %851 = arith.minimumf %840, %850 : vector<8x128xf32>
    %c0_390 = arith.constant 0 : index
    %c77 = arith.constant 77 : index
    %852 = vector.load %arg2[%c0_390, %c77] : memref<8x128xf32, #tpu.memory_space<vmem>>, vector<8x1xf32>
    %c77_391 = arith.constant 77 : index
    %c0_392 = arith.constant 0 : index
    %853 = vector.load %arg3[%c77_391, %c0_392] : memref<128x128xf32, #tpu.memory_space<vmem>>, vector<1x128xf32>
    %854 = vector.broadcast %852 : vector<8x1xf32> to vector<8x128xf32>
    %855 = vector.broadcast %853 : vector<1x128xf32> to vector<8x128xf32>
    %856 = arith.addf %854, %855 : vector<8x128xf32>
    %857 = arith.maximumf %846, %856 : vector<8x128xf32>
    %c77_393 = arith.constant 77 : index
    %c0_394 = arith.constant 0 : index
    %858 = vector.load %arg4[%c77_393, %c0_394] : memref<128x128xf32, #tpu.memory_space<vmem>>, vector<1x128xf32>
    %859 = vector.broadcast %852 : vector<8x1xf32> to vector<8x128xf32>
    %860 = vector.broadcast %858 : vector<1x128xf32> to vector<8x128xf32>
    %861 = arith.subf %859, %860 : vector<8x128xf32>
    %862 = arith.minimumf %851, %861 : vector<8x128xf32>
    %c0_395 = arith.constant 0 : index
    %c78 = arith.constant 78 : index
    %863 = vector.load %arg2[%c0_395, %c78] : memref<8x128xf32, #tpu.memory_space<vmem>>, vector<8x1xf32>
    %c78_396 = arith.constant 78 : index
    %c0_397 = arith.constant 0 : index
    %864 = vector.load %arg3[%c78_396, %c0_397] : memref<128x128xf32, #tpu.memory_space<vmem>>, vector<1x128xf32>
    %865 = vector.broadcast %863 : vector<8x1xf32> to vector<8x128xf32>
    %866 = vector.broadcast %864 : vector<1x128xf32> to vector<8x128xf32>
    %867 = arith.addf %865, %866 : vector<8x128xf32>
    %868 = arith.maximumf %857, %867 : vector<8x128xf32>
    %c78_398 = arith.constant 78 : index
    %c0_399 = arith.constant 0 : index
    %869 = vector.load %arg4[%c78_398, %c0_399] : memref<128x128xf32, #tpu.memory_space<vmem>>, vector<1x128xf32>
    %870 = vector.broadcast %863 : vector<8x1xf32> to vector<8x128xf32>
    %871 = vector.broadcast %869 : vector<1x128xf32> to vector<8x128xf32>
    %872 = arith.subf %870, %871 : vector<8x128xf32>
    %873 = arith.minimumf %862, %872 : vector<8x128xf32>
    %c0_400 = arith.constant 0 : index
    %c79 = arith.constant 79 : index
    %874 = vector.load %arg2[%c0_400, %c79] : memref<8x128xf32, #tpu.memory_space<vmem>>, vector<8x1xf32>
    %c79_401 = arith.constant 79 : index
    %c0_402 = arith.constant 0 : index
    %875 = vector.load %arg3[%c79_401, %c0_402] : memref<128x128xf32, #tpu.memory_space<vmem>>, vector<1x128xf32>
    %876 = vector.broadcast %874 : vector<8x1xf32> to vector<8x128xf32>
    %877 = vector.broadcast %875 : vector<1x128xf32> to vector<8x128xf32>
    %878 = arith.addf %876, %877 : vector<8x128xf32>
    %879 = arith.maximumf %868, %878 : vector<8x128xf32>
    %c79_403 = arith.constant 79 : index
    %c0_404 = arith.constant 0 : index
    %880 = vector.load %arg4[%c79_403, %c0_404] : memref<128x128xf32, #tpu.memory_space<vmem>>, vector<1x128xf32>
    %881 = vector.broadcast %874 : vector<8x1xf32> to vector<8x128xf32>
    %882 = vector.broadcast %880 : vector<1x128xf32> to vector<8x128xf32>
    %883 = arith.subf %881, %882 : vector<8x128xf32>
    %884 = arith.minimumf %873, %883 : vector<8x128xf32>
    %c0_405 = arith.constant 0 : index
    %c80 = arith.constant 80 : index
    %885 = vector.load %arg2[%c0_405, %c80] : memref<8x128xf32, #tpu.memory_space<vmem>>, vector<8x1xf32>
    %c80_406 = arith.constant 80 : index
    %c0_407 = arith.constant 0 : index
    %886 = vector.load %arg3[%c80_406, %c0_407] : memref<128x128xf32, #tpu.memory_space<vmem>>, vector<1x128xf32>
    %887 = vector.broadcast %885 : vector<8x1xf32> to vector<8x128xf32>
    %888 = vector.broadcast %886 : vector<1x128xf32> to vector<8x128xf32>
    %889 = arith.addf %887, %888 : vector<8x128xf32>
    %890 = arith.maximumf %879, %889 : vector<8x128xf32>
    %c80_408 = arith.constant 80 : index
    %c0_409 = arith.constant 0 : index
    %891 = vector.load %arg4[%c80_408, %c0_409] : memref<128x128xf32, #tpu.memory_space<vmem>>, vector<1x128xf32>
    %892 = vector.broadcast %885 : vector<8x1xf32> to vector<8x128xf32>
    %893 = vector.broadcast %891 : vector<1x128xf32> to vector<8x128xf32>
    %894 = arith.subf %892, %893 : vector<8x128xf32>
    %895 = arith.minimumf %884, %894 : vector<8x128xf32>
    %c0_410 = arith.constant 0 : index
    %c81 = arith.constant 81 : index
    %896 = vector.load %arg2[%c0_410, %c81] : memref<8x128xf32, #tpu.memory_space<vmem>>, vector<8x1xf32>
    %c81_411 = arith.constant 81 : index
    %c0_412 = arith.constant 0 : index
    %897 = vector.load %arg3[%c81_411, %c0_412] : memref<128x128xf32, #tpu.memory_space<vmem>>, vector<1x128xf32>
    %898 = vector.broadcast %896 : vector<8x1xf32> to vector<8x128xf32>
    %899 = vector.broadcast %897 : vector<1x128xf32> to vector<8x128xf32>
    %900 = arith.addf %898, %899 : vector<8x128xf32>
    %901 = arith.maximumf %890, %900 : vector<8x128xf32>
    %c81_413 = arith.constant 81 : index
    %c0_414 = arith.constant 0 : index
    %902 = vector.load %arg4[%c81_413, %c0_414] : memref<128x128xf32, #tpu.memory_space<vmem>>, vector<1x128xf32>
    %903 = vector.broadcast %896 : vector<8x1xf32> to vector<8x128xf32>
    %904 = vector.broadcast %902 : vector<1x128xf32> to vector<8x128xf32>
    %905 = arith.subf %903, %904 : vector<8x128xf32>
    %906 = arith.minimumf %895, %905 : vector<8x128xf32>
    %c0_415 = arith.constant 0 : index
    %c82 = arith.constant 82 : index
    %907 = vector.load %arg2[%c0_415, %c82] : memref<8x128xf32, #tpu.memory_space<vmem>>, vector<8x1xf32>
    %c82_416 = arith.constant 82 : index
    %c0_417 = arith.constant 0 : index
    %908 = vector.load %arg3[%c82_416, %c0_417] : memref<128x128xf32, #tpu.memory_space<vmem>>, vector<1x128xf32>
    %909 = vector.broadcast %907 : vector<8x1xf32> to vector<8x128xf32>
    %910 = vector.broadcast %908 : vector<1x128xf32> to vector<8x128xf32>
    %911 = arith.addf %909, %910 : vector<8x128xf32>
    %912 = arith.maximumf %901, %911 : vector<8x128xf32>
    %c82_418 = arith.constant 82 : index
    %c0_419 = arith.constant 0 : index
    %913 = vector.load %arg4[%c82_418, %c0_419] : memref<128x128xf32, #tpu.memory_space<vmem>>, vector<1x128xf32>
    %914 = vector.broadcast %907 : vector<8x1xf32> to vector<8x128xf32>
    %915 = vector.broadcast %913 : vector<1x128xf32> to vector<8x128xf32>
    %916 = arith.subf %914, %915 : vector<8x128xf32>
    %917 = arith.minimumf %906, %916 : vector<8x128xf32>
    %c0_420 = arith.constant 0 : index
    %c83 = arith.constant 83 : index
    %918 = vector.load %arg2[%c0_420, %c83] : memref<8x128xf32, #tpu.memory_space<vmem>>, vector<8x1xf32>
    %c83_421 = arith.constant 83 : index
    %c0_422 = arith.constant 0 : index
    %919 = vector.load %arg3[%c83_421, %c0_422] : memref<128x128xf32, #tpu.memory_space<vmem>>, vector<1x128xf32>
    %920 = vector.broadcast %918 : vector<8x1xf32> to vector<8x128xf32>
    %921 = vector.broadcast %919 : vector<1x128xf32> to vector<8x128xf32>
    %922 = arith.addf %920, %921 : vector<8x128xf32>
    %923 = arith.maximumf %912, %922 : vector<8x128xf32>
    %c83_423 = arith.constant 83 : index
    %c0_424 = arith.constant 0 : index
    %924 = vector.load %arg4[%c83_423, %c0_424] : memref<128x128xf32, #tpu.memory_space<vmem>>, vector<1x128xf32>
    %925 = vector.broadcast %918 : vector<8x1xf32> to vector<8x128xf32>
    %926 = vector.broadcast %924 : vector<1x128xf32> to vector<8x128xf32>
    %927 = arith.subf %925, %926 : vector<8x128xf32>
    %928 = arith.minimumf %917, %927 : vector<8x128xf32>
    %c0_425 = arith.constant 0 : index
    %c84 = arith.constant 84 : index
    %929 = vector.load %arg2[%c0_425, %c84] : memref<8x128xf32, #tpu.memory_space<vmem>>, vector<8x1xf32>
    %c84_426 = arith.constant 84 : index
    %c0_427 = arith.constant 0 : index
    %930 = vector.load %arg3[%c84_426, %c0_427] : memref<128x128xf32, #tpu.memory_space<vmem>>, vector<1x128xf32>
    %931 = vector.broadcast %929 : vector<8x1xf32> to vector<8x128xf32>
    %932 = vector.broadcast %930 : vector<1x128xf32> to vector<8x128xf32>
    %933 = arith.addf %931, %932 : vector<8x128xf32>
    %934 = arith.maximumf %923, %933 : vector<8x128xf32>
    %c84_428 = arith.constant 84 : index
    %c0_429 = arith.constant 0 : index
    %935 = vector.load %arg4[%c84_428, %c0_429] : memref<128x128xf32, #tpu.memory_space<vmem>>, vector<1x128xf32>
    %936 = vector.broadcast %929 : vector<8x1xf32> to vector<8x128xf32>
    %937 = vector.broadcast %935 : vector<1x128xf32> to vector<8x128xf32>
    %938 = arith.subf %936, %937 : vector<8x128xf32>
    %939 = arith.minimumf %928, %938 : vector<8x128xf32>
    %c0_430 = arith.constant 0 : index
    %c85 = arith.constant 85 : index
    %940 = vector.load %arg2[%c0_430, %c85] : memref<8x128xf32, #tpu.memory_space<vmem>>, vector<8x1xf32>
    %c85_431 = arith.constant 85 : index
    %c0_432 = arith.constant 0 : index
    %941 = vector.load %arg3[%c85_431, %c0_432] : memref<128x128xf32, #tpu.memory_space<vmem>>, vector<1x128xf32>
    %942 = vector.broadcast %940 : vector<8x1xf32> to vector<8x128xf32>
    %943 = vector.broadcast %941 : vector<1x128xf32> to vector<8x128xf32>
    %944 = arith.addf %942, %943 : vector<8x128xf32>
    %945 = arith.maximumf %934, %944 : vector<8x128xf32>
    %c85_433 = arith.constant 85 : index
    %c0_434 = arith.constant 0 : index
    %946 = vector.load %arg4[%c85_433, %c0_434] : memref<128x128xf32, #tpu.memory_space<vmem>>, vector<1x128xf32>
    %947 = vector.broadcast %940 : vector<8x1xf32> to vector<8x128xf32>
    %948 = vector.broadcast %946 : vector<1x128xf32> to vector<8x128xf32>
    %949 = arith.subf %947, %948 : vector<8x128xf32>
    %950 = arith.minimumf %939, %949 : vector<8x128xf32>
    %c0_435 = arith.constant 0 : index
    %c86 = arith.constant 86 : index
    %951 = vector.load %arg2[%c0_435, %c86] : memref<8x128xf32, #tpu.memory_space<vmem>>, vector<8x1xf32>
    %c86_436 = arith.constant 86 : index
    %c0_437 = arith.constant 0 : index
    %952 = vector.load %arg3[%c86_436, %c0_437] : memref<128x128xf32, #tpu.memory_space<vmem>>, vector<1x128xf32>
    %953 = vector.broadcast %951 : vector<8x1xf32> to vector<8x128xf32>
    %954 = vector.broadcast %952 : vector<1x128xf32> to vector<8x128xf32>
    %955 = arith.addf %953, %954 : vector<8x128xf32>
    %956 = arith.maximumf %945, %955 : vector<8x128xf32>
    %c86_438 = arith.constant 86 : index
    %c0_439 = arith.constant 0 : index
    %957 = vector.load %arg4[%c86_438, %c0_439] : memref<128x128xf32, #tpu.memory_space<vmem>>, vector<1x128xf32>
    %958 = vector.broadcast %951 : vector<8x1xf32> to vector<8x128xf32>
    %959 = vector.broadcast %957 : vector<1x128xf32> to vector<8x128xf32>
    %960 = arith.subf %958, %959 : vector<8x128xf32>
    %961 = arith.minimumf %950, %960 : vector<8x128xf32>
    %c0_440 = arith.constant 0 : index
    %c87 = arith.constant 87 : index
    %962 = vector.load %arg2[%c0_440, %c87] : memref<8x128xf32, #tpu.memory_space<vmem>>, vector<8x1xf32>
    %c87_441 = arith.constant 87 : index
    %c0_442 = arith.constant 0 : index
    %963 = vector.load %arg3[%c87_441, %c0_442] : memref<128x128xf32, #tpu.memory_space<vmem>>, vector<1x128xf32>
    %964 = vector.broadcast %962 : vector<8x1xf32> to vector<8x128xf32>
    %965 = vector.broadcast %963 : vector<1x128xf32> to vector<8x128xf32>
    %966 = arith.addf %964, %965 : vector<8x128xf32>
    %967 = arith.maximumf %956, %966 : vector<8x128xf32>
    %c87_443 = arith.constant 87 : index
    %c0_444 = arith.constant 0 : index
    %968 = vector.load %arg4[%c87_443, %c0_444] : memref<128x128xf32, #tpu.memory_space<vmem>>, vector<1x128xf32>
    %969 = vector.broadcast %962 : vector<8x1xf32> to vector<8x128xf32>
    %970 = vector.broadcast %968 : vector<1x128xf32> to vector<8x128xf32>
    %971 = arith.subf %969, %970 : vector<8x128xf32>
    %972 = arith.minimumf %961, %971 : vector<8x128xf32>
    %c0_445 = arith.constant 0 : index
    %c88 = arith.constant 88 : index
    %973 = vector.load %arg2[%c0_445, %c88] : memref<8x128xf32, #tpu.memory_space<vmem>>, vector<8x1xf32>
    %c88_446 = arith.constant 88 : index
    %c0_447 = arith.constant 0 : index
    %974 = vector.load %arg3[%c88_446, %c0_447] : memref<128x128xf32, #tpu.memory_space<vmem>>, vector<1x128xf32>
    %975 = vector.broadcast %973 : vector<8x1xf32> to vector<8x128xf32>
    %976 = vector.broadcast %974 : vector<1x128xf32> to vector<8x128xf32>
    %977 = arith.addf %975, %976 : vector<8x128xf32>
    %978 = arith.maximumf %967, %977 : vector<8x128xf32>
    %c88_448 = arith.constant 88 : index
    %c0_449 = arith.constant 0 : index
    %979 = vector.load %arg4[%c88_448, %c0_449] : memref<128x128xf32, #tpu.memory_space<vmem>>, vector<1x128xf32>
    %980 = vector.broadcast %973 : vector<8x1xf32> to vector<8x128xf32>
    %981 = vector.broadcast %979 : vector<1x128xf32> to vector<8x128xf32>
    %982 = arith.subf %980, %981 : vector<8x128xf32>
    %983 = arith.minimumf %972, %982 : vector<8x128xf32>
    %c0_450 = arith.constant 0 : index
    %c89 = arith.constant 89 : index
    %984 = vector.load %arg2[%c0_450, %c89] : memref<8x128xf32, #tpu.memory_space<vmem>>, vector<8x1xf32>
    %c89_451 = arith.constant 89 : index
    %c0_452 = arith.constant 0 : index
    %985 = vector.load %arg3[%c89_451, %c0_452] : memref<128x128xf32, #tpu.memory_space<vmem>>, vector<1x128xf32>
    %986 = vector.broadcast %984 : vector<8x1xf32> to vector<8x128xf32>
    %987 = vector.broadcast %985 : vector<1x128xf32> to vector<8x128xf32>
    %988 = arith.addf %986, %987 : vector<8x128xf32>
    %989 = arith.maximumf %978, %988 : vector<8x128xf32>
    %c89_453 = arith.constant 89 : index
    %c0_454 = arith.constant 0 : index
    %990 = vector.load %arg4[%c89_453, %c0_454] : memref<128x128xf32, #tpu.memory_space<vmem>>, vector<1x128xf32>
    %991 = vector.broadcast %984 : vector<8x1xf32> to vector<8x128xf32>
    %992 = vector.broadcast %990 : vector<1x128xf32> to vector<8x128xf32>
    %993 = arith.subf %991, %992 : vector<8x128xf32>
    %994 = arith.minimumf %983, %993 : vector<8x128xf32>
    %c0_455 = arith.constant 0 : index
    %c90 = arith.constant 90 : index
    %995 = vector.load %arg2[%c0_455, %c90] : memref<8x128xf32, #tpu.memory_space<vmem>>, vector<8x1xf32>
    %c90_456 = arith.constant 90 : index
    %c0_457 = arith.constant 0 : index
    %996 = vector.load %arg3[%c90_456, %c0_457] : memref<128x128xf32, #tpu.memory_space<vmem>>, vector<1x128xf32>
    %997 = vector.broadcast %995 : vector<8x1xf32> to vector<8x128xf32>
    %998 = vector.broadcast %996 : vector<1x128xf32> to vector<8x128xf32>
    %999 = arith.addf %997, %998 : vector<8x128xf32>
    %1000 = arith.maximumf %989, %999 : vector<8x128xf32>
    %c90_458 = arith.constant 90 : index
    %c0_459 = arith.constant 0 : index
    %1001 = vector.load %arg4[%c90_458, %c0_459] : memref<128x128xf32, #tpu.memory_space<vmem>>, vector<1x128xf32>
    %1002 = vector.broadcast %995 : vector<8x1xf32> to vector<8x128xf32>
    %1003 = vector.broadcast %1001 : vector<1x128xf32> to vector<8x128xf32>
    %1004 = arith.subf %1002, %1003 : vector<8x128xf32>
    %1005 = arith.minimumf %994, %1004 : vector<8x128xf32>
    %c0_460 = arith.constant 0 : index
    %c91 = arith.constant 91 : index
    %1006 = vector.load %arg2[%c0_460, %c91] : memref<8x128xf32, #tpu.memory_space<vmem>>, vector<8x1xf32>
    %c91_461 = arith.constant 91 : index
    %c0_462 = arith.constant 0 : index
    %1007 = vector.load %arg3[%c91_461, %c0_462] : memref<128x128xf32, #tpu.memory_space<vmem>>, vector<1x128xf32>
    %1008 = vector.broadcast %1006 : vector<8x1xf32> to vector<8x128xf32>
    %1009 = vector.broadcast %1007 : vector<1x128xf32> to vector<8x128xf32>
    %1010 = arith.addf %1008, %1009 : vector<8x128xf32>
    %1011 = arith.maximumf %1000, %1010 : vector<8x128xf32>
    %c91_463 = arith.constant 91 : index
    %c0_464 = arith.constant 0 : index
    %1012 = vector.load %arg4[%c91_463, %c0_464] : memref<128x128xf32, #tpu.memory_space<vmem>>, vector<1x128xf32>
    %1013 = vector.broadcast %1006 : vector<8x1xf32> to vector<8x128xf32>
    %1014 = vector.broadcast %1012 : vector<1x128xf32> to vector<8x128xf32>
    %1015 = arith.subf %1013, %1014 : vector<8x128xf32>
    %1016 = arith.minimumf %1005, %1015 : vector<8x128xf32>
    %c0_465 = arith.constant 0 : index
    %c92 = arith.constant 92 : index
    %1017 = vector.load %arg2[%c0_465, %c92] : memref<8x128xf32, #tpu.memory_space<vmem>>, vector<8x1xf32>
    %c92_466 = arith.constant 92 : index
    %c0_467 = arith.constant 0 : index
    %1018 = vector.load %arg3[%c92_466, %c0_467] : memref<128x128xf32, #tpu.memory_space<vmem>>, vector<1x128xf32>
    %1019 = vector.broadcast %1017 : vector<8x1xf32> to vector<8x128xf32>
    %1020 = vector.broadcast %1018 : vector<1x128xf32> to vector<8x128xf32>
    %1021 = arith.addf %1019, %1020 : vector<8x128xf32>
    %1022 = arith.maximumf %1011, %1021 : vector<8x128xf32>
    %c92_468 = arith.constant 92 : index
    %c0_469 = arith.constant 0 : index
    %1023 = vector.load %arg4[%c92_468, %c0_469] : memref<128x128xf32, #tpu.memory_space<vmem>>, vector<1x128xf32>
    %1024 = vector.broadcast %1017 : vector<8x1xf32> to vector<8x128xf32>
    %1025 = vector.broadcast %1023 : vector<1x128xf32> to vector<8x128xf32>
    %1026 = arith.subf %1024, %1025 : vector<8x128xf32>
    %1027 = arith.minimumf %1016, %1026 : vector<8x128xf32>
    %c0_470 = arith.constant 0 : index
    %c93 = arith.constant 93 : index
    %1028 = vector.load %arg2[%c0_470, %c93] : memref<8x128xf32, #tpu.memory_space<vmem>>, vector<8x1xf32>
    %c93_471 = arith.constant 93 : index
    %c0_472 = arith.constant 0 : index
    %1029 = vector.load %arg3[%c93_471, %c0_472] : memref<128x128xf32, #tpu.memory_space<vmem>>, vector<1x128xf32>
    %1030 = vector.broadcast %1028 : vector<8x1xf32> to vector<8x128xf32>
    %1031 = vector.broadcast %1029 : vector<1x128xf32> to vector<8x128xf32>
    %1032 = arith.addf %1030, %1031 : vector<8x128xf32>
    %1033 = arith.maximumf %1022, %1032 : vector<8x128xf32>
    %c93_473 = arith.constant 93 : index
    %c0_474 = arith.constant 0 : index
    %1034 = vector.load %arg4[%c93_473, %c0_474] : memref<128x128xf32, #tpu.memory_space<vmem>>, vector<1x128xf32>
    %1035 = vector.broadcast %1028 : vector<8x1xf32> to vector<8x128xf32>
    %1036 = vector.broadcast %1034 : vector<1x128xf32> to vector<8x128xf32>
    %1037 = arith.subf %1035, %1036 : vector<8x128xf32>
    %1038 = arith.minimumf %1027, %1037 : vector<8x128xf32>
    %c0_475 = arith.constant 0 : index
    %c94 = arith.constant 94 : index
    %1039 = vector.load %arg2[%c0_475, %c94] : memref<8x128xf32, #tpu.memory_space<vmem>>, vector<8x1xf32>
    %c94_476 = arith.constant 94 : index
    %c0_477 = arith.constant 0 : index
    %1040 = vector.load %arg3[%c94_476, %c0_477] : memref<128x128xf32, #tpu.memory_space<vmem>>, vector<1x128xf32>
    %1041 = vector.broadcast %1039 : vector<8x1xf32> to vector<8x128xf32>
    %1042 = vector.broadcast %1040 : vector<1x128xf32> to vector<8x128xf32>
    %1043 = arith.addf %1041, %1042 : vector<8x128xf32>
    %1044 = arith.maximumf %1033, %1043 : vector<8x128xf32>
    %c94_478 = arith.constant 94 : index
    %c0_479 = arith.constant 0 : index
    %1045 = vector.load %arg4[%c94_478, %c0_479] : memref<128x128xf32, #tpu.memory_space<vmem>>, vector<1x128xf32>
    %1046 = vector.broadcast %1039 : vector<8x1xf32> to vector<8x128xf32>
    %1047 = vector.broadcast %1045 : vector<1x128xf32> to vector<8x128xf32>
    %1048 = arith.subf %1046, %1047 : vector<8x128xf32>
    %1049 = arith.minimumf %1038, %1048 : vector<8x128xf32>
    %c0_480 = arith.constant 0 : index
    %c95 = arith.constant 95 : index
    %1050 = vector.load %arg2[%c0_480, %c95] : memref<8x128xf32, #tpu.memory_space<vmem>>, vector<8x1xf32>
    %c95_481 = arith.constant 95 : index
    %c0_482 = arith.constant 0 : index
    %1051 = vector.load %arg3[%c95_481, %c0_482] : memref<128x128xf32, #tpu.memory_space<vmem>>, vector<1x128xf32>
    %1052 = vector.broadcast %1050 : vector<8x1xf32> to vector<8x128xf32>
    %1053 = vector.broadcast %1051 : vector<1x128xf32> to vector<8x128xf32>
    %1054 = arith.addf %1052, %1053 : vector<8x128xf32>
    %1055 = arith.maximumf %1044, %1054 : vector<8x128xf32>
    %c95_483 = arith.constant 95 : index
    %c0_484 = arith.constant 0 : index
    %1056 = vector.load %arg4[%c95_483, %c0_484] : memref<128x128xf32, #tpu.memory_space<vmem>>, vector<1x128xf32>
    %1057 = vector.broadcast %1050 : vector<8x1xf32> to vector<8x128xf32>
    %1058 = vector.broadcast %1056 : vector<1x128xf32> to vector<8x128xf32>
    %1059 = arith.subf %1057, %1058 : vector<8x128xf32>
    %1060 = arith.minimumf %1049, %1059 : vector<8x128xf32>
    %c0_485 = arith.constant 0 : index
    %c96 = arith.constant 96 : index
    %1061 = vector.load %arg2[%c0_485, %c96] : memref<8x128xf32, #tpu.memory_space<vmem>>, vector<8x1xf32>
    %c96_486 = arith.constant 96 : index
    %c0_487 = arith.constant 0 : index
    %1062 = vector.load %arg3[%c96_486, %c0_487] : memref<128x128xf32, #tpu.memory_space<vmem>>, vector<1x128xf32>
    %1063 = vector.broadcast %1061 : vector<8x1xf32> to vector<8x128xf32>
    %1064 = vector.broadcast %1062 : vector<1x128xf32> to vector<8x128xf32>
    %1065 = arith.addf %1063, %1064 : vector<8x128xf32>
    %1066 = arith.maximumf %1055, %1065 : vector<8x128xf32>
    %c96_488 = arith.constant 96 : index
    %c0_489 = arith.constant 0 : index
    %1067 = vector.load %arg4[%c96_488, %c0_489] : memref<128x128xf32, #tpu.memory_space<vmem>>, vector<1x128xf32>
    %1068 = vector.broadcast %1061 : vector<8x1xf32> to vector<8x128xf32>
    %1069 = vector.broadcast %1067 : vector<1x128xf32> to vector<8x128xf32>
    %1070 = arith.subf %1068, %1069 : vector<8x128xf32>
    %1071 = arith.minimumf %1060, %1070 : vector<8x128xf32>
    %c0_490 = arith.constant 0 : index
    %c97 = arith.constant 97 : index
    %1072 = vector.load %arg2[%c0_490, %c97] : memref<8x128xf32, #tpu.memory_space<vmem>>, vector<8x1xf32>
    %c97_491 = arith.constant 97 : index
    %c0_492 = arith.constant 0 : index
    %1073 = vector.load %arg3[%c97_491, %c0_492] : memref<128x128xf32, #tpu.memory_space<vmem>>, vector<1x128xf32>
    %1074 = vector.broadcast %1072 : vector<8x1xf32> to vector<8x128xf32>
    %1075 = vector.broadcast %1073 : vector<1x128xf32> to vector<8x128xf32>
    %1076 = arith.addf %1074, %1075 : vector<8x128xf32>
    %1077 = arith.maximumf %1066, %1076 : vector<8x128xf32>
    %c97_493 = arith.constant 97 : index
    %c0_494 = arith.constant 0 : index
    %1078 = vector.load %arg4[%c97_493, %c0_494] : memref<128x128xf32, #tpu.memory_space<vmem>>, vector<1x128xf32>
    %1079 = vector.broadcast %1072 : vector<8x1xf32> to vector<8x128xf32>
    %1080 = vector.broadcast %1078 : vector<1x128xf32> to vector<8x128xf32>
    %1081 = arith.subf %1079, %1080 : vector<8x128xf32>
    %1082 = arith.minimumf %1071, %1081 : vector<8x128xf32>
    %c0_495 = arith.constant 0 : index
    %c98 = arith.constant 98 : index
    %1083 = vector.load %arg2[%c0_495, %c98] : memref<8x128xf32, #tpu.memory_space<vmem>>, vector<8x1xf32>
    %c98_496 = arith.constant 98 : index
    %c0_497 = arith.constant 0 : index
    %1084 = vector.load %arg3[%c98_496, %c0_497] : memref<128x128xf32, #tpu.memory_space<vmem>>, vector<1x128xf32>
    %1085 = vector.broadcast %1083 : vector<8x1xf32> to vector<8x128xf32>
    %1086 = vector.broadcast %1084 : vector<1x128xf32> to vector<8x128xf32>
    %1087 = arith.addf %1085, %1086 : vector<8x128xf32>
    %1088 = arith.maximumf %1077, %1087 : vector<8x128xf32>
    %c98_498 = arith.constant 98 : index
    %c0_499 = arith.constant 0 : index
    %1089 = vector.load %arg4[%c98_498, %c0_499] : memref<128x128xf32, #tpu.memory_space<vmem>>, vector<1x128xf32>
    %1090 = vector.broadcast %1083 : vector<8x1xf32> to vector<8x128xf32>
    %1091 = vector.broadcast %1089 : vector<1x128xf32> to vector<8x128xf32>
    %1092 = arith.subf %1090, %1091 : vector<8x128xf32>
    %1093 = arith.minimumf %1082, %1092 : vector<8x128xf32>
    %c0_500 = arith.constant 0 : index
    %c99 = arith.constant 99 : index
    %1094 = vector.load %arg2[%c0_500, %c99] : memref<8x128xf32, #tpu.memory_space<vmem>>, vector<8x1xf32>
    %c99_501 = arith.constant 99 : index
    %c0_502 = arith.constant 0 : index
    %1095 = vector.load %arg3[%c99_501, %c0_502] : memref<128x128xf32, #tpu.memory_space<vmem>>, vector<1x128xf32>
    %1096 = vector.broadcast %1094 : vector<8x1xf32> to vector<8x128xf32>
    %1097 = vector.broadcast %1095 : vector<1x128xf32> to vector<8x128xf32>
    %1098 = arith.addf %1096, %1097 : vector<8x128xf32>
    %1099 = arith.maximumf %1088, %1098 : vector<8x128xf32>
    %c99_503 = arith.constant 99 : index
    %c0_504 = arith.constant 0 : index
    %1100 = vector.load %arg4[%c99_503, %c0_504] : memref<128x128xf32, #tpu.memory_space<vmem>>, vector<1x128xf32>
    %1101 = vector.broadcast %1094 : vector<8x1xf32> to vector<8x128xf32>
    %1102 = vector.broadcast %1100 : vector<1x128xf32> to vector<8x128xf32>
    %1103 = arith.subf %1101, %1102 : vector<8x128xf32>
    %1104 = arith.minimumf %1093, %1103 : vector<8x128xf32>
    %c0_505 = arith.constant 0 : index
    %c100 = arith.constant 100 : index
    %1105 = vector.load %arg2[%c0_505, %c100] : memref<8x128xf32, #tpu.memory_space<vmem>>, vector<8x1xf32>
    %c100_506 = arith.constant 100 : index
    %c0_507 = arith.constant 0 : index
    %1106 = vector.load %arg3[%c100_506, %c0_507] : memref<128x128xf32, #tpu.memory_space<vmem>>, vector<1x128xf32>
    %1107 = vector.broadcast %1105 : vector<8x1xf32> to vector<8x128xf32>
    %1108 = vector.broadcast %1106 : vector<1x128xf32> to vector<8x128xf32>
    %1109 = arith.addf %1107, %1108 : vector<8x128xf32>
    %1110 = arith.maximumf %1099, %1109 : vector<8x128xf32>
    %c100_508 = arith.constant 100 : index
    %c0_509 = arith.constant 0 : index
    %1111 = vector.load %arg4[%c100_508, %c0_509] : memref<128x128xf32, #tpu.memory_space<vmem>>, vector<1x128xf32>
    %1112 = vector.broadcast %1105 : vector<8x1xf32> to vector<8x128xf32>
    %1113 = vector.broadcast %1111 : vector<1x128xf32> to vector<8x128xf32>
    %1114 = arith.subf %1112, %1113 : vector<8x128xf32>
    %1115 = arith.minimumf %1104, %1114 : vector<8x128xf32>
    %c0_510 = arith.constant 0 : index
    %c101 = arith.constant 101 : index
    %1116 = vector.load %arg2[%c0_510, %c101] : memref<8x128xf32, #tpu.memory_space<vmem>>, vector<8x1xf32>
    %c101_511 = arith.constant 101 : index
    %c0_512 = arith.constant 0 : index
    %1117 = vector.load %arg3[%c101_511, %c0_512] : memref<128x128xf32, #tpu.memory_space<vmem>>, vector<1x128xf32>
    %1118 = vector.broadcast %1116 : vector<8x1xf32> to vector<8x128xf32>
    %1119 = vector.broadcast %1117 : vector<1x128xf32> to vector<8x128xf32>
    %1120 = arith.addf %1118, %1119 : vector<8x128xf32>
    %1121 = arith.maximumf %1110, %1120 : vector<8x128xf32>
    %c101_513 = arith.constant 101 : index
    %c0_514 = arith.constant 0 : index
    %1122 = vector.load %arg4[%c101_513, %c0_514] : memref<128x128xf32, #tpu.memory_space<vmem>>, vector<1x128xf32>
    %1123 = vector.broadcast %1116 : vector<8x1xf32> to vector<8x128xf32>
    %1124 = vector.broadcast %1122 : vector<1x128xf32> to vector<8x128xf32>
    %1125 = arith.subf %1123, %1124 : vector<8x128xf32>
    %1126 = arith.minimumf %1115, %1125 : vector<8x128xf32>
    %c0_515 = arith.constant 0 : index
    %c102 = arith.constant 102 : index
    %1127 = vector.load %arg2[%c0_515, %c102] : memref<8x128xf32, #tpu.memory_space<vmem>>, vector<8x1xf32>
    %c102_516 = arith.constant 102 : index
    %c0_517 = arith.constant 0 : index
    %1128 = vector.load %arg3[%c102_516, %c0_517] : memref<128x128xf32, #tpu.memory_space<vmem>>, vector<1x128xf32>
    %1129 = vector.broadcast %1127 : vector<8x1xf32> to vector<8x128xf32>
    %1130 = vector.broadcast %1128 : vector<1x128xf32> to vector<8x128xf32>
    %1131 = arith.addf %1129, %1130 : vector<8x128xf32>
    %1132 = arith.maximumf %1121, %1131 : vector<8x128xf32>
    %c102_518 = arith.constant 102 : index
    %c0_519 = arith.constant 0 : index
    %1133 = vector.load %arg4[%c102_518, %c0_519] : memref<128x128xf32, #tpu.memory_space<vmem>>, vector<1x128xf32>
    %1134 = vector.broadcast %1127 : vector<8x1xf32> to vector<8x128xf32>
    %1135 = vector.broadcast %1133 : vector<1x128xf32> to vector<8x128xf32>
    %1136 = arith.subf %1134, %1135 : vector<8x128xf32>
    %1137 = arith.minimumf %1126, %1136 : vector<8x128xf32>
    %c0_520 = arith.constant 0 : index
    %c103 = arith.constant 103 : index
    %1138 = vector.load %arg2[%c0_520, %c103] : memref<8x128xf32, #tpu.memory_space<vmem>>, vector<8x1xf32>
    %c103_521 = arith.constant 103 : index
    %c0_522 = arith.constant 0 : index
    %1139 = vector.load %arg3[%c103_521, %c0_522] : memref<128x128xf32, #tpu.memory_space<vmem>>, vector<1x128xf32>
    %1140 = vector.broadcast %1138 : vector<8x1xf32> to vector<8x128xf32>
    %1141 = vector.broadcast %1139 : vector<1x128xf32> to vector<8x128xf32>
    %1142 = arith.addf %1140, %1141 : vector<8x128xf32>
    %1143 = arith.maximumf %1132, %1142 : vector<8x128xf32>
    %c103_523 = arith.constant 103 : index
    %c0_524 = arith.constant 0 : index
    %1144 = vector.load %arg4[%c103_523, %c0_524] : memref<128x128xf32, #tpu.memory_space<vmem>>, vector<1x128xf32>
    %1145 = vector.broadcast %1138 : vector<8x1xf32> to vector<8x128xf32>
    %1146 = vector.broadcast %1144 : vector<1x128xf32> to vector<8x128xf32>
    %1147 = arith.subf %1145, %1146 : vector<8x128xf32>
    %1148 = arith.minimumf %1137, %1147 : vector<8x128xf32>
    %c0_525 = arith.constant 0 : index
    %c104 = arith.constant 104 : index
    %1149 = vector.load %arg2[%c0_525, %c104] : memref<8x128xf32, #tpu.memory_space<vmem>>, vector<8x1xf32>
    %c104_526 = arith.constant 104 : index
    %c0_527 = arith.constant 0 : index
    %1150 = vector.load %arg3[%c104_526, %c0_527] : memref<128x128xf32, #tpu.memory_space<vmem>>, vector<1x128xf32>
    %1151 = vector.broadcast %1149 : vector<8x1xf32> to vector<8x128xf32>
    %1152 = vector.broadcast %1150 : vector<1x128xf32> to vector<8x128xf32>
    %1153 = arith.addf %1151, %1152 : vector<8x128xf32>
    %1154 = arith.maximumf %1143, %1153 : vector<8x128xf32>
    %c104_528 = arith.constant 104 : index
    %c0_529 = arith.constant 0 : index
    %1155 = vector.load %arg4[%c104_528, %c0_529] : memref<128x128xf32, #tpu.memory_space<vmem>>, vector<1x128xf32>
    %1156 = vector.broadcast %1149 : vector<8x1xf32> to vector<8x128xf32>
    %1157 = vector.broadcast %1155 : vector<1x128xf32> to vector<8x128xf32>
    %1158 = arith.subf %1156, %1157 : vector<8x128xf32>
    %1159 = arith.minimumf %1148, %1158 : vector<8x128xf32>
    %c0_530 = arith.constant 0 : index
    %c105 = arith.constant 105 : index
    %1160 = vector.load %arg2[%c0_530, %c105] : memref<8x128xf32, #tpu.memory_space<vmem>>, vector<8x1xf32>
    %c105_531 = arith.constant 105 : index
    %c0_532 = arith.constant 0 : index
    %1161 = vector.load %arg3[%c105_531, %c0_532] : memref<128x128xf32, #tpu.memory_space<vmem>>, vector<1x128xf32>
    %1162 = vector.broadcast %1160 : vector<8x1xf32> to vector<8x128xf32>
    %1163 = vector.broadcast %1161 : vector<1x128xf32> to vector<8x128xf32>
    %1164 = arith.addf %1162, %1163 : vector<8x128xf32>
    %1165 = arith.maximumf %1154, %1164 : vector<8x128xf32>
    %c105_533 = arith.constant 105 : index
    %c0_534 = arith.constant 0 : index
    %1166 = vector.load %arg4[%c105_533, %c0_534] : memref<128x128xf32, #tpu.memory_space<vmem>>, vector<1x128xf32>
    %1167 = vector.broadcast %1160 : vector<8x1xf32> to vector<8x128xf32>
    %1168 = vector.broadcast %1166 : vector<1x128xf32> to vector<8x128xf32>
    %1169 = arith.subf %1167, %1168 : vector<8x128xf32>
    %1170 = arith.minimumf %1159, %1169 : vector<8x128xf32>
    %c0_535 = arith.constant 0 : index
    %c106 = arith.constant 106 : index
    %1171 = vector.load %arg2[%c0_535, %c106] : memref<8x128xf32, #tpu.memory_space<vmem>>, vector<8x1xf32>
    %c106_536 = arith.constant 106 : index
    %c0_537 = arith.constant 0 : index
    %1172 = vector.load %arg3[%c106_536, %c0_537] : memref<128x128xf32, #tpu.memory_space<vmem>>, vector<1x128xf32>
    %1173 = vector.broadcast %1171 : vector<8x1xf32> to vector<8x128xf32>
    %1174 = vector.broadcast %1172 : vector<1x128xf32> to vector<8x128xf32>
    %1175 = arith.addf %1173, %1174 : vector<8x128xf32>
    %1176 = arith.maximumf %1165, %1175 : vector<8x128xf32>
    %c106_538 = arith.constant 106 : index
    %c0_539 = arith.constant 0 : index
    %1177 = vector.load %arg4[%c106_538, %c0_539] : memref<128x128xf32, #tpu.memory_space<vmem>>, vector<1x128xf32>
    %1178 = vector.broadcast %1171 : vector<8x1xf32> to vector<8x128xf32>
    %1179 = vector.broadcast %1177 : vector<1x128xf32> to vector<8x128xf32>
    %1180 = arith.subf %1178, %1179 : vector<8x128xf32>
    %1181 = arith.minimumf %1170, %1180 : vector<8x128xf32>
    %c0_540 = arith.constant 0 : index
    %c107 = arith.constant 107 : index
    %1182 = vector.load %arg2[%c0_540, %c107] : memref<8x128xf32, #tpu.memory_space<vmem>>, vector<8x1xf32>
    %c107_541 = arith.constant 107 : index
    %c0_542 = arith.constant 0 : index
    %1183 = vector.load %arg3[%c107_541, %c0_542] : memref<128x128xf32, #tpu.memory_space<vmem>>, vector<1x128xf32>
    %1184 = vector.broadcast %1182 : vector<8x1xf32> to vector<8x128xf32>
    %1185 = vector.broadcast %1183 : vector<1x128xf32> to vector<8x128xf32>
    %1186 = arith.addf %1184, %1185 : vector<8x128xf32>
    %1187 = arith.maximumf %1176, %1186 : vector<8x128xf32>
    %c107_543 = arith.constant 107 : index
    %c0_544 = arith.constant 0 : index
    %1188 = vector.load %arg4[%c107_543, %c0_544] : memref<128x128xf32, #tpu.memory_space<vmem>>, vector<1x128xf32>
    %1189 = vector.broadcast %1182 : vector<8x1xf32> to vector<8x128xf32>
    %1190 = vector.broadcast %1188 : vector<1x128xf32> to vector<8x128xf32>
    %1191 = arith.subf %1189, %1190 : vector<8x128xf32>
    %1192 = arith.minimumf %1181, %1191 : vector<8x128xf32>
    %c0_545 = arith.constant 0 : index
    %c108 = arith.constant 108 : index
    %1193 = vector.load %arg2[%c0_545, %c108] : memref<8x128xf32, #tpu.memory_space<vmem>>, vector<8x1xf32>
    %c108_546 = arith.constant 108 : index
    %c0_547 = arith.constant 0 : index
    %1194 = vector.load %arg3[%c108_546, %c0_547] : memref<128x128xf32, #tpu.memory_space<vmem>>, vector<1x128xf32>
    %1195 = vector.broadcast %1193 : vector<8x1xf32> to vector<8x128xf32>
    %1196 = vector.broadcast %1194 : vector<1x128xf32> to vector<8x128xf32>
    %1197 = arith.addf %1195, %1196 : vector<8x128xf32>
    %1198 = arith.maximumf %1187, %1197 : vector<8x128xf32>
    %c108_548 = arith.constant 108 : index
    %c0_549 = arith.constant 0 : index
    %1199 = vector.load %arg4[%c108_548, %c0_549] : memref<128x128xf32, #tpu.memory_space<vmem>>, vector<1x128xf32>
    %1200 = vector.broadcast %1193 : vector<8x1xf32> to vector<8x128xf32>
    %1201 = vector.broadcast %1199 : vector<1x128xf32> to vector<8x128xf32>
    %1202 = arith.subf %1200, %1201 : vector<8x128xf32>
    %1203 = arith.minimumf %1192, %1202 : vector<8x128xf32>
    %c0_550 = arith.constant 0 : index
    %c109 = arith.constant 109 : index
    %1204 = vector.load %arg2[%c0_550, %c109] : memref<8x128xf32, #tpu.memory_space<vmem>>, vector<8x1xf32>
    %c109_551 = arith.constant 109 : index
    %c0_552 = arith.constant 0 : index
    %1205 = vector.load %arg3[%c109_551, %c0_552] : memref<128x128xf32, #tpu.memory_space<vmem>>, vector<1x128xf32>
    %1206 = vector.broadcast %1204 : vector<8x1xf32> to vector<8x128xf32>
    %1207 = vector.broadcast %1205 : vector<1x128xf32> to vector<8x128xf32>
    %1208 = arith.addf %1206, %1207 : vector<8x128xf32>
    %1209 = arith.maximumf %1198, %1208 : vector<8x128xf32>
    %c109_553 = arith.constant 109 : index
    %c0_554 = arith.constant 0 : index
    %1210 = vector.load %arg4[%c109_553, %c0_554] : memref<128x128xf32, #tpu.memory_space<vmem>>, vector<1x128xf32>
    %1211 = vector.broadcast %1204 : vector<8x1xf32> to vector<8x128xf32>
    %1212 = vector.broadcast %1210 : vector<1x128xf32> to vector<8x128xf32>
    %1213 = arith.subf %1211, %1212 : vector<8x128xf32>
    %1214 = arith.minimumf %1203, %1213 : vector<8x128xf32>
    %c0_555 = arith.constant 0 : index
    %c110 = arith.constant 110 : index
    %1215 = vector.load %arg2[%c0_555, %c110] : memref<8x128xf32, #tpu.memory_space<vmem>>, vector<8x1xf32>
    %c110_556 = arith.constant 110 : index
    %c0_557 = arith.constant 0 : index
    %1216 = vector.load %arg3[%c110_556, %c0_557] : memref<128x128xf32, #tpu.memory_space<vmem>>, vector<1x128xf32>
    %1217 = vector.broadcast %1215 : vector<8x1xf32> to vector<8x128xf32>
    %1218 = vector.broadcast %1216 : vector<1x128xf32> to vector<8x128xf32>
    %1219 = arith.addf %1217, %1218 : vector<8x128xf32>
    %1220 = arith.maximumf %1209, %1219 : vector<8x128xf32>
    %c110_558 = arith.constant 110 : index
    %c0_559 = arith.constant 0 : index
    %1221 = vector.load %arg4[%c110_558, %c0_559] : memref<128x128xf32, #tpu.memory_space<vmem>>, vector<1x128xf32>
    %1222 = vector.broadcast %1215 : vector<8x1xf32> to vector<8x128xf32>
    %1223 = vector.broadcast %1221 : vector<1x128xf32> to vector<8x128xf32>
    %1224 = arith.subf %1222, %1223 : vector<8x128xf32>
    %1225 = arith.minimumf %1214, %1224 : vector<8x128xf32>
    %c0_560 = arith.constant 0 : index
    %c111 = arith.constant 111 : index
    %1226 = vector.load %arg2[%c0_560, %c111] : memref<8x128xf32, #tpu.memory_space<vmem>>, vector<8x1xf32>
    %c111_561 = arith.constant 111 : index
    %c0_562 = arith.constant 0 : index
    %1227 = vector.load %arg3[%c111_561, %c0_562] : memref<128x128xf32, #tpu.memory_space<vmem>>, vector<1x128xf32>
    %1228 = vector.broadcast %1226 : vector<8x1xf32> to vector<8x128xf32>
    %1229 = vector.broadcast %1227 : vector<1x128xf32> to vector<8x128xf32>
    %1230 = arith.addf %1228, %1229 : vector<8x128xf32>
    %1231 = arith.maximumf %1220, %1230 : vector<8x128xf32>
    %c111_563 = arith.constant 111 : index
    %c0_564 = arith.constant 0 : index
    %1232 = vector.load %arg4[%c111_563, %c0_564] : memref<128x128xf32, #tpu.memory_space<vmem>>, vector<1x128xf32>
    %1233 = vector.broadcast %1226 : vector<8x1xf32> to vector<8x128xf32>
    %1234 = vector.broadcast %1232 : vector<1x128xf32> to vector<8x128xf32>
    %1235 = arith.subf %1233, %1234 : vector<8x128xf32>
    %1236 = arith.minimumf %1225, %1235 : vector<8x128xf32>
    %c0_565 = arith.constant 0 : index
    %c112 = arith.constant 112 : index
    %1237 = vector.load %arg2[%c0_565, %c112] : memref<8x128xf32, #tpu.memory_space<vmem>>, vector<8x1xf32>
    %c112_566 = arith.constant 112 : index
    %c0_567 = arith.constant 0 : index
    %1238 = vector.load %arg3[%c112_566, %c0_567] : memref<128x128xf32, #tpu.memory_space<vmem>>, vector<1x128xf32>
    %1239 = vector.broadcast %1237 : vector<8x1xf32> to vector<8x128xf32>
    %1240 = vector.broadcast %1238 : vector<1x128xf32> to vector<8x128xf32>
    %1241 = arith.addf %1239, %1240 : vector<8x128xf32>
    %1242 = arith.maximumf %1231, %1241 : vector<8x128xf32>
    %c112_568 = arith.constant 112 : index
    %c0_569 = arith.constant 0 : index
    %1243 = vector.load %arg4[%c112_568, %c0_569] : memref<128x128xf32, #tpu.memory_space<vmem>>, vector<1x128xf32>
    %1244 = vector.broadcast %1237 : vector<8x1xf32> to vector<8x128xf32>
    %1245 = vector.broadcast %1243 : vector<1x128xf32> to vector<8x128xf32>
    %1246 = arith.subf %1244, %1245 : vector<8x128xf32>
    %1247 = arith.minimumf %1236, %1246 : vector<8x128xf32>
    %c0_570 = arith.constant 0 : index
    %c113 = arith.constant 113 : index
    %1248 = vector.load %arg2[%c0_570, %c113] : memref<8x128xf32, #tpu.memory_space<vmem>>, vector<8x1xf32>
    %c113_571 = arith.constant 113 : index
    %c0_572 = arith.constant 0 : index
    %1249 = vector.load %arg3[%c113_571, %c0_572] : memref<128x128xf32, #tpu.memory_space<vmem>>, vector<1x128xf32>
    %1250 = vector.broadcast %1248 : vector<8x1xf32> to vector<8x128xf32>
    %1251 = vector.broadcast %1249 : vector<1x128xf32> to vector<8x128xf32>
    %1252 = arith.addf %1250, %1251 : vector<8x128xf32>
    %1253 = arith.maximumf %1242, %1252 : vector<8x128xf32>
    %c113_573 = arith.constant 113 : index
    %c0_574 = arith.constant 0 : index
    %1254 = vector.load %arg4[%c113_573, %c0_574] : memref<128x128xf32, #tpu.memory_space<vmem>>, vector<1x128xf32>
    %1255 = vector.broadcast %1248 : vector<8x1xf32> to vector<8x128xf32>
    %1256 = vector.broadcast %1254 : vector<1x128xf32> to vector<8x128xf32>
    %1257 = arith.subf %1255, %1256 : vector<8x128xf32>
    %1258 = arith.minimumf %1247, %1257 : vector<8x128xf32>
    %c0_575 = arith.constant 0 : index
    %c114 = arith.constant 114 : index
    %1259 = vector.load %arg2[%c0_575, %c114] : memref<8x128xf32, #tpu.memory_space<vmem>>, vector<8x1xf32>
    %c114_576 = arith.constant 114 : index
    %c0_577 = arith.constant 0 : index
    %1260 = vector.load %arg3[%c114_576, %c0_577] : memref<128x128xf32, #tpu.memory_space<vmem>>, vector<1x128xf32>
    %1261 = vector.broadcast %1259 : vector<8x1xf32> to vector<8x128xf32>
    %1262 = vector.broadcast %1260 : vector<1x128xf32> to vector<8x128xf32>
    %1263 = arith.addf %1261, %1262 : vector<8x128xf32>
    %1264 = arith.maximumf %1253, %1263 : vector<8x128xf32>
    %c114_578 = arith.constant 114 : index
    %c0_579 = arith.constant 0 : index
    %1265 = vector.load %arg4[%c114_578, %c0_579] : memref<128x128xf32, #tpu.memory_space<vmem>>, vector<1x128xf32>
    %1266 = vector.broadcast %1259 : vector<8x1xf32> to vector<8x128xf32>
    %1267 = vector.broadcast %1265 : vector<1x128xf32> to vector<8x128xf32>
    %1268 = arith.subf %1266, %1267 : vector<8x128xf32>
    %1269 = arith.minimumf %1258, %1268 : vector<8x128xf32>
    %c0_580 = arith.constant 0 : index
    %c115 = arith.constant 115 : index
    %1270 = vector.load %arg2[%c0_580, %c115] : memref<8x128xf32, #tpu.memory_space<vmem>>, vector<8x1xf32>
    %c115_581 = arith.constant 115 : index
    %c0_582 = arith.constant 0 : index
    %1271 = vector.load %arg3[%c115_581, %c0_582] : memref<128x128xf32, #tpu.memory_space<vmem>>, vector<1x128xf32>
    %1272 = vector.broadcast %1270 : vector<8x1xf32> to vector<8x128xf32>
    %1273 = vector.broadcast %1271 : vector<1x128xf32> to vector<8x128xf32>
    %1274 = arith.addf %1272, %1273 : vector<8x128xf32>
    %1275 = arith.maximumf %1264, %1274 : vector<8x128xf32>
    %c115_583 = arith.constant 115 : index
    %c0_584 = arith.constant 0 : index
    %1276 = vector.load %arg4[%c115_583, %c0_584] : memref<128x128xf32, #tpu.memory_space<vmem>>, vector<1x128xf32>
    %1277 = vector.broadcast %1270 : vector<8x1xf32> to vector<8x128xf32>
    %1278 = vector.broadcast %1276 : vector<1x128xf32> to vector<8x128xf32>
    %1279 = arith.subf %1277, %1278 : vector<8x128xf32>
    %1280 = arith.minimumf %1269, %1279 : vector<8x128xf32>
    %c0_585 = arith.constant 0 : index
    %c116 = arith.constant 116 : index
    %1281 = vector.load %arg2[%c0_585, %c116] : memref<8x128xf32, #tpu.memory_space<vmem>>, vector<8x1xf32>
    %c116_586 = arith.constant 116 : index
    %c0_587 = arith.constant 0 : index
    %1282 = vector.load %arg3[%c116_586, %c0_587] : memref<128x128xf32, #tpu.memory_space<vmem>>, vector<1x128xf32>
    %1283 = vector.broadcast %1281 : vector<8x1xf32> to vector<8x128xf32>
    %1284 = vector.broadcast %1282 : vector<1x128xf32> to vector<8x128xf32>
    %1285 = arith.addf %1283, %1284 : vector<8x128xf32>
    %1286 = arith.maximumf %1275, %1285 : vector<8x128xf32>
    %c116_588 = arith.constant 116 : index
    %c0_589 = arith.constant 0 : index
    %1287 = vector.load %arg4[%c116_588, %c0_589] : memref<128x128xf32, #tpu.memory_space<vmem>>, vector<1x128xf32>
    %1288 = vector.broadcast %1281 : vector<8x1xf32> to vector<8x128xf32>
    %1289 = vector.broadcast %1287 : vector<1x128xf32> to vector<8x128xf32>
    %1290 = arith.subf %1288, %1289 : vector<8x128xf32>
    %1291 = arith.minimumf %1280, %1290 : vector<8x128xf32>
    %c0_590 = arith.constant 0 : index
    %c117 = arith.constant 117 : index
    %1292 = vector.load %arg2[%c0_590, %c117] : memref<8x128xf32, #tpu.memory_space<vmem>>, vector<8x1xf32>
    %c117_591 = arith.constant 117 : index
    %c0_592 = arith.constant 0 : index
    %1293 = vector.load %arg3[%c117_591, %c0_592] : memref<128x128xf32, #tpu.memory_space<vmem>>, vector<1x128xf32>
    %1294 = vector.broadcast %1292 : vector<8x1xf32> to vector<8x128xf32>
    %1295 = vector.broadcast %1293 : vector<1x128xf32> to vector<8x128xf32>
    %1296 = arith.addf %1294, %1295 : vector<8x128xf32>
    %1297 = arith.maximumf %1286, %1296 : vector<8x128xf32>
    %c117_593 = arith.constant 117 : index
    %c0_594 = arith.constant 0 : index
    %1298 = vector.load %arg4[%c117_593, %c0_594] : memref<128x128xf32, #tpu.memory_space<vmem>>, vector<1x128xf32>
    %1299 = vector.broadcast %1292 : vector<8x1xf32> to vector<8x128xf32>
    %1300 = vector.broadcast %1298 : vector<1x128xf32> to vector<8x128xf32>
    %1301 = arith.subf %1299, %1300 : vector<8x128xf32>
    %1302 = arith.minimumf %1291, %1301 : vector<8x128xf32>
    %c0_595 = arith.constant 0 : index
    %c118 = arith.constant 118 : index
    %1303 = vector.load %arg2[%c0_595, %c118] : memref<8x128xf32, #tpu.memory_space<vmem>>, vector<8x1xf32>
    %c118_596 = arith.constant 118 : index
    %c0_597 = arith.constant 0 : index
    %1304 = vector.load %arg3[%c118_596, %c0_597] : memref<128x128xf32, #tpu.memory_space<vmem>>, vector<1x128xf32>
    %1305 = vector.broadcast %1303 : vector<8x1xf32> to vector<8x128xf32>
    %1306 = vector.broadcast %1304 : vector<1x128xf32> to vector<8x128xf32>
    %1307 = arith.addf %1305, %1306 : vector<8x128xf32>
    %1308 = arith.maximumf %1297, %1307 : vector<8x128xf32>
    %c118_598 = arith.constant 118 : index
    %c0_599 = arith.constant 0 : index
    %1309 = vector.load %arg4[%c118_598, %c0_599] : memref<128x128xf32, #tpu.memory_space<vmem>>, vector<1x128xf32>
    %1310 = vector.broadcast %1303 : vector<8x1xf32> to vector<8x128xf32>
    %1311 = vector.broadcast %1309 : vector<1x128xf32> to vector<8x128xf32>
    %1312 = arith.subf %1310, %1311 : vector<8x128xf32>
    %1313 = arith.minimumf %1302, %1312 : vector<8x128xf32>
    %c0_600 = arith.constant 0 : index
    %c119 = arith.constant 119 : index
    %1314 = vector.load %arg2[%c0_600, %c119] : memref<8x128xf32, #tpu.memory_space<vmem>>, vector<8x1xf32>
    %c119_601 = arith.constant 119 : index
    %c0_602 = arith.constant 0 : index
    %1315 = vector.load %arg3[%c119_601, %c0_602] : memref<128x128xf32, #tpu.memory_space<vmem>>, vector<1x128xf32>
    %1316 = vector.broadcast %1314 : vector<8x1xf32> to vector<8x128xf32>
    %1317 = vector.broadcast %1315 : vector<1x128xf32> to vector<8x128xf32>
    %1318 = arith.addf %1316, %1317 : vector<8x128xf32>
    %1319 = arith.maximumf %1308, %1318 : vector<8x128xf32>
    %c119_603 = arith.constant 119 : index
    %c0_604 = arith.constant 0 : index
    %1320 = vector.load %arg4[%c119_603, %c0_604] : memref<128x128xf32, #tpu.memory_space<vmem>>, vector<1x128xf32>
    %1321 = vector.broadcast %1314 : vector<8x1xf32> to vector<8x128xf32>
    %1322 = vector.broadcast %1320 : vector<1x128xf32> to vector<8x128xf32>
    %1323 = arith.subf %1321, %1322 : vector<8x128xf32>
    %1324 = arith.minimumf %1313, %1323 : vector<8x128xf32>
    %c0_605 = arith.constant 0 : index
    %c120 = arith.constant 120 : index
    %1325 = vector.load %arg2[%c0_605, %c120] : memref<8x128xf32, #tpu.memory_space<vmem>>, vector<8x1xf32>
    %c120_606 = arith.constant 120 : index
    %c0_607 = arith.constant 0 : index
    %1326 = vector.load %arg3[%c120_606, %c0_607] : memref<128x128xf32, #tpu.memory_space<vmem>>, vector<1x128xf32>
    %1327 = vector.broadcast %1325 : vector<8x1xf32> to vector<8x128xf32>
    %1328 = vector.broadcast %1326 : vector<1x128xf32> to vector<8x128xf32>
    %1329 = arith.addf %1327, %1328 : vector<8x128xf32>
    %1330 = arith.maximumf %1319, %1329 : vector<8x128xf32>
    %c120_608 = arith.constant 120 : index
    %c0_609 = arith.constant 0 : index
    %1331 = vector.load %arg4[%c120_608, %c0_609] : memref<128x128xf32, #tpu.memory_space<vmem>>, vector<1x128xf32>
    %1332 = vector.broadcast %1325 : vector<8x1xf32> to vector<8x128xf32>
    %1333 = vector.broadcast %1331 : vector<1x128xf32> to vector<8x128xf32>
    %1334 = arith.subf %1332, %1333 : vector<8x128xf32>
    %1335 = arith.minimumf %1324, %1334 : vector<8x128xf32>
    %c0_610 = arith.constant 0 : index
    %c121 = arith.constant 121 : index
    %1336 = vector.load %arg2[%c0_610, %c121] : memref<8x128xf32, #tpu.memory_space<vmem>>, vector<8x1xf32>
    %c121_611 = arith.constant 121 : index
    %c0_612 = arith.constant 0 : index
    %1337 = vector.load %arg3[%c121_611, %c0_612] : memref<128x128xf32, #tpu.memory_space<vmem>>, vector<1x128xf32>
    %1338 = vector.broadcast %1336 : vector<8x1xf32> to vector<8x128xf32>
    %1339 = vector.broadcast %1337 : vector<1x128xf32> to vector<8x128xf32>
    %1340 = arith.addf %1338, %1339 : vector<8x128xf32>
    %1341 = arith.maximumf %1330, %1340 : vector<8x128xf32>
    %c121_613 = arith.constant 121 : index
    %c0_614 = arith.constant 0 : index
    %1342 = vector.load %arg4[%c121_613, %c0_614] : memref<128x128xf32, #tpu.memory_space<vmem>>, vector<1x128xf32>
    %1343 = vector.broadcast %1336 : vector<8x1xf32> to vector<8x128xf32>
    %1344 = vector.broadcast %1342 : vector<1x128xf32> to vector<8x128xf32>
    %1345 = arith.subf %1343, %1344 : vector<8x128xf32>
    %1346 = arith.minimumf %1335, %1345 : vector<8x128xf32>
    %c0_615 = arith.constant 0 : index
    %c122 = arith.constant 122 : index
    %1347 = vector.load %arg2[%c0_615, %c122] : memref<8x128xf32, #tpu.memory_space<vmem>>, vector<8x1xf32>
    %c122_616 = arith.constant 122 : index
    %c0_617 = arith.constant 0 : index
    %1348 = vector.load %arg3[%c122_616, %c0_617] : memref<128x128xf32, #tpu.memory_space<vmem>>, vector<1x128xf32>
    %1349 = vector.broadcast %1347 : vector<8x1xf32> to vector<8x128xf32>
    %1350 = vector.broadcast %1348 : vector<1x128xf32> to vector<8x128xf32>
    %1351 = arith.addf %1349, %1350 : vector<8x128xf32>
    %1352 = arith.maximumf %1341, %1351 : vector<8x128xf32>
    %c122_618 = arith.constant 122 : index
    %c0_619 = arith.constant 0 : index
    %1353 = vector.load %arg4[%c122_618, %c0_619] : memref<128x128xf32, #tpu.memory_space<vmem>>, vector<1x128xf32>
    %1354 = vector.broadcast %1347 : vector<8x1xf32> to vector<8x128xf32>
    %1355 = vector.broadcast %1353 : vector<1x128xf32> to vector<8x128xf32>
    %1356 = arith.subf %1354, %1355 : vector<8x128xf32>
    %1357 = arith.minimumf %1346, %1356 : vector<8x128xf32>
    %c0_620 = arith.constant 0 : index
    %c123 = arith.constant 123 : index
    %1358 = vector.load %arg2[%c0_620, %c123] : memref<8x128xf32, #tpu.memory_space<vmem>>, vector<8x1xf32>
    %c123_621 = arith.constant 123 : index
    %c0_622 = arith.constant 0 : index
    %1359 = vector.load %arg3[%c123_621, %c0_622] : memref<128x128xf32, #tpu.memory_space<vmem>>, vector<1x128xf32>
    %1360 = vector.broadcast %1358 : vector<8x1xf32> to vector<8x128xf32>
    %1361 = vector.broadcast %1359 : vector<1x128xf32> to vector<8x128xf32>
    %1362 = arith.addf %1360, %1361 : vector<8x128xf32>
    %1363 = arith.maximumf %1352, %1362 : vector<8x128xf32>
    %c123_623 = arith.constant 123 : index
    %c0_624 = arith.constant 0 : index
    %1364 = vector.load %arg4[%c123_623, %c0_624] : memref<128x128xf32, #tpu.memory_space<vmem>>, vector<1x128xf32>
    %1365 = vector.broadcast %1358 : vector<8x1xf32> to vector<8x128xf32>
    %1366 = vector.broadcast %1364 : vector<1x128xf32> to vector<8x128xf32>
    %1367 = arith.subf %1365, %1366 : vector<8x128xf32>
    %1368 = arith.minimumf %1357, %1367 : vector<8x128xf32>
    %c0_625 = arith.constant 0 : index
    %c124 = arith.constant 124 : index
    %1369 = vector.load %arg2[%c0_625, %c124] : memref<8x128xf32, #tpu.memory_space<vmem>>, vector<8x1xf32>
    %c124_626 = arith.constant 124 : index
    %c0_627 = arith.constant 0 : index
    %1370 = vector.load %arg3[%c124_626, %c0_627] : memref<128x128xf32, #tpu.memory_space<vmem>>, vector<1x128xf32>
    %1371 = vector.broadcast %1369 : vector<8x1xf32> to vector<8x128xf32>
    %1372 = vector.broadcast %1370 : vector<1x128xf32> to vector<8x128xf32>
    %1373 = arith.addf %1371, %1372 : vector<8x128xf32>
    %1374 = arith.maximumf %1363, %1373 : vector<8x128xf32>
    %c124_628 = arith.constant 124 : index
    %c0_629 = arith.constant 0 : index
    %1375 = vector.load %arg4[%c124_628, %c0_629] : memref<128x128xf32, #tpu.memory_space<vmem>>, vector<1x128xf32>
    %1376 = vector.broadcast %1369 : vector<8x1xf32> to vector<8x128xf32>
    %1377 = vector.broadcast %1375 : vector<1x128xf32> to vector<8x128xf32>
    %1378 = arith.subf %1376, %1377 : vector<8x128xf32>
    %1379 = arith.minimumf %1368, %1378 : vector<8x128xf32>
    %c0_630 = arith.constant 0 : index
    %c125 = arith.constant 125 : index
    %1380 = vector.load %arg2[%c0_630, %c125] : memref<8x128xf32, #tpu.memory_space<vmem>>, vector<8x1xf32>
    %c125_631 = arith.constant 125 : index
    %c0_632 = arith.constant 0 : index
    %1381 = vector.load %arg3[%c125_631, %c0_632] : memref<128x128xf32, #tpu.memory_space<vmem>>, vector<1x128xf32>
    %1382 = vector.broadcast %1380 : vector<8x1xf32> to vector<8x128xf32>
    %1383 = vector.broadcast %1381 : vector<1x128xf32> to vector<8x128xf32>
    %1384 = arith.addf %1382, %1383 : vector<8x128xf32>
    %1385 = arith.maximumf %1374, %1384 : vector<8x128xf32>
    %c125_633 = arith.constant 125 : index
    %c0_634 = arith.constant 0 : index
    %1386 = vector.load %arg4[%c125_633, %c0_634] : memref<128x128xf32, #tpu.memory_space<vmem>>, vector<1x128xf32>
    %1387 = vector.broadcast %1380 : vector<8x1xf32> to vector<8x128xf32>
    %1388 = vector.broadcast %1386 : vector<1x128xf32> to vector<8x128xf32>
    %1389 = arith.subf %1387, %1388 : vector<8x128xf32>
    %1390 = arith.minimumf %1379, %1389 : vector<8x128xf32>
    %c0_635 = arith.constant 0 : index
    %c126 = arith.constant 126 : index
    %1391 = vector.load %arg2[%c0_635, %c126] : memref<8x128xf32, #tpu.memory_space<vmem>>, vector<8x1xf32>
    %c126_636 = arith.constant 126 : index
    %c0_637 = arith.constant 0 : index
    %1392 = vector.load %arg3[%c126_636, %c0_637] : memref<128x128xf32, #tpu.memory_space<vmem>>, vector<1x128xf32>
    %1393 = vector.broadcast %1391 : vector<8x1xf32> to vector<8x128xf32>
    %1394 = vector.broadcast %1392 : vector<1x128xf32> to vector<8x128xf32>
    %1395 = arith.addf %1393, %1394 : vector<8x128xf32>
    %1396 = arith.maximumf %1385, %1395 : vector<8x128xf32>
    %c126_638 = arith.constant 126 : index
    %c0_639 = arith.constant 0 : index
    %1397 = vector.load %arg4[%c126_638, %c0_639] : memref<128x128xf32, #tpu.memory_space<vmem>>, vector<1x128xf32>
    %1398 = vector.broadcast %1391 : vector<8x1xf32> to vector<8x128xf32>
    %1399 = vector.broadcast %1397 : vector<1x128xf32> to vector<8x128xf32>
    %1400 = arith.subf %1398, %1399 : vector<8x128xf32>
    %1401 = arith.minimumf %1390, %1400 : vector<8x128xf32>
    %c0_640 = arith.constant 0 : index
    %c127 = arith.constant 127 : index
    %1402 = vector.load %arg2[%c0_640, %c127] : memref<8x128xf32, #tpu.memory_space<vmem>>, vector<8x1xf32>
    %c127_641 = arith.constant 127 : index
    %c0_642 = arith.constant 0 : index
    %1403 = vector.load %arg3[%c127_641, %c0_642] : memref<128x128xf32, #tpu.memory_space<vmem>>, vector<1x128xf32>
    %1404 = vector.broadcast %1402 : vector<8x1xf32> to vector<8x128xf32>
    %1405 = vector.broadcast %1403 : vector<1x128xf32> to vector<8x128xf32>
    %1406 = arith.addf %1404, %1405 : vector<8x128xf32>
    %1407 = arith.maximumf %1396, %1406 : vector<8x128xf32>
    %c127_643 = arith.constant 127 : index
    %c0_644 = arith.constant 0 : index
    %1408 = vector.load %arg4[%c127_643, %c0_644] : memref<128x128xf32, #tpu.memory_space<vmem>>, vector<1x128xf32>
    %1409 = vector.broadcast %1402 : vector<8x1xf32> to vector<8x128xf32>
    %1410 = vector.broadcast %1408 : vector<1x128xf32> to vector<8x128xf32>
    %1411 = arith.subf %1409, %1410 : vector<8x128xf32>
    %1412 = arith.minimumf %1401, %1411 : vector<8x128xf32>
    %c0_645 = arith.constant 0 : index
    %c0_646 = arith.constant 0 : index
    %1413 = vector.load %arg10[%c0_645, %c0_646] : memref<8x128xf32, #tpu.memory_space<vmem>>, vector<8x128xf32>
    tpu.vector_store %arg10[%c0_645, %c0_646], %1407 {strides = array<i32>} : memref<8x128xf32, #tpu.memory_space<vmem>>, vector<8x128xf32>,
    %c0_647 = arith.constant 0 : index
    %c0_648 = arith.constant 0 : index
    %1414 = vector.load %arg11[%c0_647, %c0_648] : memref<8x128xf32, #tpu.memory_space<vmem>>, vector<8x128xf32>
    tpu.vector_store %arg11[%c0_647, %c0_648], %1412 {strides = array<i32>} : memref<8x128xf32, #tpu.memory_space<vmem>>, vector<8x128xf32>,
    %c0_i32_649 = arith.constant 0 : i32
    %1415 = arith.cmpi eq, %arg1, %c0_i32_649 : i32
    %1416 = arith.extui %1415 : i1 to i32
    %c0_i32_650 = arith.constant 0 : i32
    %1417 = arith.cmpi ne, %1416, %c0_i32_650 : i32
    scf.if %1417 {
      %c0_651 = arith.constant 0 : index
      %c0_652 = arith.constant 0 : index
      %1418 = vector.load %arg7[%c0_651, %c0_652] : memref<128x128xf32, #tpu.memory_space<vmem>>, vector<128x128xf32>
      %cst = arith.constant dense<0.000000e+00> : vector<8x128xf32>
      %1419 = tpu.matmul %1407, %1418, %cst {dimension_numbers = #tpu.dot_dimension_numbers<[1], [0], [0], [1], [0, 0, 1, 1], [], []>} : vector<8x128xf32>, vector<128x128xf32>, vector<8x128xf32> -> vector<8x128xf32>
      %c0_653 = arith.constant 0 : index
      %c0_654 = arith.constant 0 : index
      %1420 = vector.load %arg8[%c0_653, %c0_654] : memref<128x128xf32, #tpu.memory_space<vmem>>, vector<128x128xf32>
      %cst_655 = arith.constant dense<0.000000e+00> : vector<8x128xf32>
      %1421 = tpu.matmul %1412, %1420, %cst_655 {dimension_numbers = #tpu.dot_dimension_numbers<[1], [0], [0], [1], [0, 0, 1, 1], [], []>} : vector<8x128xf32>, vector<128x128xf32>, vector<8x128xf32> -> vector<8x128xf32>
      %1422 = arith.addf %1419, %1421 : vector<8x128xf32>
      %c0_656 = arith.constant 0 : index
      %c0_657 = arith.constant 0 : index
      %1423 = vector.load %arg9[%c0_656, %c0_657] : memref<8x128xf32, #tpu.memory_space<vmem>>, vector<8x128xf32>
      tpu.vector_store %arg9[%c0_656, %c0_657], %1422 {strides = array<i32>} : memref<8x128xf32, #tpu.memory_space<vmem>>, vector<8x128xf32>,
    } else {
    }
    return
  }
  func.func @transform_0(%arg0: i32, %arg1: i32) -> (i32, i32) {
    %c0_i32 = arith.constant 0 : i32
    return %arg0, %arg1 : i32, i32
  }
  func.func @transform_1(%arg0: i32, %arg1: i32) -> (i32, i32) {
    %c0_i32 = arith.constant 0 : i32
    %c0_i32_0 = arith.constant 0 : i32
    return %arg1, %c0_i32 : i32, i32
  }
  func.func @transform_2(%arg0: i32, %arg1: i32) -> (i32, i32) {
    %c0_i32 = arith.constant 0 : i32
    %c0_i32_0 = arith.constant 0 : i32
    return %arg1, %c0_i32 : i32, i32
  }
  func.func @transform_3(%arg0: i32, %arg1: i32) -> (i32, i32) {
    %c0_i32 = arith.constant 0 : i32
    %c0_i32_0 = arith.constant 0 : i32
    %c0_i32_1 = arith.constant 0 : i32
    return %c0_i32, %c0_i32_0 : i32, i32
  }
  func.func @transform_4(%arg0: i32, %arg1: i32) -> (i32, i32) {
    %c0_i32 = arith.constant 0 : i32
    %c0_i32_0 = arith.constant 0 : i32
    %c0_i32_1 = arith.constant 0 : i32
    return %c0_i32, %c0_i32_0 : i32, i32
  }
  func.func @transform_5(%arg0: i32, %arg1: i32) -> (i32, i32) {
    %c0_i32 = arith.constant 0 : i32
    %c0_i32_0 = arith.constant 0 : i32
    %c0_i32_1 = arith.constant 0 : i32
    return %c0_i32, %c0_i32_0 : i32, i32
  }
  func.func @transform_6(%arg0: i32, %arg1: i32) -> (i32, i32) {
    %c0_i32 = arith.constant 0 : i32
    %c0_i32_0 = arith.constant 0 : i32
    %c0_i32_1 = arith.constant 0 : i32
    return %c0_i32, %c0_i32_0 : i32, i32
  }
  func.func @transform_7(%arg0: i32, %arg1: i32) -> (i32, i32) {
    %c0_i32 = arith.constant 0 : i32
    %c0_i32_0 = arith.constant 0 : i32
    return %arg0, %c0_i32 : i32, i32
  }
}

</mosaic_0001>

<llo_original>
// kernel: morphological_max.1
$region0: #{morphological_max.1}
  #allocation0 [shape = 'u32[]', space=smem, size = 0x4, offset = 0x4, fixed_abs, tag = 'smem constant byte address 0x4 - core index']
  #allocation1 [shape = 'u32[144,128]{1,0:T(1,128)}', space=vmem, size = 0x12000, scoped, tag = 'internal scratch']
  #allocation2 [shape = 'f32[8,128]{1,0:T(8,128)}', space=vmem, size = 0x1000, scoped, tag = 'scratch operand']
  #allocation3 [shape = 'f32[8,128]{1,0:T(8,128)}', space=vmem, size = 0x1000, scoped, tag = 'scratch operand']
  %s0 = inlined_call_operand.vmem [shape: f32[8,128], index: 0, kind: input, shape index: {}]
  %s1 = inlined_call_operand.vmem [shape: f32[128,128], index: 1, kind: input, shape index: {}]
  %s2 = inlined_call_operand.vmem [shape: f32[128,128], index: 2, kind: input, shape index: {}]
  %s3 = inlined_call_operand.vmem [shape: f32[1,128], index: 3, kind: input, shape index: {}]
  %s4 = inlined_call_operand.vmem [shape: f32[1,128], index: 4, kind: input, shape index: {}]
  %s5 = inlined_call_operand.vmem [shape: f32[128,128], index: 5, kind: input, shape index: {}]
  %s6 = inlined_call_operand.vmem [shape: f32[128,128], index: 6, kind: input, shape index: {}]
  %s7 = inlined_call_operand.hbm [shape: f32[8,128], index: 7, kind: output, shape index: {}]
  %s8 = sld [smem:[#allocation0]]
  $region46: #{morphological_max.1} parent=0
    _
  %s10 = ssub.s32 1, %s8
  %s11 = scalar_select 0, %s10, %s8
  $region1: #{morphological_max.1} parent=0
    #allocation4 [shape = 'u8[4096]{0}', space=vmem, size = 0x1000, scoped, tag = 'output window, operand 0, single buffered']
    #allocation5 [shape = 's32[1]{0}', space=sflag, size = 0x4, scoped, tag = 'scoped memory for morphological_max.1']
    %12 = vsyncpa [#allocation5], 0
    // Predicated region
    $region2: #{morphological_max.1} parent=1 // pred_check
      _
    $region3: #{morphological_max.1} parent=1 // pred_check_branch
      %14 = sbr.rel (0) target = $region5
    $region4: #{morphological_max.1} parent=1 // pred_region
      _
    $region5: #{morphological_max.1} parent=1 // pred_fallthru
      _
    // Predicated region
    $region6: #{morphological_max.1} parent=1 // pred_check
      _
    $region7: #{morphological_max.1} parent=1 // pred_check_branch
      %16 = sbr.rel (0) target = $region9
    $region8: #{morphological_max.1} parent=1 // pred_region
      _
    $region9: #{morphological_max.1} parent=1 // pred_fallthru
      _
    // Predicated region
    $region10: #{morphological_max.1} parent=1 // pred_check
      _
    $region11: #{morphological_max.1} parent=1 // pred_check_branch
      %18 = sbr.rel (0) target = $region13
    $region12: #{morphological_max.1} parent=1 // pred_region
      _
    $region13: #{morphological_max.1} parent=1 // pred_fallthru
      _
    // Predicated region
    $region14: #{morphological_max.1} parent=1 // pred_check
      _
    $region15: #{morphological_max.1} parent=1 // pred_check_branch
      %20 = sbr.rel (0) target = $region17
    $region16: #{morphological_max.1} parent=1 // pred_region
      _
    $region17: #{morphological_max.1} parent=1 // pred_fallthru
      _
    // Predicated region
    $region18: #{morphological_max.1} parent=1 // pred_check
      _
    $region19: #{morphological_max.1} parent=1 // pred_check_branch
      %22 = sbr.rel (0) target = $region21
    $region20: #{morphological_max.1} parent=1 // pred_region
      _
    $region21: #{morphological_max.1} parent=1 // pred_fallthru
      _
    // Predicated region
    $region22: #{morphological_max.1} parent=1 // pred_check
      _
    $region23: #{morphological_max.1} parent=1 // pred_check_branch
      %24 = sbr.rel (0) target = $region25
    $region24: #{morphological_max.1} parent=1 // pred_region
      _
    $region25: #{morphological_max.1} parent=1 // pred_fallthru
      _
    // Predicated region
    $region26: #{morphological_max.1} parent=1 // pred_check
      _
    $region27: #{morphological_max.1} parent=1 // pred_check_branch
      %26 = sbr.rel (0) target = $region29
    $region28: #{morphological_max.1} parent=1 // pred_region
      _
    $region29: #{morphological_max.1} parent=1 // pred_fallthru
      _
    %p27 = scmp.eq.s32.totalorder 0, 0
    // Predicated region
    $region30: #{morphological_max.1} parent=1 // pred_check
      %p28 = pneg %p27
    $region31: #{morphological_max.1} parent=1 // pred_check_branch
      %30 = sbr.rel (%p28) target = $region33
    $region32: #{morphological_max.1} parent=1 // pred_region
      %v31 = vld [vmem:[%s3] sm:$0x1]
      %v33 = vlaneseq
      %v34 = vshrl.u32 %v33, 7
      %v35 = vsub.s32 0, %v34
      %v36 = vrot.slane %v31, %v35
      %38 = vst [vmem:[#allocation2] sm:$0xff] %v36
      %v39 = vld [vmem:[%s4] sm:$0x1]
      %v41 = vlaneseq
      %v42 = vshrl.u32 %v41, 7
      %v43 = vsub.s32 0, %v42
      %v44 = vrot.slane %v39, %v43
      %46 = vst [vmem:[#allocation3] sm:$0xff] %v44
    $region33: #{morphological_max.1} parent=1 // pred_fallthru
      _
    %v47 = vld [vmem:[#allocation2] sm:$0xff]
    %v48 = vld [vmem:[#allocation3] sm:$0xff]
    %v49 = vld [vmem:[%s0] sm:$0xff]
    %v50 = vld [vmem:[%s1] sm:$0x1]
    %52 = vset.pattern.permute.xlu0 0
    %53 = vperm.xlu0 %52, %v49
    %v54 = vpop.permute.xlu0 %53
    %v56 = vlaneseq
    %v57 = vshrl.u32 %v56, 7
    %v58 = vsub.s32 0, %v57
    %v59 = vrot.slane %v50, %v58
    %v60 = vadd.f32 %v54, %v59
    %v61 = vmax.f32 %v47, %v60
    %v62 = vld [vmem:[%s2] sm:$0x1]
    %v63 = vlaneseq
    %v64 = vshrl.u32 %v63, 7
    %v65 = vsub.s32 0, %v64
    %v66 = vrot.slane %v62, %v65
    %v67 = vsub.f32 %v54, %v66
    %v68 = vmin.f32 %v48, %v67
    %v69 = vld [vmem:[%s1 + $0x1] sm:$0x1]
    %70 = vset.pattern.permute.xlu0 1
    %71 = vperm.xlu0 %70, %v49
    %v72 = vpop.permute.xlu0 %71
    %v74 = vlaneseq
    %v75 = vshrl.u32 %v74, 7
    %v76 = vsub.s32 0, %v75
    %v77 = vrot.slane %v69, %v76
    %v78 = vadd.f32 %v72, %v77
    %v79 = vmax.f32 %v61, %v78
    %v80 = vld [vmem:[%s2 + $0x1] sm:$0x1]
    %v81 = vlaneseq
    %v82 = vshrl.u32 %v81, 7
    %v83 = vsub.s32 0, %v82
    %v84 = vrot.slane %v80, %v83
    %v85 = vsub.f32 %v72, %v84
    %v86 = vmin.f32 %v68, %v85
    %v87 = vld [vmem:[%s1 + $0x2] sm:$0x1]
    %88 = vset.pattern.permute.xlu0 2
    %89 = vperm.xlu0 %88, %v49
    %v90 = vpop.permute.xlu0 %89
    %v92 = vlaneseq
    %v93 = vshrl.u32 %v92, 7
    %v94 = vsub.s32 0, %v93
    %v95 = vrot.slane %v87, %v94
    %v96 = vadd.f32 %v90, %v95
    %v97 = vmax.f32 %v79, %v96
    %v98 = vld [vmem:[%s2 + $0x2] sm:$0x1]
    %v99 = vlaneseq
    %v100 = vshrl.u32 %v99, 7
    %v101 = vsub.s32 0, %v100
    %v102 = vrot.slane %v98, %v101
    %v103 = vsub.f32 %v90, %v102
    %v104 = vmin.f32 %v86, %v103
    %v105 = vld [vmem:[%s1 + $0x3] sm:$0x1]
    %106 = vset.pattern.permute.xlu0 3
    %107 = vperm.xlu0 %106, %v49
    %v108 = vpop.permute.xlu0 %107
    %v110 = vlaneseq
    %v111 = vshrl.u32 %v110, 7
    %v112 = vsub.s32 0, %v111
    %v113 = vrot.slane %v105, %v112
    %v114 = vadd.f32 %v108, %v113
    %v115 = vmax.f32 %v97, %v114
    %v116 = vld [vmem:[%s2 + $0x3] sm:$0x1]
    %v117 = vlaneseq
    %v118 = vshrl.u32 %v117, 7
    %v119 = vsub.s32 0, %v118
    %v120 = vrot.slane %v116, %v119
    %v121 = vsub.f32 %v108, %v120
    %v122 = vmin.f32 %v104, %v121
    %v123 = vld [vmem:[%s1 + $0x4] sm:$0x1]
    %124 = vset.pattern.permute.xlu0 4
    %125 = vperm.xlu0 %124, %v49
    %v126 = vpop.permute.xlu0 %125
    %v128 = vlaneseq
    %v129 = vshrl.u32 %v128, 7
    %v130 = vsub.s32 0, %v129
    %v131 = vrot.slane %v123, %v130
    %v132 = vadd.f32 %v126, %v131
    %v133 = vmax.f32 %v115, %v132
    %v134 = vld [vmem:[%s2 + $0x4] sm:$0x1]
    %v135 = vlaneseq
    %v136 = vshrl.u32 %v135, 7
    %v137 = vsub.s32 0, %v136
    %v138 = vrot.slane %v134, %v137
    %v139 = vsub.f32 %v126, %v138
    %v140 = vmin.f32 %v122, %v139
    %v141 = vld [vmem:[%s1 + $0x5] sm:$0x1]
    %142 = vset.pattern.permute.xlu0 5
    %143 = vperm.xlu0 %142, %v49
    %v144 = vpop.permute.xlu0 %143
    %v146 = vlaneseq
    %v147 = vshrl.u32 %v146, 7
    %v148 = vsub.s32 0, %v147
    %v149 = vrot.slane %v141, %v148
    %v150 = vadd.f32 %v144, %v149
    %v151 = vmax.f32 %v133, %v150
    %v152 = vld [vmem:[%s2 + $0x5] sm:$0x1]
    %v153 = vlaneseq
    %v154 = vshrl.u32 %v153, 7
    %v155 = vsub.s32 0, %v154
    %v156 = vrot.slane %v152, %v155
    %v157 = vsub.f32 %v144, %v156
    %v158 = vmin.f32 %v140, %v157
    %v159 = vld [vmem:[%s1 + $0x6] sm:$0x1]
    %160 = vset.pattern.permute.xlu0 6
    %161 = vperm.xlu0 %160, %v49
    %v162 = vpop.permute.xlu0 %161
    %v164 = vlaneseq
    %v165 = vshrl.u32 %v164, 7
    %v166 = vsub.s32 0, %v165
    %v167 = vrot.slane %v159, %v166
    %v168 = vadd.f32 %v162, %v167
    %v169 = vmax.f32 %v151, %v168
    %v170 = vld [vmem:[%s2 + $0x6] sm:$0x1]
    %v171 = vlaneseq
    %v172 = vshrl.u32 %v171, 7
    %v173 = vsub.s32 0, %v172
    %v174 = vrot.slane %v170, %v173
    %v175 = vsub.f32 %v162, %v174
    %v176 = vmin.f32 %v158, %v175
    %v177 = vld [vmem:[%s1 + $0x7] sm:$0x1]
    %178 = vset.pattern.permute.xlu0 7
    %179 = vperm.xlu0 %178, %v49
    %v180 = vpop.permute.xlu0 %179
    %v182 = vlaneseq
    %v183 = vshrl.u32 %v182, 7
    %v184 = vsub.s32 0, %v183
    %v185 = vrot.slane %v177, %v184
    %v186 = vadd.f32 %v180, %v185
    %v187 = vmax.f32 %v169, %v186
    %v188 = vld [vmem:[%s2 + $0x7] sm:$0x1]
    %v189 = vlaneseq
    %v190 = vshrl.u32 %v189, 7
    %v191 = vsub.s32 0, %v190
    %v192 = vrot.slane %v188, %v191
    %v193 = vsub.f32 %v180, %v192
    %v194 = vmin.f32 %v176, %v193
    %v195 = vld [vmem:[%s1 + $0x8] sm:$0x1]
    %196 = vset.pattern.permute.xlu0 8
    %197 = vperm.xlu0 %196, %v49
    %v198 = vpop.permute.xlu0 %197
    %v200 = vlaneseq
    %v201 = vshrl.u32 %v200, 7
    %v202 = vsub.s32 0, %v201
    %v203 = vrot.slane %v195, %v202
    %v204 = vadd.f32 %v198, %v203
    %v205 = vmax.f32 %v187, %v204
    %v206 = vld [vmem:[%s2 + $0x8] sm:$0x1]
    %v207 = vlaneseq
    %v208 = vshrl.u32 %v207, 7
    %v209 = vsub.s32 0, %v208
    %v210 = vrot.slane %v206, %v209
    %v211 = vsub.f32 %v198, %v210
    %v212 = vmin.f32 %v194, %v211
    %v213 = vld [vmem:[%s1 + $0x9] sm:$0x1]
    %214 = vset.pattern.permute.xlu0 9
    %215 = vperm.xlu0 %214, %v49
    %v216 = vpop.permute.xlu0 %215
    %v218 = vlaneseq
    %v219 = vshrl.u32 %v218, 7
    %v220 = vsub.s32 0, %v219
    %v221 = vrot.slane %v213, %v220
    %v222 = vadd.f32 %v216, %v221
    %v223 = vmax.f32 %v205, %v222
    %v224 = vld [vmem:[%s2 + $0x9] sm:$0x1]
    %v225 = vlaneseq
    %v226 = vshrl.u32 %v225, 7
    %v227 = vsub.s32 0, %v226
    %v228 = vrot.slane %v224, %v227
    %v229 = vsub.f32 %v216, %v228
    %v230 = vmin.f32 %v212, %v229
    %v231 = vld [vmem:[%s1 + $0xa] sm:$0x1]
    %232 = vset.pattern.permute.xlu0 10
    %233 = vperm.xlu0 %232, %v49
    %v234 = vpop.permute.xlu0 %233
    %v236 = vlaneseq
    %v237 = vshrl.u32 %v236, 7
    %v238 = vsub.s32 0, %v237
    %v239 = vrot.slane %v231, %v238
    %v240 = vadd.f32 %v234, %v239
    %v241 = vmax.f32 %v223, %v240
    %v242 = vld [vmem:[%s2 + $0xa] sm:$0x1]
    %v243 = vlaneseq
    %v244 = vshrl.u32 %v243, 7
    %v245 = vsub.s32 0, %v244
    %v246 = vrot.slane %v242, %v245
    %v247 = vsub.f32 %v234, %v246
    %v248 = vmin.f32 %v230, %v247
    %v249 = vld [vmem:[%s1 + $0xb] sm:$0x1]
    %250 = vset.pattern.permute.xlu0 11
    %251 = vperm.xlu0 %250, %v49
    %v252 = vpop.permute.xlu0 %251
    %v254 = vlaneseq
    %v255 = vshrl.u32 %v254, 7
    %v256 = vsub.s32 0, %v255
    %v257 = vrot.slane %v249, %v256
    %v258 = vadd.f32 %v252, %v257
    %v259 = vmax.f32 %v241, %v258
    %v260 = vld [vmem:[%s2 + $0xb] sm:$0x1]
    %v261 = vlaneseq
    %v262 = vshrl.u32 %v261, 7
    %v263 = vsub.s32 0, %v262
    %v264 = vrot.slane %v260, %v263
    %v265 = vsub.f32 %v252, %v264
    %v266 = vmin.f32 %v248, %v265
    %v267 = vld [vmem:[%s1 + $0xc] sm:$0x1]
    %268 = vset.pattern.permute.xlu0 12
    %269 = vperm.xlu0 %268, %v49
    %v270 = vpop.permute.xlu0 %269
    %v272 = vlaneseq
    %v273 = vshrl.u32 %v272, 7
    %v274 = vsub.s32 0, %v273
    %v275 = vrot.slane %v267, %v274
    %v276 = vadd.f32 %v270, %v275
    %v277 = vmax.f32 %v259, %v276
    %v278 = vld [vmem:[%s2 + $0xc] sm:$0x1]
    %v279 = vlaneseq
    %v280 = vshrl.u32 %v279, 7
    %v281 = vsub.s32 0, %v280
    %v282 = vrot.slane %v278, %v281
    %v283 = vsub.f32 %v270, %v282
    %v284 = vmin.f32 %v266, %v283
    %v285 = vld [vmem:[%s1 + $0xd] sm:$0x1]
    %286 = vset.pattern.permute.xlu0 13
    %287 = vperm.xlu0 %286, %v49
    %v288 = vpop.permute.xlu0 %287
    %v290 = vlaneseq
    %v291 = vshrl.u32 %v290, 7
    %v292 = vsub.s32 0, %v291
    %v293 = vrot.slane %v285, %v292
    %v294 = vadd.f32 %v288, %v293
    %v295 = vmax.f32 %v277, %v294
    %v296 = vld [vmem:[%s2 + $0xd] sm:$0x1]
    %v297 = vlaneseq
    %v298 = vshrl.u32 %v297, 7
    %v299 = vsub.s32 0, %v298
    %v300 = vrot.slane %v296, %v299
    %v301 = vsub.f32 %v288, %v300
    %v302 = vmin.f32 %v284, %v301
    %v303 = vld [vmem:[%s1 + $0xe] sm:$0x1]
    %304 = vset.pattern.permute.xlu0 14
    %305 = vperm.xlu0 %304, %v49
    %v306 = vpop.permute.xlu0 %305
    %v308 = vlaneseq
    %v309 = vshrl.u32 %v308, 7
    %v310 = vsub.s32 0, %v309
    %v311 = vrot.slane %v303, %v310
    %v312 = vadd.f32 %v306, %v311
    %v313 = vmax.f32 %v295, %v312
    %v314 = vld [vmem:[%s2 + $0xe] sm:$0x1]
    %v315 = vlaneseq
    %v316 = vshrl.u32 %v315, 7
    %v317 = vsub.s32 0, %v316
    %v318 = vrot.slane %v314, %v317
    %v319 = vsub.f32 %v306, %v318
    %v320 = vmin.f32 %v302, %v319
    %v321 = vld [vmem:[%s1 + $0xf] sm:$0x1]
    %322 = vset.pattern.permute.xlu0 15
    %323 = vperm.xlu0 %322, %v49
    %v324 = vpop.permute.xlu0 %323
    %v326 = vlaneseq
    %v327 = vshrl.u32 %v326, 7
    %v328 = vsub.s32 0, %v327
    %v329 = vrot.slane %v321, %v328
    %v330 = vadd.f32 %v324, %v329
    %v331 = vmax.f32 %v313, %v330
    %v332 = vld [vmem:[%s2 + $0xf] sm:$0x1]
    %v333 = vlaneseq
    %v334 = vshrl.u32 %v333, 7
    %v335 = vsub.s32 0, %v334
    %v336 = vrot.slane %v332, %v335
    %v337 = vsub.f32 %v324, %v336
    %v338 = vmin.f32 %v320, %v337
    %v339 = vld [vmem:[%s1 + $0x10] sm:$0x1]
    %340 = vset.pattern.permute.xlu0 16
    %341 = vperm.xlu0 %340, %v49
    %v342 = vpop.permute.xlu0 %341
    %v344 = vlaneseq
    %v345 = vshrl.u32 %v344, 7
    %v346 = vsub.s32 0, %v345
    %v347 = vrot.slane %v339, %v346
    %v348 = vadd.f32 %v342, %v347
    %v349 = vmax.f32 %v331, %v348
    %v350 = vld [vmem:[%s2 + $0x10] sm:$0x1]
    %v351 = vlaneseq
    %v352 = vshrl.u32 %v351, 7
    %v353 = vsub.s32 0, %v352
    %v354 = vrot.slane %v350, %v353
    %v355 = vsub.f32 %v342, %v354
    %v356 = vmin.f32 %v338, %v355
    %v357 = vld [vmem:[%s1 + $0x11] sm:$0x1]
    %358 = vset.pattern.permute.xlu0 17
    %359 = vperm.xlu0 %358, %v49
    %v360 = vpop.permute.xlu0 %359
    %v362 = vlaneseq
    %v363 = vshrl.u32 %v362, 7
    %v364 = vsub.s32 0, %v363
    %v365 = vrot.slane %v357, %v364
    %v366 = vadd.f32 %v360, %v365
    %v367 = vmax.f32 %v349, %v366
    %v368 = vld [vmem:[%s2 + $0x11] sm:$0x1]
    %v369 = vlaneseq
    %v370 = vshrl.u32 %v369, 7
    %v371 = vsub.s32 0, %v370
    %v372 = vrot.slane %v368, %v371
    %v373 = vsub.f32 %v360, %v372
    %v374 = vmin.f32 %v356, %v373
    %v375 = vld [vmem:[%s1 + $0x12] sm:$0x1]
    %376 = vset.pattern.permute.xlu0 18
    %377 = vperm.xlu0 %376, %v49
    %v378 = vpop.permute.xlu0 %377
    %v380 = vlaneseq
    %v381 = vshrl.u32 %v380, 7
    %v382 = vsub.s32 0, %v381
    %v383 = vrot.slane %v375, %v382
    %v384 = vadd.f32 %v378, %v383
    %v385 = vmax.f32 %v367, %v384
    %v386 = vld [vmem:[%s2 + $0x12] sm:$0x1]
    %v387 = vlaneseq
    %v388 = vshrl.u32 %v387, 7
    %v389 = vsub.s32 0, %v388
    %v390 = vrot.slane %v386, %v389
    %v391 = vsub.f32 %v378, %v390
    %v392 = vmin.f32 %v374, %v391
    %v393 = vld [vmem:[%s1 + $0x13] sm:$0x1]
    %394 = vset.pattern.permute.xlu0 19
    %395 = vperm.xlu0 %394, %v49
    %v396 = vpop.permute.xlu0 %395
    %v398 = vlaneseq
    %v399 = vshrl.u32 %v398, 7
    %v400 = vsub.s32 0, %v399
    %v401 = vrot.slane %v393, %v400
    %v402 = vadd.f32 %v396, %v401
    %v403 = vmax.f32 %v385, %v402
    %v404 = vld [vmem:[%s2 + $0x13] sm:$0x1]
    %v405 = vlaneseq
    %v406 = vshrl.u32 %v405, 7
    %v407 = vsub.s32 0, %v406
    %v408 = vrot.slane %v404, %v407
    %v409 = vsub.f32 %v396, %v408
    %v410 = vmin.f32 %v392, %v409
    %v411 = vld [vmem:[%s1 + $0x14] sm:$0x1]
    %412 = vset.pattern.permute.xlu0 20
    %413 = vperm.xlu0 %412, %v49
    %v414 = vpop.permute.xlu0 %413
    %v416 = vlaneseq
    %v417 = vshrl.u32 %v416, 7
    %v418 = vsub.s32 0, %v417
    %v419 = vrot.slane %v411, %v418
    %v420 = vadd.f32 %v414, %v419
    %v421 = vmax.f32 %v403, %v420
    %v422 = vld [vmem:[%s2 + $0x14] sm:$0x1]
    %v423 = vlaneseq
    %v424 = vshrl.u32 %v423, 7
    %v425 = vsub.s32 0, %v424
    %v426 = vrot.slane %v422, %v425
    %v427 = vsub.f32 %v414, %v426
    %v428 = vmin.f32 %v410, %v427
    %v429 = vld [vmem:[%s1 + $0x15] sm:$0x1]
    %430 = vset.pattern.permute.xlu0 21
    %431 = vperm.xlu0 %430, %v49
    %v432 = vpop.permute.xlu0 %431
    %v434 = vlaneseq
    %v435 = vshrl.u32 %v434, 7
    %v436 = vsub.s32 0, %v435
    %v437 = vrot.slane %v429, %v436
    %v438 = vadd.f32 %v432, %v437
    %v439 = vmax.f32 %v421, %v438
    %v440 = vld [vmem:[%s2 + $0x15] sm:$0x1]
    %v441 = vlaneseq
    %v442 = vshrl.u32 %v441, 7
    %v443 = vsub.s32 0, %v442
    %v444 = vrot.slane %v440, %v443
    %v445 = vsub.f32 %v432, %v444
    %v446 = vmin.f32 %v428, %v445
    %v447 = vld [vmem:[%s1 + $0x16] sm:$0x1]
    %448 = vset.pattern.permute.xlu0 22
    %449 = vperm.xlu0 %448, %v49
    %v450 = vpop.permute.xlu0 %449
    %v452 = vlaneseq
    %v453 = vshrl.u32 %v452, 7
    %v454 = vsub.s32 0, %v453
    %v455 = vrot.slane %v447, %v454
    %v456 = vadd.f32 %v450, %v455
    %v457 = vmax.f32 %v439, %v456
    %v458 = vld [vmem:[%s2 + $0x16] sm:$0x1]
    %v459 = vlaneseq
    %v460 = vshrl.u32 %v459, 7
    %v461 = vsub.s32 0, %v460
    %v462 = vrot.slane %v458, %v461
    %v463 = vsub.f32 %v450, %v462
    %v464 = vmin.f32 %v446, %v463
    %v465 = vld [vmem:[%s1 + $0x17] sm:$0x1]
    %466 = vset.pattern.permute.xlu0 23
    %467 = vperm.xlu0 %466, %v49
    %v468 = vpop.permute.xlu0 %467
    %v470 = vlaneseq
    %v471 = vshrl.u32 %v470, 7
    %v472 = vsub.s32 0, %v471
    %v473 = vrot.slane %v465, %v472
    %v474 = vadd.f32 %v468, %v473
    %v475 = vmax.f32 %v457, %v474
    %v476 = vld [vmem:[%s2 + $0x17] sm:$0x1]
    %v477 = vlaneseq
    %v478 = vshrl.u32 %v477, 7
    %v479 = vsub.s32 0, %v478
    %v480 = vrot.slane %v476, %v479
    %v481 = vsub.f32 %v468, %v480
    %v482 = vmin.f32 %v464, %v481
    %v483 = vld [vmem:[%s1 + $0x18] sm:$0x1]
    %484 = vset.pattern.permute.xlu0 24
    %485 = vperm.xlu0 %484, %v49
    %v486 = vpop.permute.xlu0 %485
    %v488 = vlaneseq
    %v489 = vshrl.u32 %v488, 7
    %v490 = vsub.s32 0, %v489
    %v491 = vrot.slane %v483, %v490
    %v492 = vadd.f32 %v486, %v491
    %v493 = vmax.f32 %v475, %v492
    %v494 = vld [vmem:[%s2 + $0x18] sm:$0x1]
    %v495 = vlaneseq
    %v496 = vshrl.u32 %v495, 7
    %v497 = vsub.s32 0, %v496
    %v498 = vrot.slane %v494, %v497
    %v499 = vsub.f32 %v486, %v498
    %v500 = vmin.f32 %v482, %v499
    %v501 = vld [vmem:[%s1 + $0x19] sm:$0x1]
    %502 = vset.pattern.permute.xlu0 25
    %503 = vperm.xlu0 %502, %v49
    %v504 = vpop.permute.xlu0 %503
    %v506 = vlaneseq
    %v507 = vshrl.u32 %v506, 7
    %v508 = vsub.s32 0, %v507
    %v509 = vrot.slane %v501, %v508
    %v510 = vadd.f32 %v504, %v509
    %v511 = vmax.f32 %v493, %v510
    %v512 = vld [vmem:[%s2 + $0x19] sm:$0x1]
    %v513 = vlaneseq
    %v514 = vshrl.u32 %v513, 7
    %v515 = vsub.s32 0, %v514
    %v516 = vrot.slane %v512, %v515
    %v517 = vsub.f32 %v504, %v516
    %v518 = vmin.f32 %v500, %v517
    %v519 = vld [vmem:[%s1 + $0x1a] sm:$0x1]
    %520 = vset.pattern.permute.xlu0 26
    %521 = vperm.xlu0 %520, %v49
    %v522 = vpop.permute.xlu0 %521
    %v524 = vlaneseq
    %v525 = vshrl.u32 %v524, 7
    %v526 = vsub.s32 0, %v525
    %v527 = vrot.slane %v519, %v526
    %v528 = vadd.f32 %v522, %v527
    %v529 = vmax.f32 %v511, %v528
    %v530 = vld [vmem:[%s2 + $0x1a] sm:$0x1]
    %v531 = vlaneseq
    %v532 = vshrl.u32 %v531, 7
    %v533 = vsub.s32 0, %v532
    %v534 = vrot.slane %v530, %v533
    %v535 = vsub.f32 %v522, %v534
    %v536 = vmin.f32 %v518, %v535
    %v537 = vld [vmem:[%s1 + $0x1b] sm:$0x1]
    %538 = vset.pattern.permute.xlu0 27
    %539 = vperm.xlu0 %538, %v49
    %v540 = vpop.permute.xlu0 %539
    %v542 = vlaneseq
    %v543 = vshrl.u32 %v542, 7
    %v544 = vsub.s32 0, %v543
    %v545 = vrot.slane %v537, %v544
    %v546 = vadd.f32 %v540, %v545
    %v547 = vmax.f32 %v529, %v546
    %v548 = vld [vmem:[%s2 + $0x1b] sm:$0x1]
    %v549 = vlaneseq
    %v550 = vshrl.u32 %v549, 7
    %v551 = vsub.s32 0, %v550
    %v552 = vrot.slane %v548, %v551
    %v553 = vsub.f32 %v540, %v552
    %v554 = vmin.f32 %v536, %v553
    %v555 = vld [vmem:[%s1 + $0x1c] sm:$0x1]
    %556 = vset.pattern.permute.xlu0 28
    %557 = vperm.xlu0 %556, %v49
    %v558 = vpop.permute.xlu0 %557
    %v560 = vlaneseq
    %v561 = vshrl.u32 %v560, 7
    %v562 = vsub.s32 0, %v561
    %v563 = vrot.slane %v555, %v562
    %v564 = vadd.f32 %v558, %v563
    %v565 = vmax.f32 %v547, %v564
    %v566 = vld [vmem:[%s2 + $0x1c] sm:$0x1]
    %v567 = vlaneseq
    %v568 = vshrl.u32 %v567, 7
    %v569 = vsub.s32 0, %v568
    %v570 = vrot.slane %v566, %v569
    %v571 = vsub.f32 %v558, %v570
    %v572 = vmin.f32 %v554, %v571
    %v573 = vld [vmem:[%s1 + $0x1d] sm:$0x1]
    %574 = vset.pattern.permute.xlu0 29
    %575 = vperm.xlu0 %574, %v49
    %v576 = vpop.permute.xlu0 %575
    %v578 = vlaneseq
    %v579 = vshrl.u32 %v578, 7
    %v580 = vsub.s32 0, %v579
    %v581 = vrot.slane %v573, %v580
    %v582 = vadd.f32 %v576, %v581
    %v583 = vmax.f32 %v565, %v582
    %v584 = vld [vmem:[%s2 + $0x1d] sm:$0x1]
    %v585 = vlaneseq
    %v586 = vshrl.u32 %v585, 7
    %v587 = vsub.s32 0, %v586
    %v588 = vrot.slane %v584, %v587
    %v589 = vsub.f32 %v576, %v588
    %v590 = vmin.f32 %v572, %v589
    %v591 = vld [vmem:[%s1 + $0x1e] sm:$0x1]
    %592 = vset.pattern.permute.xlu0 30
    %593 = vperm.xlu0 %592, %v49
    %v594 = vpop.permute.xlu0 %593
    %v596 = vlaneseq
    %v597 = vshrl.u32 %v596, 7
    %v598 = vsub.s32 0, %v597
    %v599 = vrot.slane %v591, %v598
    %v600 = vadd.f32 %v594, %v599
    %v601 = vmax.f32 %v583, %v600
    %v602 = vld [vmem:[%s2 + $0x1e] sm:$0x1]
    %v603 = vlaneseq
    %v604 = vshrl.u32 %v603, 7
    %v605 = vsub.s32 0, %v604
    %v606 = vrot.slane %v602, %v605
    %v607 = vsub.f32 %v594, %v606
    %v608 = vmin.f32 %v590, %v607
    %v609 = vld [vmem:[%s1 + $0x1f] sm:$0x1]
    %610 = vset.pattern.permute.xlu0 31
    %611 = vperm.xlu0 %610, %v49
    %v612 = vpop.permute.xlu0 %611
    %v614 = vlaneseq
    %v615 = vshrl.u32 %v614, 7
    %v616 = vsub.s32 0, %v615
    %v617 = vrot.slane %v609, %v616
    %v618 = vadd.f32 %v612, %v617
    %v619 = vmax.f32 %v601, %v618
    %v620 = vld [vmem:[%s2 + $0x1f] sm:$0x1]
    %v621 = vlaneseq
    %v622 = vshrl.u32 %v621, 7
    %v623 = vsub.s32 0, %v622
    %v624 = vrot.slane %v620, %v623
    %v625 = vsub.f32 %v612, %v624
    %v626 = vmin.f32 %v608, %v625
    %v627 = vld [vmem:[%s1 + $0x20] sm:$0x1]
    %628 = vset.pattern.permute.xlu0 32
    %629 = vperm.xlu0 %628, %v49
    %v630 = vpop.permute.xlu0 %629
    %v632 = vlaneseq
    %v633 = vshrl.u32 %v632, 7
    %v634 = vsub.s32 0, %v633
    %v635 = vrot.slane %v627, %v634
    %v636 = vadd.f32 %v630, %v635
    %v637 = vmax.f32 %v619, %v636
    %v638 = vld [vmem:[%s2 + $0x20] sm:$0x1]
    %v639 = vlaneseq
    %v640 = vshrl.u32 %v639, 7
    %v641 = vsub.s32 0, %v640
    %v642 = vrot.slane %v638, %v641
    %v643 = vsub.f32 %v630, %v642
    %v644 = vmin.f32 %v626, %v643
    %v645 = vld [vmem:[%s1 + $0x21] sm:$0x1]
    %646 = vset.pattern.permute.xlu0 33
    %647 = vperm.xlu0 %646, %v49
    %v648 = vpop.permute.xlu0 %647
    %v650 = vlaneseq
    %v651 = vshrl.u32 %v650, 7
    %v652 = vsub.s32 0, %v651
    %v653 = vrot.slane %v645, %v652
    %v654 = vadd.f32 %v648, %v653
    %v655 = vmax.f32 %v637, %v654
    %v656 = vld [vmem:[%s2 + $0x21] sm:$0x1]
    %v657 = vlaneseq
    %v658 = vshrl.u32 %v657, 7
    %v659 = vsub.s32 0, %v658
    %v660 = vrot.slane %v656, %v659
    %v661 = vsub.f32 %v648, %v660
    %v662 = vmin.f32 %v644, %v661
    %v663 = vld [vmem:[%s1 + $0x22] sm:$0x1]
    %664 = vset.pattern.permute.xlu0 34
    %665 = vperm.xlu0 %664, %v49
    %v666 = vpop.permute.xlu0 %665
    %v668 = vlaneseq
    %v669 = vshrl.u32 %v668, 7
    %v670 = vsub.s32 0, %v669
    %v671 = vrot.slane %v663, %v670
    %v672 = vadd.f32 %v666, %v671
    %v673 = vmax.f32 %v655, %v672
    %v674 = vld [vmem:[%s2 + $0x22] sm:$0x1]
    %v675 = vlaneseq
    %v676 = vshrl.u32 %v675, 7
    %v677 = vsub.s32 0, %v676
    %v678 = vrot.slane %v674, %v677
    %v679 = vsub.f32 %v666, %v678
    %v680 = vmin.f32 %v662, %v679
    %v681 = vld [vmem:[%s1 + $0x23] sm:$0x1]
    %682 = vset.pattern.permute.xlu0 35
    %683 = vperm.xlu0 %682, %v49
    %v684 = vpop.permute.xlu0 %683
    %v686 = vlaneseq
    %v687 = vshrl.u32 %v686, 7
    %v688 = vsub.s32 0, %v687
    %v689 = vrot.slane %v681, %v688
    %v690 = vadd.f32 %v684, %v689
    %v691 = vmax.f32 %v673, %v690
    %v692 = vld [vmem:[%s2 + $0x23] sm:$0x1]
    %v693 = vlaneseq
    %v694 = vshrl.u32 %v693, 7
    %v695 = vsub.s32 0, %v694
    %v696 = vrot.slane %v692, %v695
    %v697 = vsub.f32 %v684, %v696
    %v698 = vmin.f32 %v680, %v697
    %v699 = vld [vmem:[%s1 + $0x24] sm:$0x1]
    %700 = vset.pattern.permute.xlu0 36
    %701 = vperm.xlu0 %700, %v49
    %v702 = vpop.permute.xlu0 %701
    %v704 = vlaneseq
    %v705 = vshrl.u32 %v704, 7
    %v706 = vsub.s32 0, %v705
    %v707 = vrot.slane %v699, %v706
    %v708 = vadd.f32 %v702, %v707
    %v709 = vmax.f32 %v691, %v708
    %v710 = vld [vmem:[%s2 + $0x24] sm:$0x1]
    %v711 = vlaneseq
    %v712 = vshrl.u32 %v711, 7
    %v713 = vsub.s32 0, %v712
    %v714 = vrot.slane %v710, %v713
    %v715 = vsub.f32 %v702, %v714
    %v716 = vmin.f32 %v698, %v715
    %v717 = vld [vmem:[%s1 + $0x25] sm:$0x1]
    %718 = vset.pattern.permute.xlu0 37
    %719 = vperm.xlu0 %718, %v49
    %v720 = vpop.permute.xlu0 %719
    %v722 = vlaneseq
    %v723 = vshrl.u32 %v722, 7
    %v724 = vsub.s32 0, %v723
    %v725 = vrot.slane %v717, %v724
    %v726 = vadd.f32 %v720, %v725
    %v727 = vmax.f32 %v709, %v726
    %v728 = vld [vmem:[%s2 + $0x25] sm:$0x1]
    %v729 = vlaneseq
    %v730 = vshrl.u32 %v729, 7
    %v731 = vsub.s32 0, %v730
    %v732 = vrot.slane %v728, %v731
    %v733 = vsub.f32 %v720, %v732
    %v734 = vmin.f32 %v716, %v733
    %v735 = vld [vmem:[%s1 + $0x26] sm:$0x1]
    %736 = vset.pattern.permute.xlu0 38
    %737 = vperm.xlu0 %736, %v49
    %v738 = vpop.permute.xlu0 %737
    %v740 = vlaneseq
    %v741 = vshrl.u32 %v740, 7
    %v742 = vsub.s32 0, %v741
    %v743 = vrot.slane %v735, %v742
    %v744 = vadd.f32 %v738, %v743
    %v745 = vmax.f32 %v727, %v744
    %v746 = vld [vmem:[%s2 + $0x26] sm:$0x1]
    %v747 = vlaneseq
    %v748 = vshrl.u32 %v747, 7
    %v749 = vsub.s32 0, %v748
    %v750 = vrot.slane %v746, %v749
    %v751 = vsub.f32 %v738, %v750
    %v752 = vmin.f32 %v734, %v751
    %v753 = vld [vmem:[%s1 + $0x27] sm:$0x1]
    %754 = vset.pattern.permute.xlu0 39
    %755 = vperm.xlu0 %754, %v49
    %v756 = vpop.permute.xlu0 %755
    %v758 = vlaneseq
    %v759 = vshrl.u32 %v758, 7
    %v760 = vsub.s32 0, %v759
    %v761 = vrot.slane %v753, %v760
    %v762 = vadd.f32 %v756, %v761
    %v763 = vmax.f32 %v745, %v762
    %v764 = vld [vmem:[%s2 + $0x27] sm:$0x1]
    %v765 = vlaneseq
    %v766 = vshrl.u32 %v765, 7
    %v767 = vsub.s32 0, %v766
    %v768 = vrot.slane %v764, %v767
    %v769 = vsub.f32 %v756, %v768
    %v770 = vmin.f32 %v752, %v769
    %v771 = vld [vmem:[%s1 + $0x28] sm:$0x1]
    %772 = vset.pattern.permute.xlu0 40
    %773 = vperm.xlu0 %772, %v49
    %v774 = vpop.permute.xlu0 %773
    %v776 = vlaneseq
    %v777 = vshrl.u32 %v776, 7
    %v778 = vsub.s32 0, %v777
    %v779 = vrot.slane %v771, %v778
    %v780 = vadd.f32 %v774, %v779
    %v781 = vmax.f32 %v763, %v780
    %v782 = vld [vmem:[%s2 + $0x28] sm:$0x1]
    %v783 = vlaneseq
    %v784 = vshrl.u32 %v783, 7
    %v785 = vsub.s32 0, %v784
    %v786 = vrot.slane %v782, %v785
    %v787 = vsub.f32 %v774, %v786
    %v788 = vmin.f32 %v770, %v787
    %v789 = vld [vmem:[%s1 + $0x29] sm:$0x1]
    %790 = vset.pattern.permute.xlu0 41
    %791 = vperm.xlu0 %790, %v49
    %v792 = vpop.permute.xlu0 %791
    %v794 = vlaneseq
    %v795 = vshrl.u32 %v794, 7
    %v796 = vsub.s32 0, %v795
    %v797 = vrot.slane %v789, %v796
    %v798 = vadd.f32 %v792, %v797
    %v799 = vmax.f32 %v781, %v798
    %v800 = vld [vmem:[%s2 + $0x29] sm:$0x1]
    %v801 = vlaneseq
    %v802 = vshrl.u32 %v801, 7
    %v803 = vsub.s32 0, %v802
    %v804 = vrot.slane %v800, %v803
    %v805 = vsub.f32 %v792, %v804
    %v806 = vmin.f32 %v788, %v805
    %v807 = vld [vmem:[%s1 + $0x2a] sm:$0x1]
    %808 = vset.pattern.permute.xlu0 42
    %809 = vperm.xlu0 %808, %v49
    %v810 = vpop.permute.xlu0 %809
    %v812 = vlaneseq
    %v813 = vshrl.u32 %v812, 7
    %v814 = vsub.s32 0, %v813
    %v815 = vrot.slane %v807, %v814
    %v816 = vadd.f32 %v810, %v815
    %v817 = vmax.f32 %v799, %v816
    %v818 = vld [vmem:[%s2 + $0x2a] sm:$0x1]
    %v819 = vlaneseq
    %v820 = vshrl.u32 %v819, 7
    %v821 = vsub.s32 0, %v820
    %v822 = vrot.slane %v818, %v821
    %v823 = vsub.f32 %v810, %v822
    %v824 = vmin.f32 %v806, %v823
    %v825 = vld [vmem:[%s1 + $0x2b] sm:$0x1]
    %826 = vset.pattern.permute.xlu0 43
    %827 = vperm.xlu0 %826, %v49
    %v828 = vpop.permute.xlu0 %827
    %v830 = vlaneseq
    %v831 = vshrl.u32 %v830, 7
    %v832 = vsub.s32 0, %v831
    %v833 = vrot.slane %v825, %v832
    %v834 = vadd.f32 %v828, %v833
    %v835 = vmax.f32 %v817, %v834
    %v836 = vld [vmem:[%s2 + $0x2b] sm:$0x1]
    %v837 = vlaneseq
    %v838 = vshrl.u32 %v837, 7
    %v839 = vsub.s32 0, %v838
    %v840 = vrot.slane %v836, %v839
    %v841 = vsub.f32 %v828, %v840
    %v842 = vmin.f32 %v824, %v841
    %v843 = vld [vmem:[%s1 + $0x2c] sm:$0x1]
    %844 = vset.pattern.permute.xlu0 44
    %845 = vperm.xlu0 %844, %v49
    %v846 = vpop.permute.xlu0 %845
    %v848 = vlaneseq
    %v849 = vshrl.u32 %v848, 7
    %v850 = vsub.s32 0, %v849
    %v851 = vrot.slane %v843, %v850
    %v852 = vadd.f32 %v846, %v851
    %v853 = vmax.f32 %v835, %v852
    %v854 = vld [vmem:[%s2 + $0x2c] sm:$0x1]
    %v855 = vlaneseq
    %v856 = vshrl.u32 %v855, 7
    %v857 = vsub.s32 0, %v856
    %v858 = vrot.slane %v854, %v857
    %v859 = vsub.f32 %v846, %v858
    %v860 = vmin.f32 %v842, %v859
    %v861 = vld [vmem:[%s1 + $0x2d] sm:$0x1]
    %862 = vset.pattern.permute.xlu0 45
    %863 = vperm.xlu0 %862, %v49
    %v864 = vpop.permute.xlu0 %863
    %v866 = vlaneseq
    %v867 = vshrl.u32 %v866, 7
    %v868 = vsub.s32 0, %v867
    %v869 = vrot.slane %v861, %v868
    %v870 = vadd.f32 %v864, %v869
    %v871 = vmax.f32 %v853, %v870
    %v872 = vld [vmem:[%s2 + $0x2d] sm:$0x1]
    %v873 = vlaneseq
    %v874 = vshrl.u32 %v873, 7
    %v875 = vsub.s32 0, %v874
    %v876 = vrot.slane %v872, %v875
    %v877 = vsub.f32 %v864, %v876
    %v878 = vmin.f32 %v860, %v877
    %v879 = vld [vmem:[%s1 + $0x2e] sm:$0x1]
    %880 = vset.pattern.permute.xlu0 46
    %881 = vperm.xlu0 %880, %v49
    %v882 = vpop.permute.xlu0 %881
    %v884 = vlaneseq
    %v885 = vshrl.u32 %v884, 7
    %v886 = vsub.s32 0, %v885
    %v887 = vrot.slane %v879, %v886
    %v888 = vadd.f32 %v882, %v887
    %v889 = vmax.f32 %v871, %v888
    %v890 = vld [vmem:[%s2 + $0x2e] sm:$0x1]
    %v891 = vlaneseq
    %v892 = vshrl.u32 %v891, 7
    %v893 = vsub.s32 0, %v892
    %v894 = vrot.slane %v890, %v893
    %v895 = vsub.f32 %v882, %v894
    %v896 = vmin.f32 %v878, %v895
    %v897 = vld [vmem:[%s1 + $0x2f] sm:$0x1]
    %898 = vset.pattern.permute.xlu0 47
    %899 = vperm.xlu0 %898, %v49
    %v900 = vpop.permute.xlu0 %899
    %v902 = vlaneseq
    %v903 = vshrl.u32 %v902, 7
    %v904 = vsub.s32 0, %v903
    %v905 = vrot.slane %v897, %v904
    %v906 = vadd.f32 %v900, %v905
    %v907 = vmax.f32 %v889, %v906
    %v908 = vld [vmem:[%s2 + $0x2f] sm:$0x1]
    %v909 = vlaneseq
    %v910 = vshrl.u32 %v909, 7
    %v911 = vsub.s32 0, %v910
    %v912 = vrot.slane %v908, %v911
    %v913 = vsub.f32 %v900, %v912
    %v914 = vmin.f32 %v896, %v913
    %v915 = vld [vmem:[%s1 + $0x30] sm:$0x1]
    %916 = vset.pattern.permute.xlu0 48
    %917 = vperm.xlu0 %916, %v49
    %v918 = vpop.permute.xlu0 %917
    %v920 = vlaneseq
    %v921 = vshrl.u32 %v920, 7
    %v922 = vsub.s32 0, %v921
    %v923 = vrot.slane %v915, %v922
    %v924 = vadd.f32 %v918, %v923
    %v925 = vmax.f32 %v907, %v924
    %v926 = vld [vmem:[%s2 + $0x30] sm:$0x1]
    %v927 = vlaneseq
    %v928 = vshrl.u32 %v927, 7
    %v929 = vsub.s32 0, %v928
    %v930 = vrot.slane %v926, %v929
    %v931 = vsub.f32 %v918, %v930
    %v932 = vmin.f32 %v914, %v931
    %v933 = vld [vmem:[%s1 + $0x31] sm:$0x1]
    %934 = vset.pattern.permute.xlu0 49
    %935 = vperm.xlu0 %934, %v49
    %v936 = vpop.permute.xlu0 %935
    %v938 = vlaneseq
    %v939 = vshrl.u32 %v938, 7
    %v940 = vsub.s32 0, %v939
    %v941 = vrot.slane %v933, %v940
    %v942 = vadd.f32 %v936, %v941
    %v943 = vmax.f32 %v925, %v942
    %v944 = vld [vmem:[%s2 + $0x31] sm:$0x1]
    %v945 = vlaneseq
    %v946 = vshrl.u32 %v945, 7
    %v947 = vsub.s32 0, %v946
    %v948 = vrot.slane %v944, %v947
    %v949 = vsub.f32 %v936, %v948
    %v950 = vmin.f32 %v932, %v949
    %v951 = vld [vmem:[%s1 + $0x32] sm:$0x1]
    %952 = vset.pattern.permute.xlu0 50
    %953 = vperm.xlu0 %952, %v49
    %v954 = vpop.permute.xlu0 %953
    %v956 = vlaneseq
    %v957 = vshrl.u32 %v956, 7
    %v958 = vsub.s32 0, %v957
    %v959 = vrot.slane %v951, %v958
    %v960 = vadd.f32 %v954, %v959
    %v961 = vmax.f32 %v943, %v960
    %v962 = vld [vmem:[%s2 + $0x32] sm:$0x1]
    %v963 = vlaneseq
    %v964 = vshrl.u32 %v963, 7
    %v965 = vsub.s32 0, %v964
    %v966 = vrot.slane %v962, %v965
    %v967 = vsub.f32 %v954, %v966
    %v968 = vmin.f32 %v950, %v967
    %v969 = vld [vmem:[%s1 + $0x33] sm:$0x1]
    %970 = vset.pattern.permute.xlu0 51
    %971 = vperm.xlu0 %970, %v49
    %v972 = vpop.permute.xlu0 %971
    %v974 = vlaneseq
    %v975 = vshrl.u32 %v974, 7
    %v976 = vsub.s32 0, %v975
    %v977 = vrot.slane %v969, %v976
    %v978 = vadd.f32 %v972, %v977
    %v979 = vmax.f32 %v961, %v978
    %v980 = vld [vmem:[%s2 + $0x33] sm:$0x1]
    %v981 = vlaneseq
    %v982 = vshrl.u32 %v981, 7
    %v983 = vsub.s32 0, %v982
    %v984 = vrot.slane %v980, %v983
    %v985 = vsub.f32 %v972, %v984
    %v986 = vmin.f32 %v968, %v985
    %v987 = vld [vmem:[%s1 + $0x34] sm:$0x1]
    %988 = vset.pattern.permute.xlu0 52
    %989 = vperm.xlu0 %988, %v49
    %v990 = vpop.permute.xlu0 %989
    %v992 = vlaneseq
    %v993 = vshrl.u32 %v992, 7
    %v994 = vsub.s32 0, %v993
    %v995 = vrot.slane %v987, %v994
    %v996 = vadd.f32 %v990, %v995
    %v997 = vmax.f32 %v979, %v996
    %v998 = vld [vmem:[%s2 + $0x34] sm:$0x1]
    %v999 = vlaneseq
    %v1000 = vshrl.u32 %v999, 7
    %v1001 = vsub.s32 0, %v1000
    %v1002 = vrot.slane %v998, %v1001
    %v1003 = vsub.f32 %v990, %v1002
    %v1004 = vmin.f32 %v986, %v1003
    %v1005 = vld [vmem:[%s1 + $0x35] sm:$0x1]
    %1006 = vset.pattern.permute.xlu0 53
    %1007 = vperm.xlu0 %1006, %v49
    %v1008 = vpop.permute.xlu0 %1007
    %v1010 = vlaneseq
    %v1011 = vshrl.u32 %v1010, 7
    %v1012 = vsub.s32 0, %v1011
    %v1013 = vrot.slane %v1005, %v1012
    %v1014 = vadd.f32 %v1008, %v1013
    %v1015 = vmax.f32 %v997, %v1014
    %v1016 = vld [vmem:[%s2 + $0x35] sm:$0x1]
    %v1017 = vlaneseq
    %v1018 = vshrl.u32 %v1017, 7
    %v1019 = vsub.s32 0, %v1018
    %v1020 = vrot.slane %v1016, %v1019
    %v1021 = vsub.f32 %v1008, %v1020
    %v1022 = vmin.f32 %v1004, %v1021
    %v1023 = vld [vmem:[%s1 + $0x36] sm:$0x1]
    %1024 = vset.pattern.permute.xlu0 54
    %1025 = vperm.xlu0 %1024, %v49
    %v1026 = vpop.permute.xlu0 %1025
    %v1028 = vlaneseq
    %v1029 = vshrl.u32 %v1028, 7
    %v1030 = vsub.s32 0, %v1029
    %v1031 = vrot.slane %v1023, %v1030
    %v1032 = vadd.f32 %v1026, %v1031
    %v1033 = vmax.f32 %v1015, %v1032
    %v1034 = vld [vmem:[%s2 + $0x36] sm:$0x1]
    %v1035 = vlaneseq
    %v1036 = vshrl.u32 %v1035, 7
    %v1037 = vsub.s32 0, %v1036
    %v1038 = vrot.slane %v1034, %v1037
    %v1039 = vsub.f32 %v1026, %v1038
    %v1040 = vmin.f32 %v1022, %v1039
    %v1041 = vld [vmem:[%s1 + $0x37] sm:$0x1]
    %1042 = vset.pattern.permute.xlu0 55
    %1043 = vperm.xlu0 %1042, %v49
    %v1044 = vpop.permute.xlu0 %1043
    %v1046 = vlaneseq
    %v1047 = vshrl.u32 %v1046, 7
    %v1048 = vsub.s32 0, %v1047
    %v1049 = vrot.slane %v1041, %v1048
    %v1050 = vadd.f32 %v1044, %v1049
    %v1051 = vmax.f32 %v1033, %v1050
    %v1052 = vld [vmem:[%s2 + $0x37] sm:$0x1]
    %v1053 = vlaneseq
    %v1054 = vshrl.u32 %v1053, 7
    %v1055 = vsub.s32 0, %v1054
    %v1056 = vrot.slane %v1052, %v1055
    %v1057 = vsub.f32 %v1044, %v1056
    %v1058 = vmin.f32 %v1040, %v1057
    %v1059 = vld [vmem:[%s1 + $0x38] sm:$0x1]
    %1060 = vset.pattern.permute.xlu0 56
    %1061 = vperm.xlu0 %1060, %v49
    %v1062 = vpop.permute.xlu0 %1061
    %v1064 = vlaneseq
    %v1065 = vshrl.u32 %v1064, 7
    %v1066 = vsub.s32 0, %v1065
    %v1067 = vrot.slane %v1059, %v1066
    %v1068 = vadd.f32 %v1062, %v1067
    %v1069 = vmax.f32 %v1051, %v1068
    %v1070 = vld [vmem:[%s2 + $0x38] sm:$0x1]
    %v1071 = vlaneseq
    %v1072 = vshrl.u32 %v1071, 7
    %v1073 = vsub.s32 0, %v1072
    %v1074 = vrot.slane %v1070, %v1073
    %v1075 = vsub.f32 %v1062, %v1074
    %v1076 = vmin.f32 %v1058, %v1075
    %v1077 = vld [vmem:[%s1 + $0x39] sm:$0x1]
    %1078 = vset.pattern.permute.xlu0 57
    %1079 = vperm.xlu0 %1078, %v49
    %v1080 = vpop.permute.xlu0 %1079
    %v1082 = vlaneseq
    %v1083 = vshrl.u32 %v1082, 7
    %v1084 = vsub.s32 0, %v1083
    %v1085 = vrot.slane %v1077, %v1084
    %v1086 = vadd.f32 %v1080, %v1085
    %v1087 = vmax.f32 %v1069, %v1086
    %v1088 = vld [vmem:[%s2 + $0x39] sm:$0x1]
    %v1089 = vlaneseq
    %v1090 = vshrl.u32 %v1089, 7
    %v1091 = vsub.s32 0, %v1090
    %v1092 = vrot.slane %v1088, %v1091
    %v1093 = vsub.f32 %v1080, %v1092
    %v1094 = vmin.f32 %v1076, %v1093
    %v1095 = vld [vmem:[%s1 + $0x3a] sm:$0x1]
    %1096 = vset.pattern.permute.xlu0 58
    %1097 = vperm.xlu0 %1096, %v49
    %v1098 = vpop.permute.xlu0 %1097
    %v1100 = vlaneseq
    %v1101 = vshrl.u32 %v1100, 7
    %v1102 = vsub.s32 0, %v1101
    %v1103 = vrot.slane %v1095, %v1102
    %v1104 = vadd.f32 %v1098, %v1103
    %v1105 = vmax.f32 %v1087, %v1104
    %v1106 = vld [vmem:[%s2 + $0x3a] sm:$0x1]
    %v1107 = vlaneseq
    %v1108 = vshrl.u32 %v1107, 7
    %v1109 = vsub.s32 0, %v1108
    %v1110 = vrot.slane %v1106, %v1109
    %v1111 = vsub.f32 %v1098, %v1110
    %v1112 = vmin.f32 %v1094, %v1111
    %v1113 = vld [vmem:[%s1 + $0x3b] sm:$0x1]
    %1114 = vset.pattern.permute.xlu0 59
    %1115 = vperm.xlu0 %1114, %v49
    %v1116 = vpop.permute.xlu0 %1115
    %v1118 = vlaneseq
    %v1119 = vshrl.u32 %v1118, 7
    %v1120 = vsub.s32 0, %v1119
    %v1121 = vrot.slane %v1113, %v1120
    %v1122 = vadd.f32 %v1116, %v1121
    %v1123 = vmax.f32 %v1105, %v1122
    %v1124 = vld [vmem:[%s2 + $0x3b] sm:$0x1]
    %v1125 = vlaneseq
    %v1126 = vshrl.u32 %v1125, 7
    %v1127 = vsub.s32 0, %v1126
    %v1128 = vrot.slane %v1124, %v1127
    %v1129 = vsub.f32 %v1116, %v1128
    %v1130 = vmin.f32 %v1112, %v1129
    %v1131 = vld [vmem:[%s1 + $0x3c] sm:$0x1]
    %1132 = vset.pattern.permute.xlu0 60
    %1133 = vperm.xlu0 %1132, %v49
    %v1134 = vpop.permute.xlu0 %1133
    %v1136 = vlaneseq
    %v1137 = vshrl.u32 %v1136, 7
    %v1138 = vsub.s32 0, %v1137
    %v1139 = vrot.slane %v1131, %v1138
    %v1140 = vadd.f32 %v1134, %v1139
    %v1141 = vmax.f32 %v1123, %v1140
    %v1142 = vld [vmem:[%s2 + $0x3c] sm:$0x1]
    %v1143 = vlaneseq
    %v1144 = vshrl.u32 %v1143, 7
    %v1145 = vsub.s32 0, %v1144
    %v1146 = vrot.slane %v1142, %v1145
    %v1147 = vsub.f32 %v1134, %v1146
    %v1148 = vmin.f32 %v1130, %v1147
    %v1149 = vld [vmem:[%s1 + $0x3d] sm:$0x1]
    %1150 = vset.pattern.permute.xlu0 61
    %1151 = vperm.xlu0 %1150, %v49
    %v1152 = vpop.permute.xlu0 %1151
    %v1154 = vlaneseq
    %v1155 = vshrl.u32 %v1154, 7
    %v1156 = vsub.s32 0, %v1155
    %v1157 = vrot.slane %v1149, %v1156
    %v1158 = vadd.f32 %v1152, %v1157
    %v1159 = vmax.f32 %v1141, %v1158
    %v1160 = vld [vmem:[%s2 + $0x3d] sm:$0x1]
    %v1161 = vlaneseq
    %v1162 = vshrl.u32 %v1161, 7
    %v1163 = vsub.s32 0, %v1162
    %v1164 = vrot.slane %v1160, %v1163
    %v1165 = vsub.f32 %v1152, %v1164
    %v1166 = vmin.f32 %v1148, %v1165
    %v1167 = vld [vmem:[%s1 + $0x3e] sm:$0x1]
    %1168 = vset.pattern.permute.xlu0 62
    %1169 = vperm.xlu0 %1168, %v49
    %v1170 = vpop.permute.xlu0 %1169
    %v1172 = vlaneseq
    %v1173 = vshrl.u32 %v1172, 7
    %v1174 = vsub.s32 0, %v1173
    %v1175 = vrot.slane %v1167, %v1174
    %v1176 = vadd.f32 %v1170, %v1175
    %v1177 = vmax.f32 %v1159, %v1176
    %v1178 = vld [vmem:[%s2 + $0x3e] sm:$0x1]
    %v1179 = vlaneseq
    %v1180 = vshrl.u32 %v1179, 7
    %v1181 = vsub.s32 0, %v1180
    %v1182 = vrot.slane %v1178, %v1181
    %v1183 = vsub.f32 %v1170, %v1182
    %v1184 = vmin.f32 %v1166, %v1183
    %v1185 = vld [vmem:[%s1 + $0x3f] sm:$0x1]
    %1186 = vset.pattern.permute.xlu0 63
    %1187 = vperm.xlu0 %1186, %v49
    %v1188 = vpop.permute.xlu0 %1187
    %v1190 = vlaneseq
    %v1191 = vshrl.u32 %v1190, 7
    %v1192 = vsub.s32 0, %v1191
    %v1193 = vrot.slane %v1185, %v1192
    %v1194 = vadd.f32 %v1188, %v1193
    %v1195 = vmax.f32 %v1177, %v1194
    %v1196 = vld [vmem:[%s2 + $0x3f] sm:$0x1]
    %v1197 = vlaneseq
    %v1198 = vshrl.u32 %v1197, 7
    %v1199 = vsub.s32 0, %v1198
    %v1200 = vrot.slane %v1196, %v1199
    %v1201 = vsub.f32 %v1188, %v1200
    %v1202 = vmin.f32 %v1184, %v1201
    %v1203 = vld [vmem:[%s1 + $0x40] sm:$0x1]
    %1204 = vset.pattern.permute.xlu0 64
    %1205 = vperm.xlu0 %1204, %v49
    %v1206 = vpop.permute.xlu0 %1205
    %v1208 = vlaneseq
    %v1209 = vshrl.u32 %v1208, 7
    %v1210 = vsub.s32 0, %v1209
    %v1211 = vrot.slane %v1203, %v1210
    %v1212 = vadd.f32 %v1206, %v1211
    %v1213 = vmax.f32 %v1195, %v1212
    %v1214 = vld [vmem:[%s2 + $0x40] sm:$0x1]
    %v1215 = vlaneseq
    %v1216 = vshrl.u32 %v1215, 7
    %v1217 = vsub.s32 0, %v1216
    %v1218 = vrot.slane %v1214, %v1217
    %v1219 = vsub.f32 %v1206, %v1218
    %v1220 = vmin.f32 %v1202, %v1219
    %v1221 = vld [vmem:[%s1 + $0x41] sm:$0x1]
    %1222 = vset.pattern.permute.xlu0 65
    %1223 = vperm.xlu0 %1222, %v49
    %v1224 = vpop.permute.xlu0 %1223
    %v1226 = vlaneseq
    %v1227 = vshrl.u32 %v1226, 7
    %v1228 = vsub.s32 0, %v1227
    %v1229 = vrot.slane %v1221, %v1228
    %v1230 = vadd.f32 %v1224, %v1229
    %v1231 = vmax.f32 %v1213, %v1230
    %v1232 = vld [vmem:[%s2 + $0x41] sm:$0x1]
    %v1233 = vlaneseq
    %v1234 = vshrl.u32 %v1233, 7
    %v1235 = vsub.s32 0, %v1234
    %v1236 = vrot.slane %v1232, %v1235
    %v1237 = vsub.f32 %v1224, %v1236
    %v1238 = vmin.f32 %v1220, %v1237
    %v1239 = vld [vmem:[%s1 + $0x42] sm:$0x1]
    %1240 = vset.pattern.permute.xlu0 66
    %1241 = vperm.xlu0 %1240, %v49
    %v1242 = vpop.permute.xlu0 %1241
    %v1244 = vlaneseq
    %v1245 = vshrl.u32 %v1244, 7
    %v1246 = vsub.s32 0, %v1245
    %v1247 = vrot.slane %v1239, %v1246
    %v1248 = vadd.f32 %v1242, %v1247
    %v1249 = vmax.f32 %v1231, %v1248
    %v1250 = vld [vmem:[%s2 + $0x42] sm:$0x1]
    %v1251 = vlaneseq
    %v1252 = vshrl.u32 %v1251, 7
    %v1253 = vsub.s32 0, %v1252
    %v1254 = vrot.slane %v1250, %v1253
    %v1255 = vsub.f32 %v1242, %v1254
    %v1256 = vmin.f32 %v1238, %v1255
    %v1257 = vld [vmem:[%s1 + $0x43] sm:$0x1]
    %1258 = vset.pattern.permute.xlu0 67
    %1259 = vperm.xlu0 %1258, %v49
    %v1260 = vpop.permute.xlu0 %1259
    %v1262 = vlaneseq
    %v1263 = vshrl.u32 %v1262, 7
    %v1264 = vsub.s32 0, %v1263
    %v1265 = vrot.slane %v1257, %v1264
    %v1266 = vadd.f32 %v1260, %v1265
    %v1267 = vmax.f32 %v1249, %v1266
    %v1268 = vld [vmem:[%s2 + $0x43] sm:$0x1]
    %v1269 = vlaneseq
    %v1270 = vshrl.u32 %v1269, 7
    %v1271 = vsub.s32 0, %v1270
    %v1272 = vrot.slane %v1268, %v1271
    %v1273 = vsub.f32 %v1260, %v1272
    %v1274 = vmin.f32 %v1256, %v1273
    %v1275 = vld [vmem:[%s1 + $0x44] sm:$0x1]
    %1276 = vset.pattern.permute.xlu0 68
    %1277 = vperm.xlu0 %1276, %v49
    %v1278 = vpop.permute.xlu0 %1277
    %v1280 = vlaneseq
    %v1281 = vshrl.u32 %v1280, 7
    %v1282 = vsub.s32 0, %v1281
    %v1283 = vrot.slane %v1275, %v1282
    %v1284 = vadd.f32 %v1278, %v1283
    %v1285 = vmax.f32 %v1267, %v1284
    %v1286 = vld [vmem:[%s2 + $0x44] sm:$0x1]
    %v1287 = vlaneseq
    %v1288 = vshrl.u32 %v1287, 7
    %v1289 = vsub.s32 0, %v1288
    %v1290 = vrot.slane %v1286, %v1289
    %v1291 = vsub.f32 %v1278, %v1290
    %v1292 = vmin.f32 %v1274, %v1291
    %v1293 = vld [vmem:[%s1 + $0x45] sm:$0x1]
    %1294 = vset.pattern.permute.xlu0 69
    %1295 = vperm.xlu0 %1294, %v49
    %v1296 = vpop.permute.xlu0 %1295
    %v1298 = vlaneseq
    %v1299 = vshrl.u32 %v1298, 7
    %v1300 = vsub.s32 0, %v1299
    %v1301 = vrot.slane %v1293, %v1300
    %v1302 = vadd.f32 %v1296, %v1301
    %v1303 = vmax.f32 %v1285, %v1302
    %v1304 = vld [vmem:[%s2 + $0x45] sm:$0x1]
    %v1305 = vlaneseq
    %v1306 = vshrl.u32 %v1305, 7
    %v1307 = vsub.s32 0, %v1306
    %v1308 = vrot.slane %v1304, %v1307
    %v1309 = vsub.f32 %v1296, %v1308
    %v1310 = vmin.f32 %v1292, %v1309
    %v1311 = vld [vmem:[%s1 + $0x46] sm:$0x1]
    %1312 = vset.pattern.permute.xlu0 70
    %1313 = vperm.xlu0 %1312, %v49
    %v1314 = vpop.permute.xlu0 %1313
    %v1316 = vlaneseq
    %v1317 = vshrl.u32 %v1316, 7
    %v1318 = vsub.s32 0, %v1317
    %v1319 = vrot.slane %v1311, %v1318
    %v1320 = vadd.f32 %v1314, %v1319
    %v1321 = vmax.f32 %v1303, %v1320
    %v1322 = vld [vmem:[%s2 + $0x46] sm:$0x1]
    %v1323 = vlaneseq
    %v1324 = vshrl.u32 %v1323, 7
    %v1325 = vsub.s32 0, %v1324
    %v1326 = vrot.slane %v1322, %v1325
    %v1327 = vsub.f32 %v1314, %v1326
    %v1328 = vmin.f32 %v1310, %v1327
    %v1329 = vld [vmem:[%s1 + $0x47] sm:$0x1]
    %1330 = vset.pattern.permute.xlu0 71
    %1331 = vperm.xlu0 %1330, %v49
    %v1332 = vpop.permute.xlu0 %1331
    %v1334 = vlaneseq
    %v1335 = vshrl.u32 %v1334, 7
    %v1336 = vsub.s32 0, %v1335
    %v1337 = vrot.slane %v1329, %v1336
    %v1338 = vadd.f32 %v1332, %v1337
    %v1339 = vmax.f32 %v1321, %v1338
    %v1340 = vld [vmem:[%s2 + $0x47] sm:$0x1]
    %v1341 = vlaneseq
    %v1342 = vshrl.u32 %v1341, 7
    %v1343 = vsub.s32 0, %v1342
    %v1344 = vrot.slane %v1340, %v1343
    %v1345 = vsub.f32 %v1332, %v1344
    %v1346 = vmin.f32 %v1328, %v1345
    %v1347 = vld [vmem:[%s1 + $0x48] sm:$0x1]
    %1348 = vset.pattern.permute.xlu0 72
    %1349 = vperm.xlu0 %1348, %v49
    %v1350 = vpop.permute.xlu0 %1349
    %v1352 = vlaneseq
    %v1353 = vshrl.u32 %v1352, 7
    %v1354 = vsub.s32 0, %v1353
    %v1355 = vrot.slane %v1347, %v1354
    %v1356 = vadd.f32 %v1350, %v1355
    %v1357 = vmax.f32 %v1339, %v1356
    %v1358 = vld [vmem:[%s2 + $0x48] sm:$0x1]
    %v1359 = vlaneseq
    %v1360 = vshrl.u32 %v1359, 7
    %v1361 = vsub.s32 0, %v1360
    %v1362 = vrot.slane %v1358, %v1361
    %v1363 = vsub.f32 %v1350, %v1362
    %v1364 = vmin.f32 %v1346, %v1363
    %v1365 = vld [vmem:[%s1 + $0x49] sm:$0x1]
    %1366 = vset.pattern.permute.xlu0 73
    %1367 = vperm.xlu0 %1366, %v49
    %v1368 = vpop.permute.xlu0 %1367
    %v1370 = vlaneseq
    %v1371 = vshrl.u32 %v1370, 7
    %v1372 = vsub.s32 0, %v1371
    %v1373 = vrot.slane %v1365, %v1372
    %v1374 = vadd.f32 %v1368, %v1373
    %v1375 = vmax.f32 %v1357, %v1374
    %v1376 = vld [vmem:[%s2 + $0x49] sm:$0x1]
    %v1377 = vlaneseq
    %v1378 = vshrl.u32 %v1377, 7
    %v1379 = vsub.s32 0, %v1378
    %v1380 = vrot.slane %v1376, %v1379
    %v1381 = vsub.f32 %v1368, %v1380
    %v1382 = vmin.f32 %v1364, %v1381
    %v1383 = vld [vmem:[%s1 + $0x4a] sm:$0x1]
    %1384 = vset.pattern.permute.xlu0 74
    %1385 = vperm.xlu0 %1384, %v49
    %v1386 = vpop.permute.xlu0 %1385
    %v1388 = vlaneseq
    %v1389 = vshrl.u32 %v1388, 7
    %v1390 = vsub.s32 0, %v1389
    %v1391 = vrot.slane %v1383, %v1390
    %v1392 = vadd.f32 %v1386, %v1391
    %v1393 = vmax.f32 %v1375, %v1392
    %v1394 = vld [vmem:[%s2 + $0x4a] sm:$0x1]
    %v1395 = vlaneseq
    %v1396 = vshrl.u32 %v1395, 7
    %v1397 = vsub.s32 0, %v1396
    %v1398 = vrot.slane %v1394, %v1397
    %v1399 = vsub.f32 %v1386, %v1398
    %v1400 = vmin.f32 %v1382, %v1399
    %v1401 = vld [vmem:[%s1 + $0x4b] sm:$0x1]
    %1402 = vset.pattern.permute.xlu0 75
    %1403 = vperm.xlu0 %1402, %v49
    %v1404 = vpop.permute.xlu0 %1403
    %v1406 = vlaneseq
    %v1407 = vshrl.u32 %v1406, 7
    %v1408 = vsub.s32 0, %v1407
    %v1409 = vrot.slane %v1401, %v1408
    %v1410 = vadd.f32 %v1404, %v1409
    %v1411 = vmax.f32 %v1393, %v1410
    %v1412 = vld [vmem:[%s2 + $0x4b] sm:$0x1]
    %v1413 = vlaneseq
    %v1414 = vshrl.u32 %v1413, 7
    %v1415 = vsub.s32 0, %v1414
    %v1416 = vrot.slane %v1412, %v1415
    %v1417 = vsub.f32 %v1404, %v1416
    %v1418 = vmin.f32 %v1400, %v1417
    %v1419 = vld [vmem:[%s1 + $0x4c] sm:$0x1]
    %1420 = vset.pattern.permute.xlu0 76
    %1421 = vperm.xlu0 %1420, %v49
    %v1422 = vpop.permute.xlu0 %1421
    %v1424 = vlaneseq
    %v1425 = vshrl.u32 %v1424, 7
    %v1426 = vsub.s32 0, %v1425
    %v1427 = vrot.slane %v1419, %v1426
    %v1428 = vadd.f32 %v1422, %v1427
    %v1429 = vmax.f32 %v1411, %v1428
    %v1430 = vld [vmem:[%s2 + $0x4c] sm:$0x1]
    %v1431 = vlaneseq
    %v1432 = vshrl.u32 %v1431, 7
    %v1433 = vsub.s32 0, %v1432
    %v1434 = vrot.slane %v1430, %v1433
    %v1435 = vsub.f32 %v1422, %v1434
    %v1436 = vmin.f32 %v1418, %v1435
    %v1437 = vld [vmem:[%s1 + $0x4d] sm:$0x1]
    %1438 = vset.pattern.permute.xlu0 77
    %1439 = vperm.xlu0 %1438, %v49
    %v1440 = vpop.permute.xlu0 %1439
    %v1442 = vlaneseq
    %v1443 = vshrl.u32 %v1442, 7
    %v1444 = vsub.s32 0, %v1443
    %v1445 = vrot.slane %v1437, %v1444
    %v1446 = vadd.f32 %v1440, %v1445
    %v1447 = vmax.f32 %v1429, %v1446
    %v1448 = vld [vmem:[%s2 + $0x4d] sm:$0x1]
    %v1449 = vlaneseq
    %v1450 = vshrl.u32 %v1449, 7
    %v1451 = vsub.s32 0, %v1450
    %v1452 = vrot.slane %v1448, %v1451
    %v1453 = vsub.f32 %v1440, %v1452
    %v1454 = vmin.f32 %v1436, %v1453
    %v1455 = vld [vmem:[%s1 + $0x4e] sm:$0x1]
    %1456 = vset.pattern.permute.xlu0 78
    %1457 = vperm.xlu0 %1456, %v49
    %v1458 = vpop.permute.xlu0 %1457
    %v1460 = vlaneseq
    %v1461 = vshrl.u32 %v1460, 7
    %v1462 = vsub.s32 0, %v1461
    %v1463 = vrot.slane %v1455, %v1462
    %v1464 = vadd.f32 %v1458, %v1463
    %v1465 = vmax.f32 %v1447, %v1464
    %v1466 = vld [vmem:[%s2 + $0x4e] sm:$0x1]
    %v1467 = vlaneseq
    %v1468 = vshrl.u32 %v1467, 7
    %v1469 = vsub.s32 0, %v1468
    %v1470 = vrot.slane %v1466, %v1469
    %v1471 = vsub.f32 %v1458, %v1470
    %v1472 = vmin.f32 %v1454, %v1471
    %v1473 = vld [vmem:[%s1 + $0x4f] sm:$0x1]
    %1474 = vset.pattern.permute.xlu0 79
    %1475 = vperm.xlu0 %1474, %v49
    %v1476 = vpop.permute.xlu0 %1475
    %v1478 = vlaneseq
    %v1479 = vshrl.u32 %v1478, 7
    %v1480 = vsub.s32 0, %v1479
    %v1481 = vrot.slane %v1473, %v1480
    %v1482 = vadd.f32 %v1476, %v1481
    %v1483 = vmax.f32 %v1465, %v1482
    %v1484 = vld [vmem:[%s2 + $0x4f] sm:$0x1]
    %v1485 = vlaneseq
    %v1486 = vshrl.u32 %v1485, 7
    %v1487 = vsub.s32 0, %v1486
    %v1488 = vrot.slane %v1484, %v1487
    %v1489 = vsub.f32 %v1476, %v1488
    %v1490 = vmin.f32 %v1472, %v1489
    %v1491 = vld [vmem:[%s1 + $0x50] sm:$0x1]
    %1492 = vset.pattern.permute.xlu0 80
    %1493 = vperm.xlu0 %1492, %v49
    %v1494 = vpop.permute.xlu0 %1493
    %v1496 = vlaneseq
    %v1497 = vshrl.u32 %v1496, 7
    %v1498 = vsub.s32 0, %v1497
    %v1499 = vrot.slane %v1491, %v1498
    %v1500 = vadd.f32 %v1494, %v1499
    %v1501 = vmax.f32 %v1483, %v1500
    %v1502 = vld [vmem:[%s2 + $0x50] sm:$0x1]
    %v1503 = vlaneseq
    %v1504 = vshrl.u32 %v1503, 7
    %v1505 = vsub.s32 0, %v1504
    %v1506 = vrot.slane %v1502, %v1505
    %v1507 = vsub.f32 %v1494, %v1506
    %v1508 = vmin.f32 %v1490, %v1507
    %v1509 = vld [vmem:[%s1 + $0x51] sm:$0x1]
    %1510 = vset.pattern.permute.xlu0 81
    %1511 = vperm.xlu0 %1510, %v49
    %v1512 = vpop.permute.xlu0 %1511
    %v1514 = vlaneseq
    %v1515 = vshrl.u32 %v1514, 7
    %v1516 = vsub.s32 0, %v1515
    %v1517 = vrot.slane %v1509, %v1516
    %v1518 = vadd.f32 %v1512, %v1517
    %v1519 = vmax.f32 %v1501, %v1518
    %v1520 = vld [vmem:[%s2 + $0x51] sm:$0x1]
    %v1521 = vlaneseq
    %v1522 = vshrl.u32 %v1521, 7
    %v1523 = vsub.s32 0, %v1522
    %v1524 = vrot.slane %v1520, %v1523
    %v1525 = vsub.f32 %v1512, %v1524
    %v1526 = vmin.f32 %v1508, %v1525
    %v1527 = vld [vmem:[%s1 + $0x52] sm:$0x1]
    %1528 = vset.pattern.permute.xlu0 82
    %1529 = vperm.xlu0 %1528, %v49
    %v1530 = vpop.permute.xlu0 %1529
    %v1532 = vlaneseq
    %v1533 = vshrl.u32 %v1532, 7
    %v1534 = vsub.s32 0, %v1533
    %v1535 = vrot.slane %v1527, %v1534
    %v1536 = vadd.f32 %v1530, %v1535
    %v1537 = vmax.f32 %v1519, %v1536
    %v1538 = vld [vmem:[%s2 + $0x52] sm:$0x1]
    %v1539 = vlaneseq
    %v1540 = vshrl.u32 %v1539, 7
    %v1541 = vsub.s32 0, %v1540
    %v1542 = vrot.slane %v1538, %v1541
    %v1543 = vsub.f32 %v1530, %v1542
    %v1544 = vmin.f32 %v1526, %v1543
    %v1545 = vld [vmem:[%s1 + $0x53] sm:$0x1]
    %1546 = vset.pattern.permute.xlu0 83
    %1547 = vperm.xlu0 %1546, %v49
    %v1548 = vpop.permute.xlu0 %1547
    %v1550 = vlaneseq
    %v1551 = vshrl.u32 %v1550, 7
    %v1552 = vsub.s32 0, %v1551
    %v1553 = vrot.slane %v1545, %v1552
    %v1554 = vadd.f32 %v1548, %v1553
    %v1555 = vmax.f32 %v1537, %v1554
    %v1556 = vld [vmem:[%s2 + $0x53] sm:$0x1]
    %v1557 = vlaneseq
    %v1558 = vshrl.u32 %v1557, 7
    %v1559 = vsub.s32 0, %v1558
    %v1560 = vrot.slane %v1556, %v1559
    %v1561 = vsub.f32 %v1548, %v1560
    %v1562 = vmin.f32 %v1544, %v1561
    %v1563 = vld [vmem:[%s1 + $0x54] sm:$0x1]
    %1564 = vset.pattern.permute.xlu0 84
    %1565 = vperm.xlu0 %1564, %v49
    %v1566 = vpop.permute.xlu0 %1565
    %v1568 = vlaneseq
    %v1569 = vshrl.u32 %v1568, 7
    %v1570 = vsub.s32 0, %v1569
    %v1571 = vrot.slane %v1563, %v1570
    %v1572 = vadd.f32 %v1566, %v1571
    %v1573 = vmax.f32 %v1555, %v1572
    %v1574 = vld [vmem:[%s2 + $0x54] sm:$0x1]
    %v1575 = vlaneseq
    %v1576 = vshrl.u32 %v1575, 7
    %v1577 = vsub.s32 0, %v1576
    %v1578 = vrot.slane %v1574, %v1577
    %v1579 = vsub.f32 %v1566, %v1578
    %v1580 = vmin.f32 %v1562, %v1579
    %v1581 = vld [vmem:[%s1 + $0x55] sm:$0x1]
    %1582 = vset.pattern.permute.xlu0 85
    %1583 = vperm.xlu0 %1582, %v49
    %v1584 = vpop.permute.xlu0 %1583
    %v1586 = vlaneseq
    %v1587 = vshrl.u32 %v1586, 7
    %v1588 = vsub.s32 0, %v1587
    %v1589 = vrot.slane %v1581, %v1588
    %v1590 = vadd.f32 %v1584, %v1589
    %v1591 = vmax.f32 %v1573, %v1590
    %v1592 = vld [vmem:[%s2 + $0x55] sm:$0x1]
    %v1593 = vlaneseq
    %v1594 = vshrl.u32 %v1593, 7
    %v1595 = vsub.s32 0, %v1594
    %v1596 = vrot.slane %v1592, %v1595
    %v1597 = vsub.f32 %v1584, %v1596
    %v1598 = vmin.f32 %v1580, %v1597
    %v1599 = vld [vmem:[%s1 + $0x56] sm:$0x1]
    %1600 = vset.pattern.permute.xlu0 86
    %1601 = vperm.xlu0 %1600, %v49
    %v1602 = vpop.permute.xlu0 %1601
    %v1604 = vlaneseq
    %v1605 = vshrl.u32 %v1604, 7
    %v1606 = vsub.s32 0, %v1605
    %v1607 = vrot.slane %v1599, %v1606
    %v1608 = vadd.f32 %v1602, %v1607
    %v1609 = vmax.f32 %v1591, %v1608
    %v1610 = vld [vmem:[%s2 + $0x56] sm:$0x1]
    %v1611 = vlaneseq
    %v1612 = vshrl.u32 %v1611, 7
    %v1613 = vsub.s32 0, %v1612
    %v1614 = vrot.slane %v1610, %v1613
    %v1615 = vsub.f32 %v1602, %v1614
    %v1616 = vmin.f32 %v1598, %v1615
    %v1617 = vld [vmem:[%s1 + $0x57] sm:$0x1]
    %1618 = vset.pattern.permute.xlu0 87
    %1619 = vperm.xlu0 %1618, %v49
    %v1620 = vpop.permute.xlu0 %1619
    %v1622 = vlaneseq
    %v1623 = vshrl.u32 %v1622, 7
    %v1624 = vsub.s32 0, %v1623
    %v1625 = vrot.slane %v1617, %v1624
    %v1626 = vadd.f32 %v1620, %v1625
    %v1627 = vmax.f32 %v1609, %v1626
    %v1628 = vld [vmem:[%s2 + $0x57] sm:$0x1]
    %v1629 = vlaneseq
    %v1630 = vshrl.u32 %v1629, 7
    %v1631 = vsub.s32 0, %v1630
    %v1632 = vrot.slane %v1628, %v1631
    %v1633 = vsub.f32 %v1620, %v1632
    %v1634 = vmin.f32 %v1616, %v1633
    %v1635 = vld [vmem:[%s1 + $0x58] sm:$0x1]
    %1636 = vset.pattern.permute.xlu0 88
    %1637 = vperm.xlu0 %1636, %v49
    %v1638 = vpop.permute.xlu0 %1637
    %v1640 = vlaneseq
    %v1641 = vshrl.u32 %v1640, 7
    %v1642 = vsub.s32 0, %v1641
    %v1643 = vrot.slane %v1635, %v1642
    %v1644 = vadd.f32 %v1638, %v1643
    %v1645 = vmax.f32 %v1627, %v1644
    %v1646 = vld [vmem:[%s2 + $0x58] sm:$0x1]
    %v1647 = vlaneseq
    %v1648 = vshrl.u32 %v1647, 7
    %v1649 = vsub.s32 0, %v1648
    %v1650 = vrot.slane %v1646, %v1649
    %v1651 = vsub.f32 %v1638, %v1650
    %v1652 = vmin.f32 %v1634, %v1651
    %v1653 = vld [vmem:[%s1 + $0x59] sm:$0x1]
    %1654 = vset.pattern.permute.xlu0 89
    %1655 = vperm.xlu0 %1654, %v49
    %v1656 = vpop.permute.xlu0 %1655
    %v1658 = vlaneseq
    %v1659 = vshrl.u32 %v1658, 7
    %v1660 = vsub.s32 0, %v1659
    %v1661 = vrot.slane %v1653, %v1660
    %v1662 = vadd.f32 %v1656, %v1661
    %v1663 = vmax.f32 %v1645, %v1662
    %v1664 = vld [vmem:[%s2 + $0x59] sm:$0x1]
    %v1665 = vlaneseq
    %v1666 = vshrl.u32 %v1665, 7
    %v1667 = vsub.s32 0, %v1666
    %v1668 = vrot.slane %v1664, %v1667
    %v1669 = vsub.f32 %v1656, %v1668
    %v1670 = vmin.f32 %v1652, %v1669
    %v1671 = vld [vmem:[%s1 + $0x5a] sm:$0x1]
    %1672 = vset.pattern.permute.xlu0 90
    %1673 = vperm.xlu0 %1672, %v49
    %v1674 = vpop.permute.xlu0 %1673
    %v1676 = vlaneseq
    %v1677 = vshrl.u32 %v1676, 7
    %v1678 = vsub.s32 0, %v1677
    %v1679 = vrot.slane %v1671, %v1678
    %v1680 = vadd.f32 %v1674, %v1679
    %v1681 = vmax.f32 %v1663, %v1680
    %v1682 = vld [vmem:[%s2 + $0x5a] sm:$0x1]
    %v1683 = vlaneseq
    %v1684 = vshrl.u32 %v1683, 7
    %v1685 = vsub.s32 0, %v1684
    %v1686 = vrot.slane %v1682, %v1685
    %v1687 = vsub.f32 %v1674, %v1686
    %v1688 = vmin.f32 %v1670, %v1687
    %v1689 = vld [vmem:[%s1 + $0x5b] sm:$0x1]
    %1690 = vset.pattern.permute.xlu0 91
    %1691 = vperm.xlu0 %1690, %v49
    %v1692 = vpop.permute.xlu0 %1691
    %v1694 = vlaneseq
    %v1695 = vshrl.u32 %v1694, 7
    %v1696 = vsub.s32 0, %v1695
    %v1697 = vrot.slane %v1689, %v1696
    %v1698 = vadd.f32 %v1692, %v1697
    %v1699 = vmax.f32 %v1681, %v1698
    %v1700 = vld [vmem:[%s2 + $0x5b] sm:$0x1]
    %v1701 = vlaneseq
    %v1702 = vshrl.u32 %v1701, 7
    %v1703 = vsub.s32 0, %v1702
    %v1704 = vrot.slane %v1700, %v1703
    %v1705 = vsub.f32 %v1692, %v1704
    %v1706 = vmin.f32 %v1688, %v1705
    %v1707 = vld [vmem:[%s1 + $0x5c] sm:$0x1]
    %1708 = vset.pattern.permute.xlu0 92
    %1709 = vperm.xlu0 %1708, %v49
    %v1710 = vpop.permute.xlu0 %1709
    %v1712 = vlaneseq
    %v1713 = vshrl.u32 %v1712, 7
    %v1714 = vsub.s32 0, %v1713
    %v1715 = vrot.slane %v1707, %v1714
    %v1716 = vadd.f32 %v1710, %v1715
    %v1717 = vmax.f32 %v1699, %v1716
    %v1718 = vld [vmem:[%s2 + $0x5c] sm:$0x1]
    %v1719 = vlaneseq
    %v1720 = vshrl.u32 %v1719, 7
    %v1721 = vsub.s32 0, %v1720
    %v1722 = vrot.slane %v1718, %v1721
    %v1723 = vsub.f32 %v1710, %v1722
    %v1724 = vmin.f32 %v1706, %v1723
    %v1725 = vld [vmem:[%s1 + $0x5d] sm:$0x1]
    %1726 = vset.pattern.permute.xlu0 93
    %1727 = vperm.xlu0 %1726, %v49
    %v1728 = vpop.permute.xlu0 %1727
    %v1730 = vlaneseq
    %v1731 = vshrl.u32 %v1730, 7
    %v1732 = vsub.s32 0, %v1731
    %v1733 = vrot.slane %v1725, %v1732
    %v1734 = vadd.f32 %v1728, %v1733
    %v1735 = vmax.f32 %v1717, %v1734
    %v1736 = vld [vmem:[%s2 + $0x5d] sm:$0x1]
    %v1737 = vlaneseq
    %v1738 = vshrl.u32 %v1737, 7
    %v1739 = vsub.s32 0, %v1738
    %v1740 = vrot.slane %v1736, %v1739
    %v1741 = vsub.f32 %v1728, %v1740
    %v1742 = vmin.f32 %v1724, %v1741
    %v1743 = vld [vmem:[%s1 + $0x5e] sm:$0x1]
    %1744 = vset.pattern.permute.xlu0 94
    %1745 = vperm.xlu0 %1744, %v49
    %v1746 = vpop.permute.xlu0 %1745
    %v1748 = vlaneseq
    %v1749 = vshrl.u32 %v1748, 7
    %v1750 = vsub.s32 0, %v1749
    %v1751 = vrot.slane %v1743, %v1750
    %v1752 = vadd.f32 %v1746, %v1751
    %v1753 = vmax.f32 %v1735, %v1752
    %v1754 = vld [vmem:[%s2 + $0x5e] sm:$0x1]
    %v1755 = vlaneseq
    %v1756 = vshrl.u32 %v1755, 7
    %v1757 = vsub.s32 0, %v1756
    %v1758 = vrot.slane %v1754, %v1757
    %v1759 = vsub.f32 %v1746, %v1758
    %v1760 = vmin.f32 %v1742, %v1759
    %v1761 = vld [vmem:[%s1 + $0x5f] sm:$0x1]
    %1762 = vset.pattern.permute.xlu0 95
    %1763 = vperm.xlu0 %1762, %v49
    %v1764 = vpop.permute.xlu0 %1763
    %v1766 = vlaneseq
    %v1767 = vshrl.u32 %v1766, 7
    %v1768 = vsub.s32 0, %v1767
    %v1769 = vrot.slane %v1761, %v1768
    %v1770 = vadd.f32 %v1764, %v1769
    %v1771 = vmax.f32 %v1753, %v1770
    %v1772 = vld [vmem:[%s2 + $0x5f] sm:$0x1]
    %v1773 = vlaneseq
    %v1774 = vshrl.u32 %v1773, 7
    %v1775 = vsub.s32 0, %v1774
    %v1776 = vrot.slane %v1772, %v1775
    %v1777 = vsub.f32 %v1764, %v1776
    %v1778 = vmin.f32 %v1760, %v1777
    %v1779 = vld [vmem:[%s1 + $0x60] sm:$0x1]
    %1780 = vset.pattern.permute.xlu0 96
    %1781 = vperm.xlu0 %1780, %v49
    %v1782 = vpop.permute.xlu0 %1781
    %v1784 = vlaneseq
    %v1785 = vshrl.u32 %v1784, 7
    %v1786 = vsub.s32 0, %v1785
    %v1787 = vrot.slane %v1779, %v1786
    %v1788 = vadd.f32 %v1782, %v1787
    %v1789 = vmax.f32 %v1771, %v1788
    %v1790 = vld [vmem:[%s2 + $0x60] sm:$0x1]
    %v1791 = vlaneseq
    %v1792 = vshrl.u32 %v1791, 7
    %v1793 = vsub.s32 0, %v1792
    %v1794 = vrot.slane %v1790, %v1793
    %v1795 = vsub.f32 %v1782, %v1794
    %v1796 = vmin.f32 %v1778, %v1795
    %v1797 = vld [vmem:[%s1 + $0x61] sm:$0x1]
    %1798 = vset.pattern.permute.xlu0 97
    %1799 = vperm.xlu0 %1798, %v49
    %v1800 = vpop.permute.xlu0 %1799
    %v1802 = vlaneseq
    %v1803 = vshrl.u32 %v1802, 7
    %v1804 = vsub.s32 0, %v1803
    %v1805 = vrot.slane %v1797, %v1804
    %v1806 = vadd.f32 %v1800, %v1805
    %v1807 = vmax.f32 %v1789, %v1806
    %v1808 = vld [vmem:[%s2 + $0x61] sm:$0x1]
    %v1809 = vlaneseq
    %v1810 = vshrl.u32 %v1809, 7
    %v1811 = vsub.s32 0, %v1810
    %v1812 = vrot.slane %v1808, %v1811
    %v1813 = vsub.f32 %v1800, %v1812
    %v1814 = vmin.f32 %v1796, %v1813
    %v1815 = vld [vmem:[%s1 + $0x62] sm:$0x1]
    %1816 = vset.pattern.permute.xlu0 98
    %1817 = vperm.xlu0 %1816, %v49
    %v1818 = vpop.permute.xlu0 %1817
    %v1820 = vlaneseq
    %v1821 = vshrl.u32 %v1820, 7
    %v1822 = vsub.s32 0, %v1821
    %v1823 = vrot.slane %v1815, %v1822
    %v1824 = vadd.f32 %v1818, %v1823
    %v1825 = vmax.f32 %v1807, %v1824
    %v1826 = vld [vmem:[%s2 + $0x62] sm:$0x1]
    %v1827 = vlaneseq
    %v1828 = vshrl.u32 %v1827, 7
    %v1829 = vsub.s32 0, %v1828
    %v1830 = vrot.slane %v1826, %v1829
    %v1831 = vsub.f32 %v1818, %v1830
    %v1832 = vmin.f32 %v1814, %v1831
    %v1833 = vld [vmem:[%s1 + $0x63] sm:$0x1]
    %1834 = vset.pattern.permute.xlu0 99
    %1835 = vperm.xlu0 %1834, %v49
    %v1836 = vpop.permute.xlu0 %1835
    %v1838 = vlaneseq
    %v1839 = vshrl.u32 %v1838, 7
    %v1840 = vsub.s32 0, %v1839
    %v1841 = vrot.slane %v1833, %v1840
    %v1842 = vadd.f32 %v1836, %v1841
    %v1843 = vmax.f32 %v1825, %v1842
    %v1844 = vld [vmem:[%s2 + $0x63] sm:$0x1]
    %v1845 = vlaneseq
    %v1846 = vshrl.u32 %v1845, 7
    %v1847 = vsub.s32 0, %v1846
    %v1848 = vrot.slane %v1844, %v1847
    %v1849 = vsub.f32 %v1836, %v1848
    %v1850 = vmin.f32 %v1832, %v1849
    %v1851 = vld [vmem:[%s1 + $0x64] sm:$0x1]
    %1852 = vset.pattern.permute.xlu0 100
    %1853 = vperm.xlu0 %1852, %v49
    %v1854 = vpop.permute.xlu0 %1853
    %v1856 = vlaneseq
    %v1857 = vshrl.u32 %v1856, 7
    %v1858 = vsub.s32 0, %v1857
    %v1859 = vrot.slane %v1851, %v1858
    %v1860 = vadd.f32 %v1854, %v1859
    %v1861 = vmax.f32 %v1843, %v1860
    %v1862 = vld [vmem:[%s2 + $0x64] sm:$0x1]
    %v1863 = vlaneseq
    %v1864 = vshrl.u32 %v1863, 7
    %v1865 = vsub.s32 0, %v1864
    %v1866 = vrot.slane %v1862, %v1865
    %v1867 = vsub.f32 %v1854, %v1866
    %v1868 = vmin.f32 %v1850, %v1867
    %v1869 = vld [vmem:[%s1 + $0x65] sm:$0x1]
    %1870 = vset.pattern.permute.xlu0 101
    %1871 = vperm.xlu0 %1870, %v49
    %v1872 = vpop.permute.xlu0 %1871
    %v1874 = vlaneseq
    %v1875 = vshrl.u32 %v1874, 7
    %v1876 = vsub.s32 0, %v1875
    %v1877 = vrot.slane %v1869, %v1876
    %v1878 = vadd.f32 %v1872, %v1877
    %v1879 = vmax.f32 %v1861, %v1878
    %v1880 = vld [vmem:[%s2 + $0x65] sm:$0x1]
    %v1881 = vlaneseq
    %v1882 = vshrl.u32 %v1881, 7
    %v1883 = vsub.s32 0, %v1882
    %v1884 = vrot.slane %v1880, %v1883
    %v1885 = vsub.f32 %v1872, %v1884
    %v1886 = vmin.f32 %v1868, %v1885
    %v1887 = vld [vmem:[%s1 + $0x66] sm:$0x1]
    %1888 = vset.pattern.permute.xlu0 102
    %1889 = vperm.xlu0 %1888, %v49
    %v1890 = vpop.permute.xlu0 %1889
    %v1892 = vlaneseq
    %v1893 = vshrl.u32 %v1892, 7
    %v1894 = vsub.s32 0, %v1893
    %v1895 = vrot.slane %v1887, %v1894
    %v1896 = vadd.f32 %v1890, %v1895
    %v1897 = vmax.f32 %v1879, %v1896
    %v1898 = vld [vmem:[%s2 + $0x66] sm:$0x1]
    %v1899 = vlaneseq
    %v1900 = vshrl.u32 %v1899, 7
    %v1901 = vsub.s32 0, %v1900
    %v1902 = vrot.slane %v1898, %v1901
    %v1903 = vsub.f32 %v1890, %v1902
    %v1904 = vmin.f32 %v1886, %v1903
    %v1905 = vld [vmem:[%s1 + $0x67] sm:$0x1]
    %1906 = vset.pattern.permute.xlu0 103
    %1907 = vperm.xlu0 %1906, %v49
    %v1908 = vpop.permute.xlu0 %1907
    %v1910 = vlaneseq
    %v1911 = vshrl.u32 %v1910, 7
    %v1912 = vsub.s32 0, %v1911
    %v1913 = vrot.slane %v1905, %v1912
    %v1914 = vadd.f32 %v1908, %v1913
    %v1915 = vmax.f32 %v1897, %v1914
    %v1916 = vld [vmem:[%s2 + $0x67] sm:$0x1]
    %v1917 = vlaneseq
    %v1918 = vshrl.u32 %v1917, 7
    %v1919 = vsub.s32 0, %v1918
    %v1920 = vrot.slane %v1916, %v1919
    %v1921 = vsub.f32 %v1908, %v1920
    %v1922 = vmin.f32 %v1904, %v1921
    %v1923 = vld [vmem:[%s1 + $0x68] sm:$0x1]
    %1924 = vset.pattern.permute.xlu0 104
    %1925 = vperm.xlu0 %1924, %v49
    %v1926 = vpop.permute.xlu0 %1925
    %v1928 = vlaneseq
    %v1929 = vshrl.u32 %v1928, 7
    %v1930 = vsub.s32 0, %v1929
    %v1931 = vrot.slane %v1923, %v1930
    %v1932 = vadd.f32 %v1926, %v1931
    %v1933 = vmax.f32 %v1915, %v1932
    %v1934 = vld [vmem:[%s2 + $0x68] sm:$0x1]
    %v1935 = vlaneseq
    %v1936 = vshrl.u32 %v1935, 7
    %v1937 = vsub.s32 0, %v1936
    %v1938 = vrot.slane %v1934, %v1937
    %v1939 = vsub.f32 %v1926, %v1938
    %v1940 = vmin.f32 %v1922, %v1939
    %v1941 = vld [vmem:[%s1 + $0x69] sm:$0x1]
    %1942 = vset.pattern.permute.xlu0 105
    %1943 = vperm.xlu0 %1942, %v49
    %v1944 = vpop.permute.xlu0 %1943
    %v1946 = vlaneseq
    %v1947 = vshrl.u32 %v1946, 7
    %v1948 = vsub.s32 0, %v1947
    %v1949 = vrot.slane %v1941, %v1948
    %v1950 = vadd.f32 %v1944, %v1949
    %v1951 = vmax.f32 %v1933, %v1950
    %v1952 = vld [vmem:[%s2 + $0x69] sm:$0x1]
    %v1953 = vlaneseq
    %v1954 = vshrl.u32 %v1953, 7
    %v1955 = vsub.s32 0, %v1954
    %v1956 = vrot.slane %v1952, %v1955
    %v1957 = vsub.f32 %v1944, %v1956
    %v1958 = vmin.f32 %v1940, %v1957
    %v1959 = vld [vmem:[%s1 + $0x6a] sm:$0x1]
    %1960 = vset.pattern.permute.xlu0 106
    %1961 = vperm.xlu0 %1960, %v49
    %v1962 = vpop.permute.xlu0 %1961
    %v1964 = vlaneseq
    %v1965 = vshrl.u32 %v1964, 7
    %v1966 = vsub.s32 0, %v1965
    %v1967 = vrot.slane %v1959, %v1966
    %v1968 = vadd.f32 %v1962, %v1967
    %v1969 = vmax.f32 %v1951, %v1968
    %v1970 = vld [vmem:[%s2 + $0x6a] sm:$0x1]
    %v1971 = vlaneseq
    %v1972 = vshrl.u32 %v1971, 7
    %v1973 = vsub.s32 0, %v1972
    %v1974 = vrot.slane %v1970, %v1973
    %v1975 = vsub.f32 %v1962, %v1974
    %v1976 = vmin.f32 %v1958, %v1975
    %v1977 = vld [vmem:[%s1 + $0x6b] sm:$0x1]
    %1978 = vset.pattern.permute.xlu0 107
    %1979 = vperm.xlu0 %1978, %v49
    %v1980 = vpop.permute.xlu0 %1979
    %v1982 = vlaneseq
    %v1983 = vshrl.u32 %v1982, 7
    %v1984 = vsub.s32 0, %v1983
    %v1985 = vrot.slane %v1977, %v1984
    %v1986 = vadd.f32 %v1980, %v1985
    %v1987 = vmax.f32 %v1969, %v1986
    %v1988 = vld [vmem:[%s2 + $0x6b] sm:$0x1]
    %v1989 = vlaneseq
    %v1990 = vshrl.u32 %v1989, 7
    %v1991 = vsub.s32 0, %v1990
    %v1992 = vrot.slane %v1988, %v1991
    %v1993 = vsub.f32 %v1980, %v1992
    %v1994 = vmin.f32 %v1976, %v1993
    %v1995 = vld [vmem:[%s1 + $0x6c] sm:$0x1]
    %1996 = vset.pattern.permute.xlu0 108
    %1997 = vperm.xlu0 %1996, %v49
    %v1998 = vpop.permute.xlu0 %1997
    %v2000 = vlaneseq
    %v2001 = vshrl.u32 %v2000, 7
    %v2002 = vsub.s32 0, %v2001
    %v2003 = vrot.slane %v1995, %v2002
    %v2004 = vadd.f32 %v1998, %v2003
    %v2005 = vmax.f32 %v1987, %v2004
    %v2006 = vld [vmem:[%s2 + $0x6c] sm:$0x1]
    %v2007 = vlaneseq
    %v2008 = vshrl.u32 %v2007, 7
    %v2009 = vsub.s32 0, %v2008
    %v2010 = vrot.slane %v2006, %v2009
    %v2011 = vsub.f32 %v1998, %v2010
    %v2012 = vmin.f32 %v1994, %v2011
    %v2013 = vld [vmem:[%s1 + $0x6d] sm:$0x1]
    %2014 = vset.pattern.permute.xlu0 109
    %2015 = vperm.xlu0 %2014, %v49
    %v2016 = vpop.permute.xlu0 %2015
    %v2018 = vlaneseq
    %v2019 = vshrl.u32 %v2018, 7
    %v2020 = vsub.s32 0, %v2019
    %v2021 = vrot.slane %v2013, %v2020
    %v2022 = vadd.f32 %v2016, %v2021
    %v2023 = vmax.f32 %v2005, %v2022
    %v2024 = vld [vmem:[%s2 + $0x6d] sm:$0x1]
    %v2025 = vlaneseq
    %v2026 = vshrl.u32 %v2025, 7
    %v2027 = vsub.s32 0, %v2026
    %v2028 = vrot.slane %v2024, %v2027
    %v2029 = vsub.f32 %v2016, %v2028
    %v2030 = vmin.f32 %v2012, %v2029
    %v2031 = vld [vmem:[%s1 + $0x6e] sm:$0x1]
    %2032 = vset.pattern.permute.xlu0 110
    %2033 = vperm.xlu0 %2032, %v49
    %v2034 = vpop.permute.xlu0 %2033
    %v2036 = vlaneseq
    %v2037 = vshrl.u32 %v2036, 7
    %v2038 = vsub.s32 0, %v2037
    %v2039 = vrot.slane %v2031, %v2038
    %v2040 = vadd.f32 %v2034, %v2039
    %v2041 = vmax.f32 %v2023, %v2040
    %v2042 = vld [vmem:[%s2 + $0x6e] sm:$0x1]
    %v2043 = vlaneseq
    %v2044 = vshrl.u32 %v2043, 7
    %v2045 = vsub.s32 0, %v2044
    %v2046 = vrot.slane %v2042, %v2045
    %v2047 = vsub.f32 %v2034, %v2046
    %v2048 = vmin.f32 %v2030, %v2047
    %v2049 = vld [vmem:[%s1 + $0x6f] sm:$0x1]
    %2050 = vset.pattern.permute.xlu0 111
    %2051 = vperm.xlu0 %2050, %v49
    %v2052 = vpop.permute.xlu0 %2051
    %v2054 = vlaneseq
    %v2055 = vshrl.u32 %v2054, 7
    %v2056 = vsub.s32 0, %v2055
    %v2057 = vrot.slane %v2049, %v2056
    %v2058 = vadd.f32 %v2052, %v2057
    %v2059 = vmax.f32 %v2041, %v2058
    %v2060 = vld [vmem:[%s2 + $0x6f] sm:$0x1]
    %v2061 = vlaneseq
    %v2062 = vshrl.u32 %v2061, 7
    %v2063 = vsub.s32 0, %v2062
    %v2064 = vrot.slane %v2060, %v2063
    %v2065 = vsub.f32 %v2052, %v2064
    %v2066 = vmin.f32 %v2048, %v2065
    %v2067 = vld [vmem:[%s1 + $0x70] sm:$0x1]
    %2068 = vset.pattern.permute.xlu0 112
    %2069 = vperm.xlu0 %2068, %v49
    %v2070 = vpop.permute.xlu0 %2069
    %v2072 = vlaneseq
    %v2073 = vshrl.u32 %v2072, 7
    %v2074 = vsub.s32 0, %v2073
    %v2075 = vrot.slane %v2067, %v2074
    %v2076 = vadd.f32 %v2070, %v2075
    %v2077 = vmax.f32 %v2059, %v2076
    %v2078 = vld [vmem:[%s2 + $0x70] sm:$0x1]
    %v2079 = vlaneseq
    %v2080 = vshrl.u32 %v2079, 7
    %v2081 = vsub.s32 0, %v2080
    %v2082 = vrot.slane %v2078, %v2081
    %v2083 = vsub.f32 %v2070, %v2082
    %v2084 = vmin.f32 %v2066, %v2083
    %v2085 = vld [vmem:[%s1 + $0x71] sm:$0x1]
    %2086 = vset.pattern.permute.xlu0 113
    %2087 = vperm.xlu0 %2086, %v49
    %v2088 = vpop.permute.xlu0 %2087
    %v2090 = vlaneseq
    %v2091 = vshrl.u32 %v2090, 7
    %v2092 = vsub.s32 0, %v2091
    %v2093 = vrot.slane %v2085, %v2092
    %v2094 = vadd.f32 %v2088, %v2093
    %v2095 = vmax.f32 %v2077, %v2094
    %v2096 = vld [vmem:[%s2 + $0x71] sm:$0x1]
    %v2097 = vlaneseq
    %v2098 = vshrl.u32 %v2097, 7
    %v2099 = vsub.s32 0, %v2098
    %v2100 = vrot.slane %v2096, %v2099
    %v2101 = vsub.f32 %v2088, %v2100
    %v2102 = vmin.f32 %v2084, %v2101
    %v2103 = vld [vmem:[%s1 + $0x72] sm:$0x1]
    %2104 = vset.pattern.permute.xlu0 114
    %2105 = vperm.xlu0 %2104, %v49
    %v2106 = vpop.permute.xlu0 %2105
    %v2108 = vlaneseq
    %v2109 = vshrl.u32 %v2108, 7
    %v2110 = vsub.s32 0, %v2109
    %v2111 = vrot.slane %v2103, %v2110
    %v2112 = vadd.f32 %v2106, %v2111
    %v2113 = vmax.f32 %v2095, %v2112
    %v2114 = vld [vmem:[%s2 + $0x72] sm:$0x1]
    %v2115 = vlaneseq
    %v2116 = vshrl.u32 %v2115, 7
    %v2117 = vsub.s32 0, %v2116
    %v2118 = vrot.slane %v2114, %v2117
    %v2119 = vsub.f32 %v2106, %v2118
    %v2120 = vmin.f32 %v2102, %v2119
    %v2121 = vld [vmem:[%s1 + $0x73] sm:$0x1]
    %2122 = vset.pattern.permute.xlu0 115
    %2123 = vperm.xlu0 %2122, %v49
    %v2124 = vpop.permute.xlu0 %2123
    %v2126 = vlaneseq
    %v2127 = vshrl.u32 %v2126, 7
    %v2128 = vsub.s32 0, %v2127
    %v2129 = vrot.slane %v2121, %v2128
    %v2130 = vadd.f32 %v2124, %v2129
    %v2131 = vmax.f32 %v2113, %v2130
    %v2132 = vld [vmem:[%s2 + $0x73] sm:$0x1]
    %v2133 = vlaneseq
    %v2134 = vshrl.u32 %v2133, 7
    %v2135 = vsub.s32 0, %v2134
    %v2136 = vrot.slane %v2132, %v2135
    %v2137 = vsub.f32 %v2124, %v2136
    %v2138 = vmin.f32 %v2120, %v2137
    %v2139 = vld [vmem:[%s1 + $0x74] sm:$0x1]
    %2140 = vset.pattern.permute.xlu0 116
    %2141 = vperm.xlu0 %2140, %v49
    %v2142 = vpop.permute.xlu0 %2141
    %v2144 = vlaneseq
    %v2145 = vshrl.u32 %v2144, 7
    %v2146 = vsub.s32 0, %v2145
    %v2147 = vrot.slane %v2139, %v2146
    %v2148 = vadd.f32 %v2142, %v2147
    %v2149 = vmax.f32 %v2131, %v2148
    %v2150 = vld [vmem:[%s2 + $0x74] sm:$0x1]
    %v2151 = vlaneseq
    %v2152 = vshrl.u32 %v2151, 7
    %v2153 = vsub.s32 0, %v2152
    %v2154 = vrot.slane %v2150, %v2153
    %v2155 = vsub.f32 %v2142, %v2154
    %v2156 = vmin.f32 %v2138, %v2155
    %v2157 = vld [vmem:[%s1 + $0x75] sm:$0x1]
    %2158 = vset.pattern.permute.xlu0 117
    %2159 = vperm.xlu0 %2158, %v49
    %v2160 = vpop.permute.xlu0 %2159
    %v2162 = vlaneseq
    %v2163 = vshrl.u32 %v2162, 7
    %v2164 = vsub.s32 0, %v2163
    %v2165 = vrot.slane %v2157, %v2164
    %v2166 = vadd.f32 %v2160, %v2165
    %v2167 = vmax.f32 %v2149, %v2166
    %v2168 = vld [vmem:[%s2 + $0x75] sm:$0x1]
    %v2169 = vlaneseq
    %v2170 = vshrl.u32 %v2169, 7
    %v2171 = vsub.s32 0, %v2170
    %v2172 = vrot.slane %v2168, %v2171
    %v2173 = vsub.f32 %v2160, %v2172
    %v2174 = vmin.f32 %v2156, %v2173
    %v2175 = vld [vmem:[%s1 + $0x76] sm:$0x1]
    %2176 = vset.pattern.permute.xlu0 118
    %2177 = vperm.xlu0 %2176, %v49
    %v2178 = vpop.permute.xlu0 %2177
    %v2180 = vlaneseq
    %v2181 = vshrl.u32 %v2180, 7
    %v2182 = vsub.s32 0, %v2181
    %v2183 = vrot.slane %v2175, %v2182
    %v2184 = vadd.f32 %v2178, %v2183
    %v2185 = vmax.f32 %v2167, %v2184
    %v2186 = vld [vmem:[%s2 + $0x76] sm:$0x1]
    %v2187 = vlaneseq
    %v2188 = vshrl.u32 %v2187, 7
    %v2189 = vsub.s32 0, %v2188
    %v2190 = vrot.slane %v2186, %v2189
    %v2191 = vsub.f32 %v2178, %v2190
    %v2192 = vmin.f32 %v2174, %v2191
    %v2193 = vld [vmem:[%s1 + $0x77] sm:$0x1]
    %2194 = vset.pattern.permute.xlu0 119
    %2195 = vperm.xlu0 %2194, %v49
    %v2196 = vpop.permute.xlu0 %2195
    %v2198 = vlaneseq
    %v2199 = vshrl.u32 %v2198, 7
    %v2200 = vsub.s32 0, %v2199
    %v2201 = vrot.slane %v2193, %v2200
    %v2202 = vadd.f32 %v2196, %v2201
    %v2203 = vmax.f32 %v2185, %v2202
    %v2204 = vld [vmem:[%s2 + $0x77] sm:$0x1]
    %v2205 = vlaneseq
    %v2206 = vshrl.u32 %v2205, 7
    %v2207 = vsub.s32 0, %v2206
    %v2208 = vrot.slane %v2204, %v2207
    %v2209 = vsub.f32 %v2196, %v2208
    %v2210 = vmin.f32 %v2192, %v2209
    %v2211 = vld [vmem:[%s1 + $0x78] sm:$0x1]
    %2212 = vset.pattern.permute.xlu0 120
    %2213 = vperm.xlu0 %2212, %v49
    %v2214 = vpop.permute.xlu0 %2213
    %v2216 = vlaneseq
    %v2217 = vshrl.u32 %v2216, 7
    %v2218 = vsub.s32 0, %v2217
    %v2219 = vrot.slane %v2211, %v2218
    %v2220 = vadd.f32 %v2214, %v2219
    %v2221 = vmax.f32 %v2203, %v2220
    %v2222 = vld [vmem:[%s2 + $0x78] sm:$0x1]
    %v2223 = vlaneseq
    %v2224 = vshrl.u32 %v2223, 7
    %v2225 = vsub.s32 0, %v2224
    %v2226 = vrot.slane %v2222, %v2225
    %v2227 = vsub.f32 %v2214, %v2226
    %v2228 = vmin.f32 %v2210, %v2227
    %v2229 = vld [vmem:[%s1 + $0x79] sm:$0x1]
    %2230 = vset.pattern.permute.xlu0 121
    %2231 = vperm.xlu0 %2230, %v49
    %v2232 = vpop.permute.xlu0 %2231
    %v2234 = vlaneseq
    %v2235 = vshrl.u32 %v2234, 7
    %v2236 = vsub.s32 0, %v2235
    %v2237 = vrot.slane %v2229, %v2236
    %v2238 = vadd.f32 %v2232, %v2237
    %v2239 = vmax.f32 %v2221, %v2238
    %v2240 = vld [vmem:[%s2 + $0x79] sm:$0x1]
    %v2241 = vlaneseq
    %v2242 = vshrl.u32 %v2241, 7
    %v2243 = vsub.s32 0, %v2242
    %v2244 = vrot.slane %v2240, %v2243
    %v2245 = vsub.f32 %v2232, %v2244
    %v2246 = vmin.f32 %v2228, %v2245
    %v2247 = vld [vmem:[%s1 + $0x7a] sm:$0x1]
    %2248 = vset.pattern.permute.xlu0 122
    %2249 = vperm.xlu0 %2248, %v49
    %v2250 = vpop.permute.xlu0 %2249
    %v2252 = vlaneseq
    %v2253 = vshrl.u32 %v2252, 7
    %v2254 = vsub.s32 0, %v2253
    %v2255 = vrot.slane %v2247, %v2254
    %v2256 = vadd.f32 %v2250, %v2255
    %v2257 = vmax.f32 %v2239, %v2256
    %v2258 = vld [vmem:[%s2 + $0x7a] sm:$0x1]
    %v2259 = vlaneseq
    %v2260 = vshrl.u32 %v2259, 7
    %v2261 = vsub.s32 0, %v2260
    %v2262 = vrot.slane %v2258, %v2261
    %v2263 = vsub.f32 %v2250, %v2262
    %v2264 = vmin.f32 %v2246, %v2263
    %v2265 = vld [vmem:[%s1 + $0x7b] sm:$0x1]
    %2266 = vset.pattern.permute.xlu0 123
    %2267 = vperm.xlu0 %2266, %v49
    %v2268 = vpop.permute.xlu0 %2267
    %v2270 = vlaneseq
    %v2271 = vshrl.u32 %v2270, 7
    %v2272 = vsub.s32 0, %v2271
    %v2273 = vrot.slane %v2265, %v2272
    %v2274 = vadd.f32 %v2268, %v2273
    %v2275 = vmax.f32 %v2257, %v2274
    %v2276 = vld [vmem:[%s2 + $0x7b] sm:$0x1]
    %v2277 = vlaneseq
    %v2278 = vshrl.u32 %v2277, 7
    %v2279 = vsub.s32 0, %v2278
    %v2280 = vrot.slane %v2276, %v2279
    %v2281 = vsub.f32 %v2268, %v2280
    %v2282 = vmin.f32 %v2264, %v2281
    %v2283 = vld [vmem:[%s1 + $0x7c] sm:$0x1]
    %2284 = vset.pattern.permute.xlu0 124
    %2285 = vperm.xlu0 %2284, %v49
    %v2286 = vpop.permute.xlu0 %2285
    %v2288 = vlaneseq
    %v2289 = vshrl.u32 %v2288, 7
    %v2290 = vsub.s32 0, %v2289
    %v2291 = vrot.slane %v2283, %v2290
    %v2292 = vadd.f32 %v2286, %v2291
    %v2293 = vmax.f32 %v2275, %v2292
    %v2294 = vld [vmem:[%s2 + $0x7c] sm:$0x1]
    %v2295 = vlaneseq
    %v2296 = vshrl.u32 %v2295, 7
    %v2297 = vsub.s32 0, %v2296
    %v2298 = vrot.slane %v2294, %v2297
    %v2299 = vsub.f32 %v2286, %v2298
    %v2300 = vmin.f32 %v2282, %v2299
    %v2301 = vld [vmem:[%s1 + $0x7d] sm:$0x1]
    %2302 = vset.pattern.permute.xlu0 125
    %2303 = vperm.xlu0 %2302, %v49
    %v2304 = vpop.permute.xlu0 %2303
    %v2306 = vlaneseq
    %v2307 = vshrl.u32 %v2306, 7
    %v2308 = vsub.s32 0, %v2307
    %v2309 = vrot.slane %v2301, %v2308
    %v2310 = vadd.f32 %v2304, %v2309
    %v2311 = vmax.f32 %v2293, %v2310
    %v2312 = vld [vmem:[%s2 + $0x7d] sm:$0x1]
    %v2313 = vlaneseq
    %v2314 = vshrl.u32 %v2313, 7
    %v2315 = vsub.s32 0, %v2314
    %v2316 = vrot.slane %v2312, %v2315
    %v2317 = vsub.f32 %v2304, %v2316
    %v2318 = vmin.f32 %v2300, %v2317
    %v2319 = vld [vmem:[%s1 + $0x7e] sm:$0x1]
    %2320 = vset.pattern.permute.xlu0 126
    %2321 = vperm.xlu0 %2320, %v49
    %v2322 = vpop.permute.xlu0 %2321
    %v2324 = vlaneseq
    %v2325 = vshrl.u32 %v2324, 7
    %v2326 = vsub.s32 0, %v2325
    %v2327 = vrot.slane %v2319, %v2326
    %v2328 = vadd.f32 %v2322, %v2327
    %v2329 = vmax.f32 %v2311, %v2328
    %v2330 = vld [vmem:[%s2 + $0x7e] sm:$0x1]
    %v2331 = vlaneseq
    %v2332 = vshrl.u32 %v2331, 7
    %v2333 = vsub.s32 0, %v2332
    %v2334 = vrot.slane %v2330, %v2333
    %v2335 = vsub.f32 %v2322, %v2334
    %v2336 = vmin.f32 %v2318, %v2335
    %v2337 = vld [vmem:[%s1 + $0x7f] sm:$0x1]
    %2338 = vset.pattern.permute.xlu0 127
    %2339 = vperm.xlu0 %2338, %v49
    %v2340 = vpop.permute.xlu0 %2339
    %v2342 = vlaneseq
    %v2343 = vshrl.u32 %v2342, 7
    %v2344 = vsub.s32 0, %v2343
    %v2345 = vrot.slane %v2337, %v2344
    %v2346 = vadd.f32 %v2340, %v2345
    %v2347 = vmax.f32 %v2329, %v2346
    %v2348 = vld [vmem:[%s2 + $0x7f] sm:$0x1]
    %v2349 = vlaneseq
    %v2350 = vshrl.u32 %v2349, 7
    %v2351 = vsub.s32 0, %v2350
    %v2352 = vrot.slane %v2348, %v2351
    %v2353 = vsub.f32 %v2340, %v2352
    %v2354 = vmin.f32 %v2336, %v2353
    %2355 = vst [vmem:[#allocation2] sm:$0xff] %v2347
    %2356 = vst [vmem:[#allocation3] sm:$0xff] %v2354
    // Predicated region
    $region34: #{morphological_max.1} parent=1 // pred_check
      %p2357 = pneg %p27
    $region35: #{morphological_max.1} parent=1 // pred_check_branch
      %2359 = sbr.rel (%p2357) target = $region37
    $region36: #{morphological_max.1} parent=1 // pred_region
      %v2360 = vld [vmem:[%s5] sm:$0xff]
      %v2361 = vld [vmem:[%s5 + $0x8] sm:$0xff]
      %v2362 = vld [vmem:[%s5 + $0x10] sm:$0xff]
      %v2363 = vld [vmem:[%s5 + $0x18] sm:$0xff]
      %v2364 = vld [vmem:[%s5 + $0x20] sm:$0xff]
      %v2365 = vld [vmem:[%s5 + $0x28] sm:$0xff]
      %v2366 = vld [vmem:[%s5 + $0x30] sm:$0xff]
      %v2367 = vld [vmem:[%s5 + $0x38] sm:$0xff]
      %v2368 = vld [vmem:[%s5 + $0x40] sm:$0xff]
      %v2369 = vld [vmem:[%s5 + $0x48] sm:$0xff]
      %v2370 = vld [vmem:[%s5 + $0x50] sm:$0xff]
      %v2371 = vld [vmem:[%s5 + $0x58] sm:$0xff]
      %v2372 = vld [vmem:[%s5 + $0x60] sm:$0xff]
      %v2373 = vld [vmem:[%s5 + $0x68] sm:$0xff]
      %v2374 = vld [vmem:[%s5 + $0x70] sm:$0xff]
      %v2375 = vld [vmem:[%s5 + $0x78] sm:$0xff]
      %v2376 = vld [vmem:[%s6] sm:$0xff]
      %v2377 = vld [vmem:[%s6 + $0x8] sm:$0xff]
      %v2378 = vld [vmem:[%s6 + $0x10] sm:$0xff]
      %v2379 = vld [vmem:[%s6 + $0x18] sm:$0xff]
      %v2380 = vld [vmem:[%s6 + $0x20] sm:$0xff]
      %v2381 = vld [vmem:[%s6 + $0x28] sm:$0xff]
      %v2382 = vld [vmem:[%s6 + $0x30] sm:$0xff]
      %v2383 = vld [vmem:[%s6 + $0x38] sm:$0xff]
      %v2384 = vld [vmem:[%s6 + $0x40] sm:$0xff]
      %v2385 = vld [vmem:[%s6 + $0x48] sm:$0xff]
      %v2386 = vld [vmem:[%s6 + $0x50] sm:$0xff]
      %v2387 = vld [vmem:[%s6 + $0x58] sm:$0xff]
      %v2388 = vld [vmem:[%s6 + $0x60] sm:$0xff]
      %v2389 = vld [vmem:[%s6 + $0x68] sm:$0xff]
      %v2390 = vld [vmem:[%s6 + $0x70] sm:$0xff]
      %v2391 = vld [vmem:[%s6 + $0x78] sm:$0xff]
      %2392 = vmatprep.subr.mxu0 0.0
      %2393 = vmatpush1.msra.mxu0 %v2376
      %2394 = vmatprep.subr.mxu0 0.0
      %2395 = vmatpush1.msra.mxu0 %v2377
      %2396 = vmatprep.subr.mxu0 0.0
      %2397 = vmatpush1.msra.mxu0 %v2378
      %2398 = vmatprep.subr.mxu0 0.0
      %2399 = vmatpush1.msra.mxu0 %v2379
      %2400 = vmatprep.subr.mxu0 0.0
      %2401 = vmatpush1.msra.mxu0 %v2380
      %2402 = vmatprep.subr.mxu0 0.0
      %2403 = vmatpush1.msra.mxu0 %v2381
      %2404 = vmatprep.subr.mxu0 0.0
      %2405 = vmatpush1.msra.mxu0 %v2382
      %2406 = vmatprep.subr.mxu0 0.0
      %2407 = vmatpush1.msra.mxu0 %v2383
      %2408 = vmatprep.subr.mxu0 0.0
      %2409 = vmatpush1.msra.mxu0 %v2384
      %2410 = vmatprep.subr.mxu0 0.0
      %2411 = vmatpush1.msra.mxu0 %v2385
      %2412 = vmatprep.subr.mxu0 0.0
      %2413 = vmatpush1.msra.mxu0 %v2386
      %2414 = vmatprep.subr.mxu0 0.0
      %2415 = vmatpush1.msra.mxu0 %v2387
      %2416 = vmatprep.subr.mxu0 0.0
      %2417 = vmatpush1.msra.mxu0 %v2388
      %2418 = vmatprep.subr.mxu0 0.0
      %2419 = vmatpush1.msra.mxu0 %v2389
      %2420 = vmatprep.subr.mxu0 0.0
      %2421 = vmatpush1.msra.mxu0 %v2390
      %2422 = vmatprep.subr.mxu0 0.0
      %2423 = vmatpush1.msra.mxu0 %v2391
      %2424 = vmatprep.subr.mxu0 0.0
      %2425 = vmatpush1.msra.mxu0 0.0
      %2426 = vmatprep.subr.mxu0 0.0
      %2427 = vmatpush1.msra.mxu0 0.0
      %2428 = vmatprep.subr.mxu0 0.0
      %2429 = vmatpush1.msra.mxu0 0.0
      %2430 = vmatprep.subr.mxu0 0.0
      %2431 = vmatpush1.msra.mxu0 0.0
      %2432 = vmatprep.subr.mxu0 0.0
      %2433 = vmatpush1.msra.mxu0 0.0
      %2434 = vmatprep.subr.mxu0 0.0
      %2435 = vmatpush1.msra.mxu0 0.0
      %2436 = vmatprep.subr.mxu0 0.0
      %2437 = vmatpush1.msra.mxu0 0.0
      %2438 = vmatprep.subr.mxu0 0.0
      %2439 = vmatpush1.msra.mxu0 0.0
      %2440 = vmatprep.subr.mxu0 0.0
      %2441 = vmatpush1.msra.mxu0 0.0
      %2442 = vmatprep.subr.mxu0 0.0
      %2443 = vmatpush1.msra.mxu0 0.0
      %2444 = vmatprep.subr.mxu0 0.0
      %2445 = vmatpush1.msra.mxu0 0.0
      %2446 = vmatprep.subr.mxu0 0.0
      %2447 = vmatpush1.msra.mxu0 0.0
      %2448 = vmatprep.subr.mxu0 0.0
      %2449 = vmatpush1.msra.mxu0 0.0
      %2450 = vmatprep.subr.mxu0 0.0
      %2451 = vmatpush1.msra.mxu0 0.0
      %2452 = vmatprep.subr.mxu0 0.0
      %2453 = vmatpush1.msra.mxu0 0.0
      %2454 = vmatprep.subr.mxu0 0.0
      %2455 = vmatpush1.msra.mxu0 0.0
      %2456 = vmatprep.mubr.f32.mxu0 0.0
      %2457 = vmatmul.mubr.f32.gmra.mrb[0].mxu0 %v2354
      %v2458 = vpop.f32.mrb[0].mxu0
      %v2459 = vadd.f32 0.0, %v2458
      %v2460 = vpop.f32.mrb[0].mxu0
      %2461 = vdwg.mxu0
      %2462 = vmatprep.subr.mxu0 0.0
      %2463 = vmatpush1.msra.mxu0 %v2360
      %2464 = vmatprep.subr.mxu0 0.0
      %2465 = vmatpush1.msra.mxu0 %v2361
      %2466 = vmatprep.subr.mxu0 0.0
      %2467 = vmatpush1.msra.mxu0 %v2362
      %2468 = vmatprep.subr.mxu0 0.0
      %2469 = vmatpush1.msra.mxu0 %v2363
      %2470 = vmatprep.subr.mxu0 0.0
      %2471 = vmatpush1.msra.mxu0 %v2364
      %2472 = vmatprep.subr.mxu0 0.0
      %2473 = vmatpush1.msra.mxu0 %v2365
      %2474 = vmatprep.subr.mxu0 0.0
      %2475 = vmatpush1.msra.mxu0 %v2366
      %2476 = vmatprep.subr.mxu0 0.0
      %2477 = vmatpush1.msra.mxu0 %v2367
      %2478 = vmatprep.subr.mxu0 0.0
      %2479 = vmatpush1.msra.mxu0 %v2368
      %2480 = vmatprep.subr.mxu0 0.0
      %2481 = vmatpush1.msra.mxu0 %v2369
      %2482 = vmatprep.subr.mxu0 0.0
      %2483 = vmatpush1.msra.mxu0 %v2370
      %2484 = vmatprep.subr.mxu0 0.0
      %2485 = vmatpush1.msra.mxu0 %v2371
      %2486 = vmatprep.subr.mxu0 0.0
      %2487 = vmatpush1.msra.mxu0 %v2372
      %2488 = vmatprep.subr.mxu0 0.0
      %2489 = vmatpush1.msra.mxu0 %v2373
      %2490 = vmatprep.subr.mxu0 0.0
      %2491 = vmatpush1.msra.mxu0 %v2374
      %2492 = vmatprep.subr.mxu0 0.0
      %2493 = vmatpush1.msra.mxu0 %v2375
      %2494 = vmatprep.subr.mxu0 0.0
      %2495 = vmatpush1.msra.mxu0 0.0
      %2496 = vmatprep.subr.mxu0 0.0
      %2497 = vmatpush1.msra.mxu0 0.0
      %2498 = vmatprep.subr.mxu0 0.0
      %2499 = vmatpush1.msra.mxu0 0.0
      %2500 = vmatprep.subr.mxu0 0.0
      %2501 = vmatpush1.msra.mxu0 0.0
      %2502 = vmatprep.subr.mxu0 0.0
      %2503 = vmatpush1.msra.mxu0 0.0
      %2504 = vmatprep.subr.mxu0 0.0
      %2505 = vmatpush1.msra.mxu0 0.0
      %2506 = vmatprep.subr.mxu0 0.0
      %2507 = vmatpush1.msra.mxu0 0.0
      %2508 = vmatprep.subr.mxu0 0.0
      %2509 = vmatpush1.msra.mxu0 0.0
      %2510 = vmatprep.subr.mxu0 0.0
      %2511 = vmatpush1.msra.mxu0 0.0
      %2512 = vmatprep.subr.mxu0 0.0
      %2513 = vmatpush1.msra.mxu0 0.0
      %2514 = vmatprep.subr.mxu0 0.0
      %2515 = vmatpush1.msra.mxu0 0.0
      %2516 = vmatprep.subr.mxu0 0.0
      %2517 = vmatpush1.msra.mxu0 0.0
      %2518 = vmatprep.subr.mxu0 0.0
      %2519 = vmatpush1.msra.mxu0 0.0
      %2520 = vmatprep.subr.mxu0 0.0
      %2521 = vmatpush1.msra.mxu0 0.0
      %2522 = vmatprep.subr.mxu0 0.0
      %2523 = vmatpush1.msra.mxu0 0.0
      %2524 = vmatprep.subr.mxu0 0.0
      %2525 = vmatpush1.msra.mxu0 0.0
      %2526 = vmatprep.mubr.f32.mxu0 0.0
      %2527 = vmatmul.mubr.f32.gmra.mrb[0].mxu0 %v2347
      %v2528 = vpop.f32.mrb[0].mxu0
      %v2529 = vadd.f32 %v2459, %v2528
      %v2530 = vpop.f32.mrb[0].mxu0
      %2531 = vdwg.mxu0
      %2532 = vst [vmem:[#allocation4] sm:$0xff] %v2529
    $region37: #{morphological_max.1} parent=1 // pred_fallthru
      _
    // Predicated region
    $region38: #{morphological_max.1} parent=1 // pred_check
      _
    $region39: #{morphological_max.1} parent=1 // pred_check_branch
      %2534 = sbr.rel (0) target = $region41
    $region40: #{morphological_max.1} parent=1 // pred_region
      %s2536 = ssub.s32 128, 128
      %2537 = vsyncadd [#allocation5], %s2536
      %s2539 = sshll.u32 [#allocation4], 4
      %s2540 = int_to_ptr.vmem [resolvable:$true] %s2539
      %2542 = dma.vmem_to_hbm [thread:$0]  %s2540, 128, %s7, [#allocation5]
    $region41: #{morphological_max.1} parent=1 // pred_fallthru
      _
    // Predicated region
    $region42: #{morphological_max.1} parent=1 // pred_check
      _
    $region43: #{morphological_max.1} parent=1 // pred_check_branch
      %2544 = sbr.rel (0) target = $region45
    $region44: #{morphological_max.1} parent=1 // pred_region
      %2545 = dma.done [#allocation5], 128
    $region45: #{morphological_max.1} parent=1 // pred_fallthru
      _
    %2546 = vsyncpa [#allocation5], 1

</llo_original>
